<compile_context>
chip_gen: v5e
topology: v5e:2x2
jax: 0.10.0
libtpu: 0.0.40
codegen_flags: <defaults>
</compile_context>

<pallas_src>
import functools

import numpy as np
import jax
import jax.numpy as jnp
from jax import lax
from jax.experimental import pallas as pl
from jax.experimental.pallas import tpu as pltpu

DIN = 64      # LSTM input_size
H = 50        # hidden_size per direction = embed_size // 2
E = 100       # embed_size = 2 * H
HG = 64       # per-gate / per-direction hidden lanes (50 padded to 64)
G = 4 * HG    # 256 gate lanes per direction (i|f|g|o)
GG = 2 * G    # 512 gate lanes, both directions ([fwd | bwd])
EP = 128      # lane-dense padded output width (100 -> 128)


# --------------------------------------------------------------------------- #
# Pallas kernel: one batch-chunk (all T), both LSTM layers, both dirs, + FC.   #
# --------------------------------------------------------------------------- #
def _uiembed_kernel(x_ref, w0_ref, b0_ref, whh0f_ref, whh0b_ref,
                    w1f_ref, w1b_ref, b1_ref, whh1f_ref, whh1b_ref,
                    wfcf_ref, wfcb_ref, bfc_ref,
                    out_ref,
                    pg_ref, hf_ref, hb_ref,
                    *, seq_len, batch, unroll):
    T, B = seq_len, batch

    def cell(g, c):
        # PyTorch gate order i, f, g, o; each gate occupies HG=64 lanes.
        i = jax.nn.sigmoid(g[:, 0 * HG:1 * HG])
        f = jax.nn.sigmoid(g[:, 1 * HG:2 * HG])
        z = jnp.tanh(g[:, 2 * HG:3 * HG])
        o = jax.nn.sigmoid(g[:, 3 * HG:4 * HG])
        c_new = f * c + i * z
        return o * jnp.tanh(c_new), c_new

    def bidir_recurrence(whh_f, whh_b):
        # Merged loop: fwd chain at t = s, bwd chain at t = T-1-s.  Each direction
        # keeps its own small (B,64)x(64,256) f32 recurrent dot on the serial chain.
        zeros = jnp.zeros((B, HG), jnp.float32)

        def body(s, carry):
            h_f, h_b, c_f, c_b = carry
            t_b = T - 1 - s
            rf = pl.multiple_of(s * B, B)
            rb = pl.multiple_of(t_b * B, B)
            pre_f = pg_ref[pl.ds(rf, B), 0:G]       # load only the fwd half
            pre_b = pg_ref[pl.ds(rb, B), G:GG]      # load only the bwd half
            g_f = pre_f + jnp.dot(h_f, whh_f, preferred_element_type=jnp.float32)
            g_b = pre_b + jnp.dot(h_b, whh_b, preferred_element_type=jnp.float32)
            h_f, c_f = cell(g_f, c_f)
            h_b, c_b = cell(g_b, c_b)
            hf_ref[pl.ds(rf, B), :] = h_f
            hb_ref[pl.ds(rb, B), :] = h_b
            return (h_f, h_b, c_f, c_b)

        lax.fori_loop(0, T, body, (zeros, zeros, zeros, zeros), unroll=unroll)

    # ---- layer-0 pre-gates: one bulk bf16 matmul, f32 accumulate, bias folded ----
    pg_ref[...] = (jnp.dot(x_ref[...], w0_ref[...],
                           preferred_element_type=jnp.float32) + b0_ref[...])

    # ---- layer-0 recurrence (fwd & bwd interleaved) ------------------------------
    bidir_recurrence(whh0f_ref[...], whh0b_ref[...])

    # ---- layer-1 pre-gates: split-K bulk matmuls, no (rows, 128) concat ----------
    hf_bf = hf_ref[...].astype(jnp.bfloat16)
    hb_bf = hb_ref[...].astype(jnp.bfloat16)
    pg_ref[...] = (jnp.dot(hf_bf, w1f_ref[...], preferred_element_type=jnp.float32)
                   + jnp.dot(hb_bf, w1b_ref[...], preferred_element_type=jnp.float32)
                   + b1_ref[...])

    # ---- layer-1 recurrence (history buffers reused) -----------------------------
    bidir_recurrence(whh1f_ref[...], whh1b_ref[...])

    # ---- FC: split-K bulk matmuls, lane-dense (128) output -----------------------
    hf_bf = hf_ref[...].astype(jnp.bfloat16)
    hb_bf = hb_ref[...].astype(jnp.bfloat16)
    out_ref[...] = (jnp.dot(hf_bf, wfcf_ref[...], preferred_element_type=jnp.float32)
                    + jnp.dot(hb_bf, wfcb_ref[...], preferred_element_type=jnp.float32)
                    + bfc_ref[...]).astype(out_ref.dtype)


# ------------------------------------------------------------------ #
# Parameter initialization (PyTorch-shaped) and packing for the kernel #
# ------------------------------------------------------------------ #
def init_params(key):
    std_lstm = 1.0 / np.sqrt(H)
    std_fc = 1.0 / np.sqrt(E)
    names_shapes = [
        ("w_ih_l0", (4 * H, DIN)), ("w_hh_l0", (4 * H, H)),
        ("b_ih_l0", (4 * H,)), ("b_hh_l0", (4 * H,)),
        ("w_ih_l0_rev", (4 * H, DIN)), ("w_hh_l0_rev", (4 * H, H)),
        ("b_ih_l0_rev", (4 * H,)), ("b_hh_l0_rev", (4 * H,)),
        ("w_ih_l1", (4 * H, 2 * H)), ("w_hh_l1", (4 * H, H)),
        ("b_ih_l1", (4 * H,)), ("b_hh_l1", (4 * H,)),
        ("w_ih_l1_rev", (4 * H, 2 * H)), ("w_hh_l1_rev", (4 * H, H)),
        ("b_ih_l1_rev", (4 * H,)), ("b_hh_l1_rev", (4 * H,)),
        ("fc_w", (E, E)), ("fc_b", (E,)),
    ]
    params = {}
    keys = jax.random.split(key, len(names_shapes))
    for k, (name, shape) in zip(keys, names_shapes):
        std = std_fc if name.startswith("fc") else std_lstm
        params[name] = jax.random.uniform(k, shape, jnp.float32, -std, std)
    return params


def _np(a):
    return np.asarray(a, np.float32)


def _pack_ih_l0(w):           # (4H, 64) -> (64, G): transposed, gates padded to HG
    w = _np(w)
    out = np.zeros((DIN, G), np.float32)
    for g in range(4):
        out[:, g * HG:g * HG + H] = w[g * H:(g + 1) * H, :].T
    return out


def _pack_ih_l1(w):           # (4H, 2H) -> two (HG, G): rows fed by h_fwd / h_bwd of layer 0
    w = _np(w)
    of = np.zeros((HG, G), np.float32)
    ob = np.zeros((HG, G), np.float32)
    for g in range(4):
        blk = w[g * H:(g + 1) * H, :]          # (H, 2H)
        of[0:H, g * HG:g * HG + H] = blk[:, 0:H].T
        ob[0:H, g * HG:g * HG + H] = blk[:, H:2 * H].T
    return of, ob


def _pack_hh(w):              # (4H, H) -> (HG, G): per-direction recurrent weights
    w = _np(w)
    out = np.zeros((HG, G), np.float32)
    for g in range(4):
        out[0:H, g * HG:g * HG + H] = w[g * H:(g + 1) * H, :].T
    return out


def _pack_bias(bi_f, bh_f, bi_b, bh_b):   # combined biases, both directions -> (1, GG)
    bf = _np(bi_f) + _np(bh_f)
    bb = _np(bi_b) + _np(bh_b)
    out = np.zeros((1, GG), np.float32)
    for g in range(4):
        out[0, g * HG:g * HG + H] = bf[g * H:(g + 1) * H]
        out[0, G + g * HG:G + g * HG + H] = bb[g * H:(g + 1) * H]
    return out


def pack_params(p):
    # layer 0 input weights, [fwd | bwd] gate columns
    w0 = np.concatenate([_pack_ih_l0(p["w_ih_l0"]),
                         _pack_ih_l0(p["w_ih_l0_rev"])], axis=1)        # (64, GG)
    b0 = _pack_bias(p["b_ih_l0"], p["b_hh_l0"],
                    p["b_ih_l0_rev"], p["b_hh_l0_rev"])
    whh0f = _pack_hh(p["w_hh_l0"])
    whh0b = _pack_hh(p["w_hh_l0_rev"])
    # layer 1 input weights, split by which layer-0 direction feeds them
    w1f_f, w1b_f = _pack_ih_l1(p["w_ih_l1"])
    w1f_r, w1b_r = _pack_ih_l1(p["w_ih_l1_rev"])
    w1f = np.concatenate([w1f_f, w1f_r], axis=1)                        # (HG, GG)
    w1b = np.concatenate([w1b_f, w1b_r], axis=1)                        # (HG, GG)
    b1 = _pack_bias(p["b_ih_l1"], p["b_hh_l1"],
                    p["b_ih_l1_rev"], p["b_hh_l1_rev"])
    whh1f = _pack_hh(p["w_hh_l1"])
    whh1b = _pack_hh(p["w_hh_l1_rev"])
    # FC: out = [h1_fwd, h1_bwd] @ W^T + b, split by direction, lane-dense output
    fc_w, fc_b = _np(p["fc_w"]), _np(p["fc_b"])
    wfcf = np.zeros((HG, EP), np.float32)
    wfcb = np.zeros((HG, EP), np.float32)
    wfcf[0:H, 0:E] = fc_w[:, 0:H].T
    wfcb[0:H, 0:E] = fc_w[:, H:E].T
    bfc = np.zeros((1, EP), np.float32)
    bfc[0, 0:E] = fc_b
    # Bulk-matmul operands in bf16 (MXU-native); recurrent weights and biases in f32.
    bf16 = jnp.bfloat16
    return [jnp.asarray(w0, bf16), jnp.asarray(b0),
            jnp.asarray(whh0f), jnp.asarray(whh0b),
            jnp.asarray(w1f, bf16), jnp.asarray(w1b, bf16), jnp.asarray(b1),
            jnp.asarray(whh1f), jnp.asarray(whh1b),
            jnp.asarray(wfcf, bf16), jnp.asarray(wfcb, bf16), jnp.asarray(bfc)]


# --------------------------- #
# Public forward (wrapper)    #
# --------------------------- #
def uiembed_forward(x, params, *, batch_chunk=8):
    """x: (B, T, 64) batch-first, like PyTorch.  Returns (B, T, 100) float32."""
    B, T, _ = x.shape
    Bc = batch_chunk
    assert Bc % 8 == 0, "batch_chunk must be a multiple of 8 (f32 sublane tile)"
    nC = -(-B // Bc)                      # cdiv
    Bp = nC * Bc
    # pad batch to a multiple of the chunk so every per-timestep slab is tile-aligned
    xp = jnp.zeros((Bp, T, DIN), jnp.float32).at[:B].set(x.astype(jnp.float32))
    # chunk-major / time-major / batch-within-chunk row layout; bf16 for the MXU
    rows = (xp.reshape(nC, Bc, T, DIN).transpose(0, 2, 1, 3)
              .reshape(nC * T * Bc, DIN).astype(jnp.bfloat16))

    packed = pack_params(params)
    rows_per_chunk = T * Bc

    # scoped-VMEM budget from actual residency: weights + double-buffered x/out blocks
    # + pre-gate / hidden-history scratch, with headroom, clamped under v7x's 64 MiB.
    w_bytes = sum(int(np.prod(a.shape)) * a.dtype.itemsize for a in packed)
    blk_bytes = 2 * rows_per_chunk * DIN * 2 + 2 * rows_per_chunk * EP * 4
    scr_bytes = rows_per_chunk * (GG + 2 * HG) * 4
    vmem_limit = int(min(max(2 * (w_bytes + blk_bytes + scr_bytes) + (4 << 20),
                             16 << 20), 60 << 20))

    kernel = functools.partial(_uiembed_kernel, seq_len=T, batch=Bc,
                               unroll=(True if T <= 16 else 4))
    weight_specs = [pl.BlockSpec(a.shape, lambda i: (0, 0)) for a in packed]

    out = pl.pallas_call(
        kernel,
        out_shape=jax.ShapeDtypeStruct((nC * rows_per_chunk, EP), jnp.float32),
        grid=(nC,),
        in_specs=[pl.BlockSpec((rows_per_chunk, DIN), lambda i: (i, 0))] + weight_specs,
        out_specs=pl.BlockSpec((rows_per_chunk, EP), lambda i: (i, 0)),
        scratch_shapes=[pltpu.VMEM((rows_per_chunk, GG), jnp.float32),  # pre-gates (L0/L1)
                        pltpu.VMEM((rows_per_chunk, HG), jnp.float32),  # fwd hidden history
                        pltpu.VMEM((rows_per_chunk, HG), jnp.float32)], # bwd hidden history
        compiler_params=pltpu.CompilerParams(
            dimension_semantics=("parallel",),          # batch chunks -> v7x's 2 cores
            vmem_limit_bytes=vmem_limit),
    )(rows, *packed)

    out = out.reshape(nC, T, Bc, EP).transpose(0, 2, 1, 3).reshape(Bp, T, EP)
    return out[:B, :, :E]


# --------------------------- #
# Pure-JAX reference (f32)    #
# --------------------------- #
def ref_forward(x, p):
    def cell(xt, h, c, w_ih, w_hh, b_ih, b_hh):
        g = xt @ w_ih.T + h @ w_hh.T + b_ih + b_hh
        i, f, z, o = jnp.split(g, 4, axis=-1)
        c = jax.nn.sigmoid(f) * c + jax.nn.sigmoid(i) * jnp.tanh(z)
        h = jax.nn.sigmoid(o) * jnp.tanh(c)
        return h, c

    def run_dir(inp, w_ih, w_hh, b_ih, b_hh, reverse):
        B, T, _ = inp.shape
        h = jnp.zeros((B, H), jnp.float32)
        c = jnp.zeros((B, H), jnp.float32)
        outs = [None] * T
        order = range(T - 1, -1, -1) if reverse else range(T)
        for t in order:
            h, c = cell(inp[:, t], h, c, w_ih, w_hh, b_ih, b_hh)
            outs[t] = h
        return jnp.stack(outs, axis=1)

    def bidi(inp, layer):
        fw = run_dir(inp, p[f"w_ih_l{layer}"], p[f"w_hh_l{layer}"],
                     p[f"b_ih_l{layer}"], p[f"b_hh_l{layer}"], False)
        bw = run_dir(inp, p[f"w_ih_l{layer}_rev"], p[f"w_hh_l{layer}_rev"],
                     p[f"b_ih_l{layer}_rev"], p[f"b_hh_l{layer}_rev"], True)
        return jnp.concatenate([fw, bw], axis=-1)

    emb = bidi(bidi(x, 0), 1)
    return emb @ p["fc_w"].T + p["fc_b"]


if __name__ == "__main__":
    key = jax.random.PRNGKey(0)
    pkey, xkey = jax.random.split(key)
    params = init_params(pkey)

    # B not a multiple of 8 on purpose: exercises the wrapper's padding and a 2-chunk grid.
    B, T = 10, 7
    x = jax.random.normal(xkey, (B, T, DIN), jnp.float32)

    out = jax.block_until_ready(uiembed_forward(x, params))
    ref = ref_forward(x, params)
    assert out.shape == (B, T, E)
    # Bulk matmuls use bf16 operands (f32 accumulation), so compare with a loose
    # tolerance; structural errors would show up as O(0.1-1) discrepancies.
    np.testing.assert_allclose(np.asarray(out), np.asarray(ref), rtol=5e-2, atol=3e-2)
    print("KERNEL_OK")
</pallas_src>

<mosaic_0001>
module attributes {stable_mosaic.version = 11 : i64} {
  func.func @_uiembed_kernel(%arg0: i32, %arg1: memref<56x64xbf16, #tpu.memory_space<vmem>>, %arg2: memref<64x512xbf16, #tpu.memory_space<vmem>>, %arg3: memref<1x512xf32, #tpu.memory_space<vmem>>, %arg4: memref<64x256xf32, #tpu.memory_space<vmem>>, %arg5: memref<64x256xf32, #tpu.memory_space<vmem>>, %arg6: memref<64x512xbf16, #tpu.memory_space<vmem>>, %arg7: memref<64x512xbf16, #tpu.memory_space<vmem>>, %arg8: memref<1x512xf32, #tpu.memory_space<vmem>>, %arg9: memref<64x256xf32, #tpu.memory_space<vmem>>, %arg10: memref<64x256xf32, #tpu.memory_space<vmem>>, %arg11: memref<64x128xbf16, #tpu.memory_space<vmem>>, %arg12: memref<64x128xbf16, #tpu.memory_space<vmem>>, %arg13: memref<1x128xf32, #tpu.memory_space<vmem>>, %arg14: memref<56x128xf32, #tpu.memory_space<vmem>>, %arg15: memref<56x512xf32, #tpu.memory_space<vmem>>, %arg16: memref<56x64xf32, #tpu.memory_space<vmem>>, %arg17: memref<56x64xf32, #tpu.memory_space<vmem>>) attributes {dimension_semantics = [#tpu.dimension_semantics<parallel>], iteration_bounds = array<i64: 2>, scalar_prefetch = 0 : i64, scratch_operands = 3 : i64, tpu.core_type = #tpu.core_type<tc>, window_params = [{transform_indices = @transform_0, window_bounds = array<i64: 56, 64>}, {pipeline_mode = #tpu.pipeline_mode<synchronous>, transform_indices = @transform_1, window_bounds = array<i64: 64, 512>}, {pipeline_mode = #tpu.pipeline_mode<synchronous>, transform_indices = @transform_2, window_bounds = array<i64: 1, 512>}, {pipeline_mode = #tpu.pipeline_mode<synchronous>, transform_indices = @transform_3, window_bounds = array<i64: 64, 256>}, {pipeline_mode = #tpu.pipeline_mode<synchronous>, transform_indices = @transform_4, window_bounds = array<i64: 64, 256>}, {pipeline_mode = #tpu.pipeline_mode<synchronous>, transform_indices = @transform_5, window_bounds = array<i64: 64, 512>}, {pipeline_mode = #tpu.pipeline_mode<synchronous>, transform_indices = @transform_6, window_bounds = array<i64: 64, 512>}, {pipeline_mode = #tpu.pipeline_mode<synchronous>, transform_indices = @transform_7, window_bounds = array<i64: 1, 512>}, {pipeline_mode = #tpu.pipeline_mode<synchronous>, transform_indices = @transform_8, window_bounds = array<i64: 64, 256>}, {pipeline_mode = #tpu.pipeline_mode<synchronous>, transform_indices = @transform_9, window_bounds = array<i64: 64, 256>}, {pipeline_mode = #tpu.pipeline_mode<synchronous>, transform_indices = @transform_10, window_bounds = array<i64: 64, 128>}, {pipeline_mode = #tpu.pipeline_mode<synchronous>, transform_indices = @transform_11, window_bounds = array<i64: 64, 128>}, {pipeline_mode = #tpu.pipeline_mode<synchronous>, transform_indices = @transform_12, window_bounds = array<i64: 1, 128>}, {transform_indices = @transform_13, window_bounds = array<i64: 56, 128>}]} {
    %c0 = arith.constant 0 : index
    %c0_0 = arith.constant 0 : index
    %0 = vector.load %arg1[%c0, %c0_0] : memref<56x64xbf16, #tpu.memory_space<vmem>>, vector<56x64xbf16>
    %c0_1 = arith.constant 0 : index
    %c0_2 = arith.constant 0 : index
    %1 = vector.load %arg2[%c0_1, %c0_2] : memref<64x512xbf16, #tpu.memory_space<vmem>>, vector<64x512xbf16>
    %cst = arith.constant dense<0.000000e+00> : vector<56x512xf32>
    %2 = tpu.matmul %0, %1, %cst {dimension_numbers = #tpu.dot_dimension_numbers<[1], [0], [0], [1], [0, 0, 1, 1], [], []>} : vector<56x64xbf16>, vector<64x512xbf16>, vector<56x512xf32> -> vector<56x512xf32>
    %c0_3 = arith.constant 0 : index
    %c0_4 = arith.constant 0 : index
    %3 = vector.load %arg3[%c0_3, %c0_4] : memref<1x512xf32, #tpu.memory_space<vmem>>, vector<1x512xf32>
    %4 = vector.broadcast %3 : vector<1x512xf32> to vector<56x512xf32>
    %5 = arith.addf %2, %4 : vector<56x512xf32>
    %c0_5 = arith.constant 0 : index
    %c0_6 = arith.constant 0 : index
    %6 = vector.load %arg15[%c0_5, %c0_6] : memref<56x512xf32, #tpu.memory_space<vmem>>, vector<56x512xf32>
    tpu.vector_store %arg15[%c0_5, %c0_6], %5 {strides = array<i32>} : memref<56x512xf32, #tpu.memory_space<vmem>>, vector<56x512xf32>,
    %c0_7 = arith.constant 0 : index
    %c0_8 = arith.constant 0 : index
    %7 = vector.load %arg4[%c0_7, %c0_8] : memref<64x256xf32, #tpu.memory_space<vmem>>, vector<64x256xf32>
    %c0_9 = arith.constant 0 : index
    %c0_10 = arith.constant 0 : index
    %8 = vector.load %arg5[%c0_9, %c0_10] : memref<64x256xf32, #tpu.memory_space<vmem>>, vector<64x256xf32>
    %cst_11 = arith.constant 0.000000e+00 : f32
    %9 = vector.broadcast %cst_11 : f32 to vector<8x64xf32>
    %c0_i32 = arith.constant 0 : i32
    %c6_i32 = arith.constant 6 : i32
    %10 = arith.subi %c6_i32, %c0_i32 : i32
    %c8_i32 = arith.constant 8 : i32
    %11 = arith.muli %c0_i32, %c8_i32 : i32
    %12 = tpu.assume_multiple %11, 8 : i32
    %c8_i32_12 = arith.constant 8 : i32
    %13 = arith.muli %10, %c8_i32_12 : i32
    %14 = tpu.assume_multiple %13, 8 : i32
    %15 = arith.index_cast %12 : i32 to index
    %c0_13 = arith.constant 0 : index
    %16 = vector.load %arg15[%15, %c0_13] : memref<56x512xf32, #tpu.memory_space<vmem>>, vector<8x256xf32>
    %17 = arith.index_cast %14 : i32 to index
    %c256 = arith.constant 256 : index
    %18 = vector.load %arg15[%17, %c256] : memref<56x512xf32, #tpu.memory_space<vmem>>, vector<8x256xf32>
    %cst_14 = arith.constant dense<0.000000e+00> : vector<8x256xf32>
    %19 = tpu.matmul %9, %7, %cst_14 {dimension_numbers = #tpu.dot_dimension_numbers<[1], [0], [0], [1], [0, 0, 1, 1], [], []>} : vector<8x64xf32>, vector<64x256xf32>, vector<8x256xf32> -> vector<8x256xf32>
    %20 = arith.addf %16, %19 : vector<8x256xf32>
    %cst_15 = arith.constant dense<0.000000e+00> : vector<8x256xf32>
    %21 = tpu.matmul %9, %8, %cst_15 {dimension_numbers = #tpu.dot_dimension_numbers<[1], [0], [0], [1], [0, 0, 1, 1], [], []>} : vector<8x64xf32>, vector<64x256xf32>, vector<8x256xf32> -> vector<8x256xf32>
    %22 = arith.addf %18, %21 : vector<8x256xf32>
    %23 = vector.extract_strided_slice %20 {offsets = [0, 0], sizes = [8, 64], strides = [1, 1]} : vector<8x256xf32> to vector<8x64xf32>
    %24 = arith.negf %23 : vector<8x64xf32>
    %25 = math.exp %24 : vector<8x64xf32>
    %cst_16 = arith.constant 1.000000e+00 : f32
    %26 = vector.broadcast %cst_16 : f32 to vector<8x64xf32>
    %27 = arith.addf %26, %25 : vector<8x64xf32>
    %28 = arith.divf %26, %27 : vector<8x64xf32>
    %29 = vector.extract_strided_slice %20 {offsets = [0, 64], sizes = [8, 64], strides = [1, 1]} : vector<8x256xf32> to vector<8x64xf32>
    %30 = arith.negf %29 : vector<8x64xf32>
    %31 = math.exp %30 : vector<8x64xf32>
    %cst_17 = arith.constant 1.000000e+00 : f32
    %32 = vector.broadcast %cst_17 : f32 to vector<8x64xf32>
    %33 = arith.addf %32, %31 : vector<8x64xf32>
    %34 = arith.divf %32, %33 : vector<8x64xf32>
    %35 = vector.extract_strided_slice %20 {offsets = [0, 128], sizes = [8, 64], strides = [1, 1]} : vector<8x256xf32> to vector<8x64xf32>
    %36 = math.tanh %35 : vector<8x64xf32>
    %37 = vector.extract_strided_slice %20 {offsets = [0, 192], sizes = [8, 64], strides = [1, 1]} : vector<8x256xf32> to vector<8x64xf32>
    %38 = arith.negf %37 : vector<8x64xf32>
    %39 = math.exp %38 : vector<8x64xf32>
    %cst_18 = arith.constant 1.000000e+00 : f32
    %40 = vector.broadcast %cst_18 : f32 to vector<8x64xf32>
    %41 = arith.addf %40, %39 : vector<8x64xf32>
    %42 = arith.divf %40, %41 : vector<8x64xf32>
    %43 = arith.mulf %34, %9 : vector<8x64xf32>
    %44 = arith.mulf %28, %36 : vector<8x64xf32>
    %45 = arith.addf %43, %44 : vector<8x64xf32>
    %46 = math.tanh %45 : vector<8x64xf32>
    %47 = arith.mulf %42, %46 : vector<8x64xf32>
    %48 = vector.extract_strided_slice %22 {offsets = [0, 0], sizes = [8, 64], strides = [1, 1]} : vector<8x256xf32> to vector<8x64xf32>
    %49 = arith.negf %48 : vector<8x64xf32>
    %50 = math.exp %49 : vector<8x64xf32>
    %cst_19 = arith.constant 1.000000e+00 : f32
    %51 = vector.broadcast %cst_19 : f32 to vector<8x64xf32>
    %52 = arith.addf %51, %50 : vector<8x64xf32>
    %53 = arith.divf %51, %52 : vector<8x64xf32>
    %54 = vector.extract_strided_slice %22 {offsets = [0, 64], sizes = [8, 64], strides = [1, 1]} : vector<8x256xf32> to vector<8x64xf32>
    %55 = arith.negf %54 : vector<8x64xf32>
    %56 = math.exp %55 : vector<8x64xf32>
    %cst_20 = arith.constant 1.000000e+00 : f32
    %57 = vector.broadcast %cst_20 : f32 to vector<8x64xf32>
    %58 = arith.addf %57, %56 : vector<8x64xf32>
    %59 = arith.divf %57, %58 : vector<8x64xf32>
    %60 = vector.extract_strided_slice %22 {offsets = [0, 128], sizes = [8, 64], strides = [1, 1]} : vector<8x256xf32> to vector<8x64xf32>
    %61 = math.tanh %60 : vector<8x64xf32>
    %62 = vector.extract_strided_slice %22 {offsets = [0, 192], sizes = [8, 64], strides = [1, 1]} : vector<8x256xf32> to vector<8x64xf32>
    %63 = arith.negf %62 : vector<8x64xf32>
    %64 = math.exp %63 : vector<8x64xf32>
    %cst_21 = arith.constant 1.000000e+00 : f32
    %65 = vector.broadcast %cst_21 : f32 to vector<8x64xf32>
    %66 = arith.addf %65, %64 : vector<8x64xf32>
    %67 = arith.divf %65, %66 : vector<8x64xf32>
    %68 = arith.mulf %59, %9 : vector<8x64xf32>
    %69 = arith.mulf %53, %61 : vector<8x64xf32>
    %70 = arith.addf %68, %69 : vector<8x64xf32>
    %71 = math.tanh %70 : vector<8x64xf32>
    %72 = arith.mulf %67, %71 : vector<8x64xf32>
    %73 = arith.index_cast %12 : i32 to index
    %c0_22 = arith.constant 0 : index
    %74 = vector.load %arg16[%73, %c0_22] : memref<56x64xf32, #tpu.memory_space<vmem>>, vector<8x64xf32>
    tpu.vector_store %arg16[%73, %c0_22], %47 {strides = array<i32>} : memref<56x64xf32, #tpu.memory_space<vmem>>, vector<8x64xf32>,
    %75 = arith.index_cast %14 : i32 to index
    %c0_23 = arith.constant 0 : index
    %76 = vector.load %arg17[%75, %c0_23] : memref<56x64xf32, #tpu.memory_space<vmem>>, vector<8x64xf32>
    tpu.vector_store %arg17[%75, %c0_23], %72 {strides = array<i32>} : memref<56x64xf32, #tpu.memory_space<vmem>>, vector<8x64xf32>,
    %c1_i32 = arith.constant 1 : i32
    %c6_i32_24 = arith.constant 6 : i32
    %77 = arith.subi %c6_i32_24, %c1_i32 : i32
    %c8_i32_25 = arith.constant 8 : i32
    %78 = arith.muli %c1_i32, %c8_i32_25 : i32
    %79 = tpu.assume_multiple %78, 8 : i32
    %c8_i32_26 = arith.constant 8 : i32
    %80 = arith.muli %77, %c8_i32_26 : i32
    %81 = tpu.assume_multiple %80, 8 : i32
    %82 = arith.index_cast %79 : i32 to index
    %c0_27 = arith.constant 0 : index
    %83 = vector.load %arg15[%82, %c0_27] : memref<56x512xf32, #tpu.memory_space<vmem>>, vector<8x256xf32>
    %84 = arith.index_cast %81 : i32 to index
    %c256_28 = arith.constant 256 : index
    %85 = vector.load %arg15[%84, %c256_28] : memref<56x512xf32, #tpu.memory_space<vmem>>, vector<8x256xf32>
    %cst_29 = arith.constant dense<0.000000e+00> : vector<8x256xf32>
    %86 = tpu.matmul %47, %7, %cst_29 {dimension_numbers = #tpu.dot_dimension_numbers<[1], [0], [0], [1], [0, 0, 1, 1], [], []>} : vector<8x64xf32>, vector<64x256xf32>, vector<8x256xf32> -> vector<8x256xf32>
    %87 = arith.addf %83, %86 : vector<8x256xf32>
    %cst_30 = arith.constant dense<0.000000e+00> : vector<8x256xf32>
    %88 = tpu.matmul %72, %8, %cst_30 {dimension_numbers = #tpu.dot_dimension_numbers<[1], [0], [0], [1], [0, 0, 1, 1], [], []>} : vector<8x64xf32>, vector<64x256xf32>, vector<8x256xf32> -> vector<8x256xf32>
    %89 = arith.addf %85, %88 : vector<8x256xf32>
    %90 = vector.extract_strided_slice %87 {offsets = [0, 0], sizes = [8, 64], strides = [1, 1]} : vector<8x256xf32> to vector<8x64xf32>
    %91 = arith.negf %90 : vector<8x64xf32>
    %92 = math.exp %91 : vector<8x64xf32>
    %cst_31 = arith.constant 1.000000e+00 : f32
    %93 = vector.broadcast %cst_31 : f32 to vector<8x64xf32>
    %94 = arith.addf %93, %92 : vector<8x64xf32>
    %95 = arith.divf %93, %94 : vector<8x64xf32>
    %96 = vector.extract_strided_slice %87 {offsets = [0, 64], sizes = [8, 64], strides = [1, 1]} : vector<8x256xf32> to vector<8x64xf32>
    %97 = arith.negf %96 : vector<8x64xf32>
    %98 = math.exp %97 : vector<8x64xf32>
    %cst_32 = arith.constant 1.000000e+00 : f32
    %99 = vector.broadcast %cst_32 : f32 to vector<8x64xf32>
    %100 = arith.addf %99, %98 : vector<8x64xf32>
    %101 = arith.divf %99, %100 : vector<8x64xf32>
    %102 = vector.extract_strided_slice %87 {offsets = [0, 128], sizes = [8, 64], strides = [1, 1]} : vector<8x256xf32> to vector<8x64xf32>
    %103 = math.tanh %102 : vector<8x64xf32>
    %104 = vector.extract_strided_slice %87 {offsets = [0, 192], sizes = [8, 64], strides = [1, 1]} : vector<8x256xf32> to vector<8x64xf32>
    %105 = arith.negf %104 : vector<8x64xf32>
    %106 = math.exp %105 : vector<8x64xf32>
    %cst_33 = arith.constant 1.000000e+00 : f32
    %107 = vector.broadcast %cst_33 : f32 to vector<8x64xf32>
    %108 = arith.addf %107, %106 : vector<8x64xf32>
    %109 = arith.divf %107, %108 : vector<8x64xf32>
    %110 = arith.mulf %101, %45 : vector<8x64xf32>
    %111 = arith.mulf %95, %103 : vector<8x64xf32>
    %112 = arith.addf %110, %111 : vector<8x64xf32>
    %113 = math.tanh %112 : vector<8x64xf32>
    %114 = arith.mulf %109, %113 : vector<8x64xf32>
    %115 = vector.extract_strided_slice %89 {offsets = [0, 0], sizes = [8, 64], strides = [1, 1]} : vector<8x256xf32> to vector<8x64xf32>
    %116 = arith.negf %115 : vector<8x64xf32>
    %117 = math.exp %116 : vector<8x64xf32>
    %cst_34 = arith.constant 1.000000e+00 : f32
    %118 = vector.broadcast %cst_34 : f32 to vector<8x64xf32>
    %119 = arith.addf %118, %117 : vector<8x64xf32>
    %120 = arith.divf %118, %119 : vector<8x64xf32>
    %121 = vector.extract_strided_slice %89 {offsets = [0, 64], sizes = [8, 64], strides = [1, 1]} : vector<8x256xf32> to vector<8x64xf32>
    %122 = arith.negf %121 : vector<8x64xf32>
    %123 = math.exp %122 : vector<8x64xf32>
    %cst_35 = arith.constant 1.000000e+00 : f32
    %124 = vector.broadcast %cst_35 : f32 to vector<8x64xf32>
    %125 = arith.addf %124, %123 : vector<8x64xf32>
    %126 = arith.divf %124, %125 : vector<8x64xf32>
    %127 = vector.extract_strided_slice %89 {offsets = [0, 128], sizes = [8, 64], strides = [1, 1]} : vector<8x256xf32> to vector<8x64xf32>
    %128 = math.tanh %127 : vector<8x64xf32>
    %129 = vector.extract_strided_slice %89 {offsets = [0, 192], sizes = [8, 64], strides = [1, 1]} : vector<8x256xf32> to vector<8x64xf32>
    %130 = arith.negf %129 : vector<8x64xf32>
    %131 = math.exp %130 : vector<8x64xf32>
    %cst_36 = arith.constant 1.000000e+00 : f32
    %132 = vector.broadcast %cst_36 : f32 to vector<8x64xf32>
    %133 = arith.addf %132, %131 : vector<8x64xf32>
    %134 = arith.divf %132, %133 : vector<8x64xf32>
    %135 = arith.mulf %126, %70 : vector<8x64xf32>
    %136 = arith.mulf %120, %128 : vector<8x64xf32>
    %137 = arith.addf %135, %136 : vector<8x64xf32>
    %138 = math.tanh %137 : vector<8x64xf32>
    %139 = arith.mulf %134, %138 : vector<8x64xf32>
    %140 = arith.index_cast %79 : i32 to index
    %c0_37 = arith.constant 0 : index
    %141 = vector.load %arg16[%140, %c0_37] : memref<56x64xf32, #tpu.memory_space<vmem>>, vector<8x64xf32>
    tpu.vector_store %arg16[%140, %c0_37], %114 {strides = array<i32>} : memref<56x64xf32, #tpu.memory_space<vmem>>, vector<8x64xf32>,
    %142 = arith.index_cast %81 : i32 to index
    %c0_38 = arith.constant 0 : index
    %143 = vector.load %arg17[%142, %c0_38] : memref<56x64xf32, #tpu.memory_space<vmem>>, vector<8x64xf32>
    tpu.vector_store %arg17[%142, %c0_38], %139 {strides = array<i32>} : memref<56x64xf32, #tpu.memory_space<vmem>>, vector<8x64xf32>,
    %c2_i32 = arith.constant 2 : i32
    %c6_i32_39 = arith.constant 6 : i32
    %144 = arith.subi %c6_i32_39, %c2_i32 : i32
    %c8_i32_40 = arith.constant 8 : i32
    %145 = arith.muli %c2_i32, %c8_i32_40 : i32
    %146 = tpu.assume_multiple %145, 8 : i32
    %c8_i32_41 = arith.constant 8 : i32
    %147 = arith.muli %144, %c8_i32_41 : i32
    %148 = tpu.assume_multiple %147, 8 : i32
    %149 = arith.index_cast %146 : i32 to index
    %c0_42 = arith.constant 0 : index
    %150 = vector.load %arg15[%149, %c0_42] : memref<56x512xf32, #tpu.memory_space<vmem>>, vector<8x256xf32>
    %151 = arith.index_cast %148 : i32 to index
    %c256_43 = arith.constant 256 : index
    %152 = vector.load %arg15[%151, %c256_43] : memref<56x512xf32, #tpu.memory_space<vmem>>, vector<8x256xf32>
    %cst_44 = arith.constant dense<0.000000e+00> : vector<8x256xf32>
    %153 = tpu.matmul %114, %7, %cst_44 {dimension_numbers = #tpu.dot_dimension_numbers<[1], [0], [0], [1], [0, 0, 1, 1], [], []>} : vector<8x64xf32>, vector<64x256xf32>, vector<8x256xf32> -> vector<8x256xf32>
    %154 = arith.addf %150, %153 : vector<8x256xf32>
    %cst_45 = arith.constant dense<0.000000e+00> : vector<8x256xf32>
    %155 = tpu.matmul %139, %8, %cst_45 {dimension_numbers = #tpu.dot_dimension_numbers<[1], [0], [0], [1], [0, 0, 1, 1], [], []>} : vector<8x64xf32>, vector<64x256xf32>, vector<8x256xf32> -> vector<8x256xf32>
    %156 = arith.addf %152, %155 : vector<8x256xf32>
    %157 = vector.extract_strided_slice %154 {offsets = [0, 0], sizes = [8, 64], strides = [1, 1]} : vector<8x256xf32> to vector<8x64xf32>
    %158 = arith.negf %157 : vector<8x64xf32>
    %159 = math.exp %158 : vector<8x64xf32>
    %cst_46 = arith.constant 1.000000e+00 : f32
    %160 = vector.broadcast %cst_46 : f32 to vector<8x64xf32>
    %161 = arith.addf %160, %159 : vector<8x64xf32>
    %162 = arith.divf %160, %161 : vector<8x64xf32>
    %163 = vector.extract_strided_slice %154 {offsets = [0, 64], sizes = [8, 64], strides = [1, 1]} : vector<8x256xf32> to vector<8x64xf32>
    %164 = arith.negf %163 : vector<8x64xf32>
    %165 = math.exp %164 : vector<8x64xf32>
    %cst_47 = arith.constant 1.000000e+00 : f32
    %166 = vector.broadcast %cst_47 : f32 to vector<8x64xf32>
    %167 = arith.addf %166, %165 : vector<8x64xf32>
    %168 = arith.divf %166, %167 : vector<8x64xf32>
    %169 = vector.extract_strided_slice %154 {offsets = [0, 128], sizes = [8, 64], strides = [1, 1]} : vector<8x256xf32> to vector<8x64xf32>
    %170 = math.tanh %169 : vector<8x64xf32>
    %171 = vector.extract_strided_slice %154 {offsets = [0, 192], sizes = [8, 64], strides = [1, 1]} : vector<8x256xf32> to vector<8x64xf32>
    %172 = arith.negf %171 : vector<8x64xf32>
    %173 = math.exp %172 : vector<8x64xf32>
    %cst_48 = arith.constant 1.000000e+00 : f32
    %174 = vector.broadcast %cst_48 : f32 to vector<8x64xf32>
    %175 = arith.addf %174, %173 : vector<8x64xf32>
    %176 = arith.divf %174, %175 : vector<8x64xf32>
    %177 = arith.mulf %168, %112 : vector<8x64xf32>
    %178 = arith.mulf %162, %170 : vector<8x64xf32>
    %179 = arith.addf %177, %178 : vector<8x64xf32>
    %180 = math.tanh %179 : vector<8x64xf32>
    %181 = arith.mulf %176, %180 : vector<8x64xf32>
    %182 = vector.extract_strided_slice %156 {offsets = [0, 0], sizes = [8, 64], strides = [1, 1]} : vector<8x256xf32> to vector<8x64xf32>
    %183 = arith.negf %182 : vector<8x64xf32>
    %184 = math.exp %183 : vector<8x64xf32>
    %cst_49 = arith.constant 1.000000e+00 : f32
    %185 = vector.broadcast %cst_49 : f32 to vector<8x64xf32>
    %186 = arith.addf %185, %184 : vector<8x64xf32>
    %187 = arith.divf %185, %186 : vector<8x64xf32>
    %188 = vector.extract_strided_slice %156 {offsets = [0, 64], sizes = [8, 64], strides = [1, 1]} : vector<8x256xf32> to vector<8x64xf32>
    %189 = arith.negf %188 : vector<8x64xf32>
    %190 = math.exp %189 : vector<8x64xf32>
    %cst_50 = arith.constant 1.000000e+00 : f32
    %191 = vector.broadcast %cst_50 : f32 to vector<8x64xf32>
    %192 = arith.addf %191, %190 : vector<8x64xf32>
    %193 = arith.divf %191, %192 : vector<8x64xf32>
    %194 = vector.extract_strided_slice %156 {offsets = [0, 128], sizes = [8, 64], strides = [1, 1]} : vector<8x256xf32> to vector<8x64xf32>
    %195 = math.tanh %194 : vector<8x64xf32>
    %196 = vector.extract_strided_slice %156 {offsets = [0, 192], sizes = [8, 64], strides = [1, 1]} : vector<8x256xf32> to vector<8x64xf32>
    %197 = arith.negf %196 : vector<8x64xf32>
    %198 = math.exp %197 : vector<8x64xf32>
    %cst_51 = arith.constant 1.000000e+00 : f32
    %199 = vector.broadcast %cst_51 : f32 to vector<8x64xf32>
    %200 = arith.addf %199, %198 : vector<8x64xf32>
    %201 = arith.divf %199, %200 : vector<8x64xf32>
    %202 = arith.mulf %193, %137 : vector<8x64xf32>
    %203 = arith.mulf %187, %195 : vector<8x64xf32>
    %204 = arith.addf %202, %203 : vector<8x64xf32>
    %205 = math.tanh %204 : vector<8x64xf32>
    %206 = arith.mulf %201, %205 : vector<8x64xf32>
    %207 = arith.index_cast %146 : i32 to index
    %c0_52 = arith.constant 0 : index
    %208 = vector.load %arg16[%207, %c0_52] : memref<56x64xf32, #tpu.memory_space<vmem>>, vector<8x64xf32>
    tpu.vector_store %arg16[%207, %c0_52], %181 {strides = array<i32>} : memref<56x64xf32, #tpu.memory_space<vmem>>, vector<8x64xf32>,
    %209 = arith.index_cast %148 : i32 to index
    %c0_53 = arith.constant 0 : index
    %210 = vector.load %arg17[%209, %c0_53] : memref<56x64xf32, #tpu.memory_space<vmem>>, vector<8x64xf32>
    tpu.vector_store %arg17[%209, %c0_53], %206 {strides = array<i32>} : memref<56x64xf32, #tpu.memory_space<vmem>>, vector<8x64xf32>,
    %c3_i32 = arith.constant 3 : i32
    %c6_i32_54 = arith.constant 6 : i32
    %211 = arith.subi %c6_i32_54, %c3_i32 : i32
    %c8_i32_55 = arith.constant 8 : i32
    %212 = arith.muli %c3_i32, %c8_i32_55 : i32
    %213 = tpu.assume_multiple %212, 8 : i32
    %c8_i32_56 = arith.constant 8 : i32
    %214 = arith.muli %211, %c8_i32_56 : i32
    %215 = tpu.assume_multiple %214, 8 : i32
    %216 = arith.index_cast %213 : i32 to index
    %c0_57 = arith.constant 0 : index
    %217 = vector.load %arg15[%216, %c0_57] : memref<56x512xf32, #tpu.memory_space<vmem>>, vector<8x256xf32>
    %218 = arith.index_cast %215 : i32 to index
    %c256_58 = arith.constant 256 : index
    %219 = vector.load %arg15[%218, %c256_58] : memref<56x512xf32, #tpu.memory_space<vmem>>, vector<8x256xf32>
    %cst_59 = arith.constant dense<0.000000e+00> : vector<8x256xf32>
    %220 = tpu.matmul %181, %7, %cst_59 {dimension_numbers = #tpu.dot_dimension_numbers<[1], [0], [0], [1], [0, 0, 1, 1], [], []>} : vector<8x64xf32>, vector<64x256xf32>, vector<8x256xf32> -> vector<8x256xf32>
    %221 = arith.addf %217, %220 : vector<8x256xf32>
    %cst_60 = arith.constant dense<0.000000e+00> : vector<8x256xf32>
    %222 = tpu.matmul %206, %8, %cst_60 {dimension_numbers = #tpu.dot_dimension_numbers<[1], [0], [0], [1], [0, 0, 1, 1], [], []>} : vector<8x64xf32>, vector<64x256xf32>, vector<8x256xf32> -> vector<8x256xf32>
    %223 = arith.addf %219, %222 : vector<8x256xf32>
    %224 = vector.extract_strided_slice %221 {offsets = [0, 0], sizes = [8, 64], strides = [1, 1]} : vector<8x256xf32> to vector<8x64xf32>
    %225 = arith.negf %224 : vector<8x64xf32>
    %226 = math.exp %225 : vector<8x64xf32>
    %cst_61 = arith.constant 1.000000e+00 : f32
    %227 = vector.broadcast %cst_61 : f32 to vector<8x64xf32>
    %228 = arith.addf %227, %226 : vector<8x64xf32>
    %229 = arith.divf %227, %228 : vector<8x64xf32>
    %230 = vector.extract_strided_slice %221 {offsets = [0, 64], sizes = [8, 64], strides = [1, 1]} : vector<8x256xf32> to vector<8x64xf32>
    %231 = arith.negf %230 : vector<8x64xf32>
    %232 = math.exp %231 : vector<8x64xf32>
    %cst_62 = arith.constant 1.000000e+00 : f32
    %233 = vector.broadcast %cst_62 : f32 to vector<8x64xf32>
    %234 = arith.addf %233, %232 : vector<8x64xf32>
    %235 = arith.divf %233, %234 : vector<8x64xf32>
    %236 = vector.extract_strided_slice %221 {offsets = [0, 128], sizes = [8, 64], strides = [1, 1]} : vector<8x256xf32> to vector<8x64xf32>
    %237 = math.tanh %236 : vector<8x64xf32>
    %238 = vector.extract_strided_slice %221 {offsets = [0, 192], sizes = [8, 64], strides = [1, 1]} : vector<8x256xf32> to vector<8x64xf32>
    %239 = arith.negf %238 : vector<8x64xf32>
    %240 = math.exp %239 : vector<8x64xf32>
    %cst_63 = arith.constant 1.000000e+00 : f32
    %241 = vector.broadcast %cst_63 : f32 to vector<8x64xf32>
    %242 = arith.addf %241, %240 : vector<8x64xf32>
    %243 = arith.divf %241, %242 : vector<8x64xf32>
    %244 = arith.mulf %235, %179 : vector<8x64xf32>
    %245 = arith.mulf %229, %237 : vector<8x64xf32>
    %246 = arith.addf %244, %245 : vector<8x64xf32>
    %247 = math.tanh %246 : vector<8x64xf32>
    %248 = arith.mulf %243, %247 : vector<8x64xf32>
    %249 = vector.extract_strided_slice %223 {offsets = [0, 0], sizes = [8, 64], strides = [1, 1]} : vector<8x256xf32> to vector<8x64xf32>
    %250 = arith.negf %249 : vector<8x64xf32>
    %251 = math.exp %250 : vector<8x64xf32>
    %cst_64 = arith.constant 1.000000e+00 : f32
    %252 = vector.broadcast %cst_64 : f32 to vector<8x64xf32>
    %253 = arith.addf %252, %251 : vector<8x64xf32>
    %254 = arith.divf %252, %253 : vector<8x64xf32>
    %255 = vector.extract_strided_slice %223 {offsets = [0, 64], sizes = [8, 64], strides = [1, 1]} : vector<8x256xf32> to vector<8x64xf32>
    %256 = arith.negf %255 : vector<8x64xf32>
    %257 = math.exp %256 : vector<8x64xf32>
    %cst_65 = arith.constant 1.000000e+00 : f32
    %258 = vector.broadcast %cst_65 : f32 to vector<8x64xf32>
    %259 = arith.addf %258, %257 : vector<8x64xf32>
    %260 = arith.divf %258, %259 : vector<8x64xf32>
    %261 = vector.extract_strided_slice %223 {offsets = [0, 128], sizes = [8, 64], strides = [1, 1]} : vector<8x256xf32> to vector<8x64xf32>
    %262 = math.tanh %261 : vector<8x64xf32>
    %263 = vector.extract_strided_slice %223 {offsets = [0, 192], sizes = [8, 64], strides = [1, 1]} : vector<8x256xf32> to vector<8x64xf32>
    %264 = arith.negf %263 : vector<8x64xf32>
    %265 = math.exp %264 : vector<8x64xf32>
    %cst_66 = arith.constant 1.000000e+00 : f32
    %266 = vector.broadcast %cst_66 : f32 to vector<8x64xf32>
    %267 = arith.addf %266, %265 : vector<8x64xf32>
    %268 = arith.divf %266, %267 : vector<8x64xf32>
    %269 = arith.mulf %260, %204 : vector<8x64xf32>
    %270 = arith.mulf %254, %262 : vector<8x64xf32>
    %271 = arith.addf %269, %270 : vector<8x64xf32>
    %272 = math.tanh %271 : vector<8x64xf32>
    %273 = arith.mulf %268, %272 : vector<8x64xf32>
    %274 = arith.index_cast %213 : i32 to index
    %c0_67 = arith.constant 0 : index
    %275 = vector.load %arg16[%274, %c0_67] : memref<56x64xf32, #tpu.memory_space<vmem>>, vector<8x64xf32>
    tpu.vector_store %arg16[%274, %c0_67], %248 {strides = array<i32>} : memref<56x64xf32, #tpu.memory_space<vmem>>, vector<8x64xf32>,
    %276 = arith.index_cast %215 : i32 to index
    %c0_68 = arith.constant 0 : index
    %277 = vector.load %arg17[%276, %c0_68] : memref<56x64xf32, #tpu.memory_space<vmem>>, vector<8x64xf32>
    tpu.vector_store %arg17[%276, %c0_68], %273 {strides = array<i32>} : memref<56x64xf32, #tpu.memory_space<vmem>>, vector<8x64xf32>,
    %c4_i32 = arith.constant 4 : i32
    %c6_i32_69 = arith.constant 6 : i32
    %278 = arith.subi %c6_i32_69, %c4_i32 : i32
    %c8_i32_70 = arith.constant 8 : i32
    %279 = arith.muli %c4_i32, %c8_i32_70 : i32
    %280 = tpu.assume_multiple %279, 8 : i32
    %c8_i32_71 = arith.constant 8 : i32
    %281 = arith.muli %278, %c8_i32_71 : i32
    %282 = tpu.assume_multiple %281, 8 : i32
    %283 = arith.index_cast %280 : i32 to index
    %c0_72 = arith.constant 0 : index
    %284 = vector.load %arg15[%283, %c0_72] : memref<56x512xf32, #tpu.memory_space<vmem>>, vector<8x256xf32>
    %285 = arith.index_cast %282 : i32 to index
    %c256_73 = arith.constant 256 : index
    %286 = vector.load %arg15[%285, %c256_73] : memref<56x512xf32, #tpu.memory_space<vmem>>, vector<8x256xf32>
    %cst_74 = arith.constant dense<0.000000e+00> : vector<8x256xf32>
    %287 = tpu.matmul %248, %7, %cst_74 {dimension_numbers = #tpu.dot_dimension_numbers<[1], [0], [0], [1], [0, 0, 1, 1], [], []>} : vector<8x64xf32>, vector<64x256xf32>, vector<8x256xf32> -> vector<8x256xf32>
    %288 = arith.addf %284, %287 : vector<8x256xf32>
    %cst_75 = arith.constant dense<0.000000e+00> : vector<8x256xf32>
    %289 = tpu.matmul %273, %8, %cst_75 {dimension_numbers = #tpu.dot_dimension_numbers<[1], [0], [0], [1], [0, 0, 1, 1], [], []>} : vector<8x64xf32>, vector<64x256xf32>, vector<8x256xf32> -> vector<8x256xf32>
    %290 = arith.addf %286, %289 : vector<8x256xf32>
    %291 = vector.extract_strided_slice %288 {offsets = [0, 0], sizes = [8, 64], strides = [1, 1]} : vector<8x256xf32> to vector<8x64xf32>
    %292 = arith.negf %291 : vector<8x64xf32>
    %293 = math.exp %292 : vector<8x64xf32>
    %cst_76 = arith.constant 1.000000e+00 : f32
    %294 = vector.broadcast %cst_76 : f32 to vector<8x64xf32>
    %295 = arith.addf %294, %293 : vector<8x64xf32>
    %296 = arith.divf %294, %295 : vector<8x64xf32>
    %297 = vector.extract_strided_slice %288 {offsets = [0, 64], sizes = [8, 64], strides = [1, 1]} : vector<8x256xf32> to vector<8x64xf32>
    %298 = arith.negf %297 : vector<8x64xf32>
    %299 = math.exp %298 : vector<8x64xf32>
    %cst_77 = arith.constant 1.000000e+00 : f32
    %300 = vector.broadcast %cst_77 : f32 to vector<8x64xf32>
    %301 = arith.addf %300, %299 : vector<8x64xf32>
    %302 = arith.divf %300, %301 : vector<8x64xf32>
    %303 = vector.extract_strided_slice %288 {offsets = [0, 128], sizes = [8, 64], strides = [1, 1]} : vector<8x256xf32> to vector<8x64xf32>
    %304 = math.tanh %303 : vector<8x64xf32>
    %305 = vector.extract_strided_slice %288 {offsets = [0, 192], sizes = [8, 64], strides = [1, 1]} : vector<8x256xf32> to vector<8x64xf32>
    %306 = arith.negf %305 : vector<8x64xf32>
    %307 = math.exp %306 : vector<8x64xf32>
    %cst_78 = arith.constant 1.000000e+00 : f32
    %308 = vector.broadcast %cst_78 : f32 to vector<8x64xf32>
    %309 = arith.addf %308, %307 : vector<8x64xf32>
    %310 = arith.divf %308, %309 : vector<8x64xf32>
    %311 = arith.mulf %302, %246 : vector<8x64xf32>
    %312 = arith.mulf %296, %304 : vector<8x64xf32>
    %313 = arith.addf %311, %312 : vector<8x64xf32>
    %314 = math.tanh %313 : vector<8x64xf32>
    %315 = arith.mulf %310, %314 : vector<8x64xf32>
    %316 = vector.extract_strided_slice %290 {offsets = [0, 0], sizes = [8, 64], strides = [1, 1]} : vector<8x256xf32> to vector<8x64xf32>
    %317 = arith.negf %316 : vector<8x64xf32>
    %318 = math.exp %317 : vector<8x64xf32>
    %cst_79 = arith.constant 1.000000e+00 : f32
    %319 = vector.broadcast %cst_79 : f32 to vector<8x64xf32>
    %320 = arith.addf %319, %318 : vector<8x64xf32>
    %321 = arith.divf %319, %320 : vector<8x64xf32>
    %322 = vector.extract_strided_slice %290 {offsets = [0, 64], sizes = [8, 64], strides = [1, 1]} : vector<8x256xf32> to vector<8x64xf32>
    %323 = arith.negf %322 : vector<8x64xf32>
    %324 = math.exp %323 : vector<8x64xf32>
    %cst_80 = arith.constant 1.000000e+00 : f32
    %325 = vector.broadcast %cst_80 : f32 to vector<8x64xf32>
    %326 = arith.addf %325, %324 : vector<8x64xf32>
    %327 = arith.divf %325, %326 : vector<8x64xf32>
    %328 = vector.extract_strided_slice %290 {offsets = [0, 128], sizes = [8, 64], strides = [1, 1]} : vector<8x256xf32> to vector<8x64xf32>
    %329 = math.tanh %328 : vector<8x64xf32>
    %330 = vector.extract_strided_slice %290 {offsets = [0, 192], sizes = [8, 64], strides = [1, 1]} : vector<8x256xf32> to vector<8x64xf32>
    %331 = arith.negf %330 : vector<8x64xf32>
    %332 = math.exp %331 : vector<8x64xf32>
    %cst_81 = arith.constant 1.000000e+00 : f32
    %333 = vector.broadcast %cst_81 : f32 to vector<8x64xf32>
    %334 = arith.addf %333, %332 : vector<8x64xf32>
    %335 = arith.divf %333, %334 : vector<8x64xf32>
    %336 = arith.mulf %327, %271 : vector<8x64xf32>
    %337 = arith.mulf %321, %329 : vector<8x64xf32>
    %338 = arith.addf %336, %337 : vector<8x64xf32>
    %339 = math.tanh %338 : vector<8x64xf32>
    %340 = arith.mulf %335, %339 : vector<8x64xf32>
    %341 = arith.index_cast %280 : i32 to index
    %c0_82 = arith.constant 0 : index
    %342 = vector.load %arg16[%341, %c0_82] : memref<56x64xf32, #tpu.memory_space<vmem>>, vector<8x64xf32>
    tpu.vector_store %arg16[%341, %c0_82], %315 {strides = array<i32>} : memref<56x64xf32, #tpu.memory_space<vmem>>, vector<8x64xf32>,
    %343 = arith.index_cast %282 : i32 to index
    %c0_83 = arith.constant 0 : index
    %344 = vector.load %arg17[%343, %c0_83] : memref<56x64xf32, #tpu.memory_space<vmem>>, vector<8x64xf32>
    tpu.vector_store %arg17[%343, %c0_83], %340 {strides = array<i32>} : memref<56x64xf32, #tpu.memory_space<vmem>>, vector<8x64xf32>,
    %c5_i32 = arith.constant 5 : i32
    %c6_i32_84 = arith.constant 6 : i32
    %345 = arith.subi %c6_i32_84, %c5_i32 : i32
    %c8_i32_85 = arith.constant 8 : i32
    %346 = arith.muli %c5_i32, %c8_i32_85 : i32
    %347 = tpu.assume_multiple %346, 8 : i32
    %c8_i32_86 = arith.constant 8 : i32
    %348 = arith.muli %345, %c8_i32_86 : i32
    %349 = tpu.assume_multiple %348, 8 : i32
    %350 = arith.index_cast %347 : i32 to index
    %c0_87 = arith.constant 0 : index
    %351 = vector.load %arg15[%350, %c0_87] : memref<56x512xf32, #tpu.memory_space<vmem>>, vector<8x256xf32>
    %352 = arith.index_cast %349 : i32 to index
    %c256_88 = arith.constant 256 : index
    %353 = vector.load %arg15[%352, %c256_88] : memref<56x512xf32, #tpu.memory_space<vmem>>, vector<8x256xf32>
    %cst_89 = arith.constant dense<0.000000e+00> : vector<8x256xf32>
    %354 = tpu.matmul %315, %7, %cst_89 {dimension_numbers = #tpu.dot_dimension_numbers<[1], [0], [0], [1], [0, 0, 1, 1], [], []>} : vector<8x64xf32>, vector<64x256xf32>, vector<8x256xf32> -> vector<8x256xf32>
    %355 = arith.addf %351, %354 : vector<8x256xf32>
    %cst_90 = arith.constant dense<0.000000e+00> : vector<8x256xf32>
    %356 = tpu.matmul %340, %8, %cst_90 {dimension_numbers = #tpu.dot_dimension_numbers<[1], [0], [0], [1], [0, 0, 1, 1], [], []>} : vector<8x64xf32>, vector<64x256xf32>, vector<8x256xf32> -> vector<8x256xf32>
    %357 = arith.addf %353, %356 : vector<8x256xf32>
    %358 = vector.extract_strided_slice %355 {offsets = [0, 0], sizes = [8, 64], strides = [1, 1]} : vector<8x256xf32> to vector<8x64xf32>
    %359 = arith.negf %358 : vector<8x64xf32>
    %360 = math.exp %359 : vector<8x64xf32>
    %cst_91 = arith.constant 1.000000e+00 : f32
    %361 = vector.broadcast %cst_91 : f32 to vector<8x64xf32>
    %362 = arith.addf %361, %360 : vector<8x64xf32>
    %363 = arith.divf %361, %362 : vector<8x64xf32>
    %364 = vector.extract_strided_slice %355 {offsets = [0, 64], sizes = [8, 64], strides = [1, 1]} : vector<8x256xf32> to vector<8x64xf32>
    %365 = arith.negf %364 : vector<8x64xf32>
    %366 = math.exp %365 : vector<8x64xf32>
    %cst_92 = arith.constant 1.000000e+00 : f32
    %367 = vector.broadcast %cst_92 : f32 to vector<8x64xf32>
    %368 = arith.addf %367, %366 : vector<8x64xf32>
    %369 = arith.divf %367, %368 : vector<8x64xf32>
    %370 = vector.extract_strided_slice %355 {offsets = [0, 128], sizes = [8, 64], strides = [1, 1]} : vector<8x256xf32> to vector<8x64xf32>
    %371 = math.tanh %370 : vector<8x64xf32>
    %372 = vector.extract_strided_slice %355 {offsets = [0, 192], sizes = [8, 64], strides = [1, 1]} : vector<8x256xf32> to vector<8x64xf32>
    %373 = arith.negf %372 : vector<8x64xf32>
    %374 = math.exp %373 : vector<8x64xf32>
    %cst_93 = arith.constant 1.000000e+00 : f32
    %375 = vector.broadcast %cst_93 : f32 to vector<8x64xf32>
    %376 = arith.addf %375, %374 : vector<8x64xf32>
    %377 = arith.divf %375, %376 : vector<8x64xf32>
    %378 = arith.mulf %369, %313 : vector<8x64xf32>
    %379 = arith.mulf %363, %371 : vector<8x64xf32>
    %380 = arith.addf %378, %379 : vector<8x64xf32>
    %381 = math.tanh %380 : vector<8x64xf32>
    %382 = arith.mulf %377, %381 : vector<8x64xf32>
    %383 = vector.extract_strided_slice %357 {offsets = [0, 0], sizes = [8, 64], strides = [1, 1]} : vector<8x256xf32> to vector<8x64xf32>
    %384 = arith.negf %383 : vector<8x64xf32>
    %385 = math.exp %384 : vector<8x64xf32>
    %cst_94 = arith.constant 1.000000e+00 : f32
    %386 = vector.broadcast %cst_94 : f32 to vector<8x64xf32>
    %387 = arith.addf %386, %385 : vector<8x64xf32>
    %388 = arith.divf %386, %387 : vector<8x64xf32>
    %389 = vector.extract_strided_slice %357 {offsets = [0, 64], sizes = [8, 64], strides = [1, 1]} : vector<8x256xf32> to vector<8x64xf32>
    %390 = arith.negf %389 : vector<8x64xf32>
    %391 = math.exp %390 : vector<8x64xf32>
    %cst_95 = arith.constant 1.000000e+00 : f32
    %392 = vector.broadcast %cst_95 : f32 to vector<8x64xf32>
    %393 = arith.addf %392, %391 : vector<8x64xf32>
    %394 = arith.divf %392, %393 : vector<8x64xf32>
    %395 = vector.extract_strided_slice %357 {offsets = [0, 128], sizes = [8, 64], strides = [1, 1]} : vector<8x256xf32> to vector<8x64xf32>
    %396 = math.tanh %395 : vector<8x64xf32>
    %397 = vector.extract_strided_slice %357 {offsets = [0, 192], sizes = [8, 64], strides = [1, 1]} : vector<8x256xf32> to vector<8x64xf32>
    %398 = arith.negf %397 : vector<8x64xf32>
    %399 = math.exp %398 : vector<8x64xf32>
    %cst_96 = arith.constant 1.000000e+00 : f32
    %400 = vector.broadcast %cst_96 : f32 to vector<8x64xf32>
    %401 = arith.addf %400, %399 : vector<8x64xf32>
    %402 = arith.divf %400, %401 : vector<8x64xf32>
    %403 = arith.mulf %394, %338 : vector<8x64xf32>
    %404 = arith.mulf %388, %396 : vector<8x64xf32>
    %405 = arith.addf %403, %404 : vector<8x64xf32>
    %406 = math.tanh %405 : vector<8x64xf32>
    %407 = arith.mulf %402, %406 : vector<8x64xf32>
    %408 = arith.index_cast %347 : i32 to index
    %c0_97 = arith.constant 0 : index
    %409 = vector.load %arg16[%408, %c0_97] : memref<56x64xf32, #tpu.memory_space<vmem>>, vector<8x64xf32>
    tpu.vector_store %arg16[%408, %c0_97], %382 {strides = array<i32>} : memref<56x64xf32, #tpu.memory_space<vmem>>, vector<8x64xf32>,
    %410 = arith.index_cast %349 : i32 to index
    %c0_98 = arith.constant 0 : index
    %411 = vector.load %arg17[%410, %c0_98] : memref<56x64xf32, #tpu.memory_space<vmem>>, vector<8x64xf32>
    tpu.vector_store %arg17[%410, %c0_98], %407 {strides = array<i32>} : memref<56x64xf32, #tpu.memory_space<vmem>>, vector<8x64xf32>,
    %c6_i32_99 = arith.constant 6 : i32
    %c6_i32_100 = arith.constant 6 : i32
    %412 = arith.subi %c6_i32_100, %c6_i32_99 : i32
    %c8_i32_101 = arith.constant 8 : i32
    %413 = arith.muli %c6_i32_99, %c8_i32_101 : i32
    %414 = tpu.assume_multiple %413, 8 : i32
    %c8_i32_102 = arith.constant 8 : i32
    %415 = arith.muli %412, %c8_i32_102 : i32
    %416 = tpu.assume_multiple %415, 8 : i32
    %417 = arith.index_cast %414 : i32 to index
    %c0_103 = arith.constant 0 : index
    %418 = vector.load %arg15[%417, %c0_103] : memref<56x512xf32, #tpu.memory_space<vmem>>, vector<8x256xf32>
    %419 = arith.index_cast %416 : i32 to index
    %c256_104 = arith.constant 256 : index
    %420 = vector.load %arg15[%419, %c256_104] : memref<56x512xf32, #tpu.memory_space<vmem>>, vector<8x256xf32>
    %cst_105 = arith.constant dense<0.000000e+00> : vector<8x256xf32>
    %421 = tpu.matmul %382, %7, %cst_105 {dimension_numbers = #tpu.dot_dimension_numbers<[1], [0], [0], [1], [0, 0, 1, 1], [], []>} : vector<8x64xf32>, vector<64x256xf32>, vector<8x256xf32> -> vector<8x256xf32>
    %422 = arith.addf %418, %421 : vector<8x256xf32>
    %cst_106 = arith.constant dense<0.000000e+00> : vector<8x256xf32>
    %423 = tpu.matmul %407, %8, %cst_106 {dimension_numbers = #tpu.dot_dimension_numbers<[1], [0], [0], [1], [0, 0, 1, 1], [], []>} : vector<8x64xf32>, vector<64x256xf32>, vector<8x256xf32> -> vector<8x256xf32>
    %424 = arith.addf %420, %423 : vector<8x256xf32>
    %425 = vector.extract_strided_slice %422 {offsets = [0, 0], sizes = [8, 64], strides = [1, 1]} : vector<8x256xf32> to vector<8x64xf32>
    %426 = arith.negf %425 : vector<8x64xf32>
    %427 = math.exp %426 : vector<8x64xf32>
    %cst_107 = arith.constant 1.000000e+00 : f32
    %428 = vector.broadcast %cst_107 : f32 to vector<8x64xf32>
    %429 = arith.addf %428, %427 : vector<8x64xf32>
    %430 = arith.divf %428, %429 : vector<8x64xf32>
    %431 = vector.extract_strided_slice %422 {offsets = [0, 64], sizes = [8, 64], strides = [1, 1]} : vector<8x256xf32> to vector<8x64xf32>
    %432 = arith.negf %431 : vector<8x64xf32>
    %433 = math.exp %432 : vector<8x64xf32>
    %cst_108 = arith.constant 1.000000e+00 : f32
    %434 = vector.broadcast %cst_108 : f32 to vector<8x64xf32>
    %435 = arith.addf %434, %433 : vector<8x64xf32>
    %436 = arith.divf %434, %435 : vector<8x64xf32>
    %437 = vector.extract_strided_slice %422 {offsets = [0, 128], sizes = [8, 64], strides = [1, 1]} : vector<8x256xf32> to vector<8x64xf32>
    %438 = math.tanh %437 : vector<8x64xf32>
    %439 = vector.extract_strided_slice %422 {offsets = [0, 192], sizes = [8, 64], strides = [1, 1]} : vector<8x256xf32> to vector<8x64xf32>
    %440 = arith.negf %439 : vector<8x64xf32>
    %441 = math.exp %440 : vector<8x64xf32>
    %cst_109 = arith.constant 1.000000e+00 : f32
    %442 = vector.broadcast %cst_109 : f32 to vector<8x64xf32>
    %443 = arith.addf %442, %441 : vector<8x64xf32>
    %444 = arith.divf %442, %443 : vector<8x64xf32>
    %445 = arith.mulf %436, %380 : vector<8x64xf32>
    %446 = arith.mulf %430, %438 : vector<8x64xf32>
    %447 = arith.addf %445, %446 : vector<8x64xf32>
    %448 = math.tanh %447 : vector<8x64xf32>
    %449 = arith.mulf %444, %448 : vector<8x64xf32>
    %450 = vector.extract_strided_slice %424 {offsets = [0, 0], sizes = [8, 64], strides = [1, 1]} : vector<8x256xf32> to vector<8x64xf32>
    %451 = arith.negf %450 : vector<8x64xf32>
    %452 = math.exp %451 : vector<8x64xf32>
    %cst_110 = arith.constant 1.000000e+00 : f32
    %453 = vector.broadcast %cst_110 : f32 to vector<8x64xf32>
    %454 = arith.addf %453, %452 : vector<8x64xf32>
    %455 = arith.divf %453, %454 : vector<8x64xf32>
    %456 = vector.extract_strided_slice %424 {offsets = [0, 64], sizes = [8, 64], strides = [1, 1]} : vector<8x256xf32> to vector<8x64xf32>
    %457 = arith.negf %456 : vector<8x64xf32>
    %458 = math.exp %457 : vector<8x64xf32>
    %cst_111 = arith.constant 1.000000e+00 : f32
    %459 = vector.broadcast %cst_111 : f32 to vector<8x64xf32>
    %460 = arith.addf %459, %458 : vector<8x64xf32>
    %461 = arith.divf %459, %460 : vector<8x64xf32>
    %462 = vector.extract_strided_slice %424 {offsets = [0, 128], sizes = [8, 64], strides = [1, 1]} : vector<8x256xf32> to vector<8x64xf32>
    %463 = math.tanh %462 : vector<8x64xf32>
    %464 = vector.extract_strided_slice %424 {offsets = [0, 192], sizes = [8, 64], strides = [1, 1]} : vector<8x256xf32> to vector<8x64xf32>
    %465 = arith.negf %464 : vector<8x64xf32>
    %466 = math.exp %465 : vector<8x64xf32>
    %cst_112 = arith.constant 1.000000e+00 : f32
    %467 = vector.broadcast %cst_112 : f32 to vector<8x64xf32>
    %468 = arith.addf %467, %466 : vector<8x64xf32>
    %469 = arith.divf %467, %468 : vector<8x64xf32>
    %470 = arith.mulf %461, %405 : vector<8x64xf32>
    %471 = arith.mulf %455, %463 : vector<8x64xf32>
    %472 = arith.addf %470, %471 : vector<8x64xf32>
    %473 = math.tanh %472 : vector<8x64xf32>
    %474 = arith.mulf %469, %473 : vector<8x64xf32>
    %475 = arith.index_cast %414 : i32 to index
    %c0_113 = arith.constant 0 : index
    %476 = vector.load %arg16[%475, %c0_113] : memref<56x64xf32, #tpu.memory_space<vmem>>, vector<8x64xf32>
    tpu.vector_store %arg16[%475, %c0_113], %449 {strides = array<i32>} : memref<56x64xf32, #tpu.memory_space<vmem>>, vector<8x64xf32>,
    %477 = arith.index_cast %416 : i32 to index
    %c0_114 = arith.constant 0 : index
    %478 = vector.load %arg17[%477, %c0_114] : memref<56x64xf32, #tpu.memory_space<vmem>>, vector<8x64xf32>
    tpu.vector_store %arg17[%477, %c0_114], %474 {strides = array<i32>} : memref<56x64xf32, #tpu.memory_space<vmem>>, vector<8x64xf32>,
    %c7_i32 = arith.constant 7 : i32
    %c0_115 = arith.constant 0 : index
    %c0_116 = arith.constant 0 : index
    %479 = vector.load %arg16[%c0_115, %c0_116] : memref<56x64xf32, #tpu.memory_space<vmem>>, vector<56x64xf32>
    %480 = arith.truncf %479 : vector<56x64xf32> to vector<56x64xbf16>
    %c0_117 = arith.constant 0 : index
    %c0_118 = arith.constant 0 : index
    %481 = vector.load %arg17[%c0_117, %c0_118] : memref<56x64xf32, #tpu.memory_space<vmem>>, vector<56x64xf32>
    %482 = arith.truncf %481 : vector<56x64xf32> to vector<56x64xbf16>
    %c0_119 = arith.constant 0 : index
    %c0_120 = arith.constant 0 : index
    %483 = vector.load %arg6[%c0_119, %c0_120] : memref<64x512xbf16, #tpu.memory_space<vmem>>, vector<64x512xbf16>
    %cst_121 = arith.constant dense<0.000000e+00> : vector<56x512xf32>
    %484 = tpu.matmul %480, %483, %cst_121 {dimension_numbers = #tpu.dot_dimension_numbers<[1], [0], [0], [1], [0, 0, 1, 1], [], []>} : vector<56x64xbf16>, vector<64x512xbf16>, vector<56x512xf32> -> vector<56x512xf32>
    %c0_122 = arith.constant 0 : index
    %c0_123 = arith.constant 0 : index
    %485 = vector.load %arg7[%c0_122, %c0_123] : memref<64x512xbf16, #tpu.memory_space<vmem>>, vector<64x512xbf16>
    %cst_124 = arith.constant dense<0.000000e+00> : vector<56x512xf32>
    %486 = tpu.matmul %482, %485, %cst_124 {dimension_numbers = #tpu.dot_dimension_numbers<[1], [0], [0], [1], [0, 0, 1, 1], [], []>} : vector<56x64xbf16>, vector<64x512xbf16>, vector<56x512xf32> -> vector<56x512xf32>
    %487 = arith.addf %484, %486 : vector<56x512xf32>
    %c0_125 = arith.constant 0 : index
    %c0_126 = arith.constant 0 : index
    %488 = vector.load %arg8[%c0_125, %c0_126] : memref<1x512xf32, #tpu.memory_space<vmem>>, vector<1x512xf32>
    %489 = vector.broadcast %488 : vector<1x512xf32> to vector<56x512xf32>
    %490 = arith.addf %487, %489 : vector<56x512xf32>
    %c0_127 = arith.constant 0 : index
    %c0_128 = arith.constant 0 : index
    %491 = vector.load %arg15[%c0_127, %c0_128] : memref<56x512xf32, #tpu.memory_space<vmem>>, vector<56x512xf32>
    tpu.vector_store %arg15[%c0_127, %c0_128], %490 {strides = array<i32>} : memref<56x512xf32, #tpu.memory_space<vmem>>, vector<56x512xf32>,
    %c0_129 = arith.constant 0 : index
    %c0_130 = arith.constant 0 : index
    %492 = vector.load %arg9[%c0_129, %c0_130] : memref<64x256xf32, #tpu.memory_space<vmem>>, vector<64x256xf32>
    %c0_131 = arith.constant 0 : index
    %c0_132 = arith.constant 0 : index
    %493 = vector.load %arg10[%c0_131, %c0_132] : memref<64x256xf32, #tpu.memory_space<vmem>>, vector<64x256xf32>
    %cst_133 = arith.constant 0.000000e+00 : f32
    %494 = vector.broadcast %cst_133 : f32 to vector<8x64xf32>
    %c0_i32_134 = arith.constant 0 : i32
    %c6_i32_135 = arith.constant 6 : i32
    %495 = arith.subi %c6_i32_135, %c0_i32_134 : i32
    %c8_i32_136 = arith.constant 8 : i32
    %496 = arith.muli %c0_i32_134, %c8_i32_136 : i32
    %497 = tpu.assume_multiple %496, 8 : i32
    %c8_i32_137 = arith.constant 8 : i32
    %498 = arith.muli %495, %c8_i32_137 : i32
    %499 = tpu.assume_multiple %498, 8 : i32
    %500 = arith.index_cast %497 : i32 to index
    %c0_138 = arith.constant 0 : index
    %501 = vector.load %arg15[%500, %c0_138] : memref<56x512xf32, #tpu.memory_space<vmem>>, vector<8x256xf32>
    %502 = arith.index_cast %499 : i32 to index
    %c256_139 = arith.constant 256 : index
    %503 = vector.load %arg15[%502, %c256_139] : memref<56x512xf32, #tpu.memory_space<vmem>>, vector<8x256xf32>
    %cst_140 = arith.constant dense<0.000000e+00> : vector<8x256xf32>
    %504 = tpu.matmul %494, %492, %cst_140 {dimension_numbers = #tpu.dot_dimension_numbers<[1], [0], [0], [1], [0, 0, 1, 1], [], []>} : vector<8x64xf32>, vector<64x256xf32>, vector<8x256xf32> -> vector<8x256xf32>
    %505 = arith.addf %501, %504 : vector<8x256xf32>
    %cst_141 = arith.constant dense<0.000000e+00> : vector<8x256xf32>
    %506 = tpu.matmul %494, %493, %cst_141 {dimension_numbers = #tpu.dot_dimension_numbers<[1], [0], [0], [1], [0, 0, 1, 1], [], []>} : vector<8x64xf32>, vector<64x256xf32>, vector<8x256xf32> -> vector<8x256xf32>
    %507 = arith.addf %503, %506 : vector<8x256xf32>
    %508 = vector.extract_strided_slice %505 {offsets = [0, 0], sizes = [8, 64], strides = [1, 1]} : vector<8x256xf32> to vector<8x64xf32>
    %509 = arith.negf %508 : vector<8x64xf32>
    %510 = math.exp %509 : vector<8x64xf32>
    %cst_142 = arith.constant 1.000000e+00 : f32
    %511 = vector.broadcast %cst_142 : f32 to vector<8x64xf32>
    %512 = arith.addf %511, %510 : vector<8x64xf32>
    %513 = arith.divf %511, %512 : vector<8x64xf32>
    %514 = vector.extract_strided_slice %505 {offsets = [0, 64], sizes = [8, 64], strides = [1, 1]} : vector<8x256xf32> to vector<8x64xf32>
    %515 = arith.negf %514 : vector<8x64xf32>
    %516 = math.exp %515 : vector<8x64xf32>
    %cst_143 = arith.constant 1.000000e+00 : f32
    %517 = vector.broadcast %cst_143 : f32 to vector<8x64xf32>
    %518 = arith.addf %517, %516 : vector<8x64xf32>
    %519 = arith.divf %517, %518 : vector<8x64xf32>
    %520 = vector.extract_strided_slice %505 {offsets = [0, 128], sizes = [8, 64], strides = [1, 1]} : vector<8x256xf32> to vector<8x64xf32>
    %521 = math.tanh %520 : vector<8x64xf32>
    %522 = vector.extract_strided_slice %505 {offsets = [0, 192], sizes = [8, 64], strides = [1, 1]} : vector<8x256xf32> to vector<8x64xf32>
    %523 = arith.negf %522 : vector<8x64xf32>
    %524 = math.exp %523 : vector<8x64xf32>
    %cst_144 = arith.constant 1.000000e+00 : f32
    %525 = vector.broadcast %cst_144 : f32 to vector<8x64xf32>
    %526 = arith.addf %525, %524 : vector<8x64xf32>
    %527 = arith.divf %525, %526 : vector<8x64xf32>
    %528 = arith.mulf %519, %494 : vector<8x64xf32>
    %529 = arith.mulf %513, %521 : vector<8x64xf32>
    %530 = arith.addf %528, %529 : vector<8x64xf32>
    %531 = math.tanh %530 : vector<8x64xf32>
    %532 = arith.mulf %527, %531 : vector<8x64xf32>
    %533 = vector.extract_strided_slice %507 {offsets = [0, 0], sizes = [8, 64], strides = [1, 1]} : vector<8x256xf32> to vector<8x64xf32>
    %534 = arith.negf %533 : vector<8x64xf32>
    %535 = math.exp %534 : vector<8x64xf32>
    %cst_145 = arith.constant 1.000000e+00 : f32
    %536 = vector.broadcast %cst_145 : f32 to vector<8x64xf32>
    %537 = arith.addf %536, %535 : vector<8x64xf32>
    %538 = arith.divf %536, %537 : vector<8x64xf32>
    %539 = vector.extract_strided_slice %507 {offsets = [0, 64], sizes = [8, 64], strides = [1, 1]} : vector<8x256xf32> to vector<8x64xf32>
    %540 = arith.negf %539 : vector<8x64xf32>
    %541 = math.exp %540 : vector<8x64xf32>
    %cst_146 = arith.constant 1.000000e+00 : f32
    %542 = vector.broadcast %cst_146 : f32 to vector<8x64xf32>
    %543 = arith.addf %542, %541 : vector<8x64xf32>
    %544 = arith.divf %542, %543 : vector<8x64xf32>
    %545 = vector.extract_strided_slice %507 {offsets = [0, 128], sizes = [8, 64], strides = [1, 1]} : vector<8x256xf32> to vector<8x64xf32>
    %546 = math.tanh %545 : vector<8x64xf32>
    %547 = vector.extract_strided_slice %507 {offsets = [0, 192], sizes = [8, 64], strides = [1, 1]} : vector<8x256xf32> to vector<8x64xf32>
    %548 = arith.negf %547 : vector<8x64xf32>
    %549 = math.exp %548 : vector<8x64xf32>
    %cst_147 = arith.constant 1.000000e+00 : f32
    %550 = vector.broadcast %cst_147 : f32 to vector<8x64xf32>
    %551 = arith.addf %550, %549 : vector<8x64xf32>
    %552 = arith.divf %550, %551 : vector<8x64xf32>
    %553 = arith.mulf %544, %494 : vector<8x64xf32>
    %554 = arith.mulf %538, %546 : vector<8x64xf32>
    %555 = arith.addf %553, %554 : vector<8x64xf32>
    %556 = math.tanh %555 : vector<8x64xf32>
    %557 = arith.mulf %552, %556 : vector<8x64xf32>
    %558 = arith.index_cast %497 : i32 to index
    %c0_148 = arith.constant 0 : index
    %559 = vector.load %arg16[%558, %c0_148] : memref<56x64xf32, #tpu.memory_space<vmem>>, vector<8x64xf32>
    tpu.vector_store %arg16[%558, %c0_148], %532 {strides = array<i32>} : memref<56x64xf32, #tpu.memory_space<vmem>>, vector<8x64xf32>,
    %560 = arith.index_cast %499 : i32 to index
    %c0_149 = arith.constant 0 : index
    %561 = vector.load %arg17[%560, %c0_149] : memref<56x64xf32, #tpu.memory_space<vmem>>, vector<8x64xf32>
    tpu.vector_store %arg17[%560, %c0_149], %557 {strides = array<i32>} : memref<56x64xf32, #tpu.memory_space<vmem>>, vector<8x64xf32>,
    %c1_i32_150 = arith.constant 1 : i32
    %c6_i32_151 = arith.constant 6 : i32
    %562 = arith.subi %c6_i32_151, %c1_i32_150 : i32
    %c8_i32_152 = arith.constant 8 : i32
    %563 = arith.muli %c1_i32_150, %c8_i32_152 : i32
    %564 = tpu.assume_multiple %563, 8 : i32
    %c8_i32_153 = arith.constant 8 : i32
    %565 = arith.muli %562, %c8_i32_153 : i32
    %566 = tpu.assume_multiple %565, 8 : i32
    %567 = arith.index_cast %564 : i32 to index
    %c0_154 = arith.constant 0 : index
    %568 = vector.load %arg15[%567, %c0_154] : memref<56x512xf32, #tpu.memory_space<vmem>>, vector<8x256xf32>
    %569 = arith.index_cast %566 : i32 to index
    %c256_155 = arith.constant 256 : index
    %570 = vector.load %arg15[%569, %c256_155] : memref<56x512xf32, #tpu.memory_space<vmem>>, vector<8x256xf32>
    %cst_156 = arith.constant dense<0.000000e+00> : vector<8x256xf32>
    %571 = tpu.matmul %532, %492, %cst_156 {dimension_numbers = #tpu.dot_dimension_numbers<[1], [0], [0], [1], [0, 0, 1, 1], [], []>} : vector<8x64xf32>, vector<64x256xf32>, vector<8x256xf32> -> vector<8x256xf32>
    %572 = arith.addf %568, %571 : vector<8x256xf32>
    %cst_157 = arith.constant dense<0.000000e+00> : vector<8x256xf32>
    %573 = tpu.matmul %557, %493, %cst_157 {dimension_numbers = #tpu.dot_dimension_numbers<[1], [0], [0], [1], [0, 0, 1, 1], [], []>} : vector<8x64xf32>, vector<64x256xf32>, vector<8x256xf32> -> vector<8x256xf32>
    %574 = arith.addf %570, %573 : vector<8x256xf32>
    %575 = vector.extract_strided_slice %572 {offsets = [0, 0], sizes = [8, 64], strides = [1, 1]} : vector<8x256xf32> to vector<8x64xf32>
    %576 = arith.negf %575 : vector<8x64xf32>
    %577 = math.exp %576 : vector<8x64xf32>
    %cst_158 = arith.constant 1.000000e+00 : f32
    %578 = vector.broadcast %cst_158 : f32 to vector<8x64xf32>
    %579 = arith.addf %578, %577 : vector<8x64xf32>
    %580 = arith.divf %578, %579 : vector<8x64xf32>
    %581 = vector.extract_strided_slice %572 {offsets = [0, 64], sizes = [8, 64], strides = [1, 1]} : vector<8x256xf32> to vector<8x64xf32>
    %582 = arith.negf %581 : vector<8x64xf32>
    %583 = math.exp %582 : vector<8x64xf32>
    %cst_159 = arith.constant 1.000000e+00 : f32
    %584 = vector.broadcast %cst_159 : f32 to vector<8x64xf32>
    %585 = arith.addf %584, %583 : vector<8x64xf32>
    %586 = arith.divf %584, %585 : vector<8x64xf32>
    %587 = vector.extract_strided_slice %572 {offsets = [0, 128], sizes = [8, 64], strides = [1, 1]} : vector<8x256xf32> to vector<8x64xf32>
    %588 = math.tanh %587 : vector<8x64xf32>
    %589 = vector.extract_strided_slice %572 {offsets = [0, 192], sizes = [8, 64], strides = [1, 1]} : vector<8x256xf32> to vector<8x64xf32>
    %590 = arith.negf %589 : vector<8x64xf32>
    %591 = math.exp %590 : vector<8x64xf32>
    %cst_160 = arith.constant 1.000000e+00 : f32
    %592 = vector.broadcast %cst_160 : f32 to vector<8x64xf32>
    %593 = arith.addf %592, %591 : vector<8x64xf32>
    %594 = arith.divf %592, %593 : vector<8x64xf32>
    %595 = arith.mulf %586, %530 : vector<8x64xf32>
    %596 = arith.mulf %580, %588 : vector<8x64xf32>
    %597 = arith.addf %595, %596 : vector<8x64xf32>
    %598 = math.tanh %597 : vector<8x64xf32>
    %599 = arith.mulf %594, %598 : vector<8x64xf32>
    %600 = vector.extract_strided_slice %574 {offsets = [0, 0], sizes = [8, 64], strides = [1, 1]} : vector<8x256xf32> to vector<8x64xf32>
    %601 = arith.negf %600 : vector<8x64xf32>
    %602 = math.exp %601 : vector<8x64xf32>
    %cst_161 = arith.constant 1.000000e+00 : f32
    %603 = vector.broadcast %cst_161 : f32 to vector<8x64xf32>
    %604 = arith.addf %603, %602 : vector<8x64xf32>
    %605 = arith.divf %603, %604 : vector<8x64xf32>
    %606 = vector.extract_strided_slice %574 {offsets = [0, 64], sizes = [8, 64], strides = [1, 1]} : vector<8x256xf32> to vector<8x64xf32>
    %607 = arith.negf %606 : vector<8x64xf32>
    %608 = math.exp %607 : vector<8x64xf32>
    %cst_162 = arith.constant 1.000000e+00 : f32
    %609 = vector.broadcast %cst_162 : f32 to vector<8x64xf32>
    %610 = arith.addf %609, %608 : vector<8x64xf32>
    %611 = arith.divf %609, %610 : vector<8x64xf32>
    %612 = vector.extract_strided_slice %574 {offsets = [0, 128], sizes = [8, 64], strides = [1, 1]} : vector<8x256xf32> to vector<8x64xf32>
    %613 = math.tanh %612 : vector<8x64xf32>
    %614 = vector.extract_strided_slice %574 {offsets = [0, 192], sizes = [8, 64], strides = [1, 1]} : vector<8x256xf32> to vector<8x64xf32>
    %615 = arith.negf %614 : vector<8x64xf32>
    %616 = math.exp %615 : vector<8x64xf32>
    %cst_163 = arith.constant 1.000000e+00 : f32
    %617 = vector.broadcast %cst_163 : f32 to vector<8x64xf32>
    %618 = arith.addf %617, %616 : vector<8x64xf32>
    %619 = arith.divf %617, %618 : vector<8x64xf32>
    %620 = arith.mulf %611, %555 : vector<8x64xf32>
    %621 = arith.mulf %605, %613 : vector<8x64xf32>
    %622 = arith.addf %620, %621 : vector<8x64xf32>
    %623 = math.tanh %622 : vector<8x64xf32>
    %624 = arith.mulf %619, %623 : vector<8x64xf32>
    %625 = arith.index_cast %564 : i32 to index
    %c0_164 = arith.constant 0 : index
    %626 = vector.load %arg16[%625, %c0_164] : memref<56x64xf32, #tpu.memory_space<vmem>>, vector<8x64xf32>
    tpu.vector_store %arg16[%625, %c0_164], %599 {strides = array<i32>} : memref<56x64xf32, #tpu.memory_space<vmem>>, vector<8x64xf32>,
    %627 = arith.index_cast %566 : i32 to index
    %c0_165 = arith.constant 0 : index
    %628 = vector.load %arg17[%627, %c0_165] : memref<56x64xf32, #tpu.memory_space<vmem>>, vector<8x64xf32>
    tpu.vector_store %arg17[%627, %c0_165], %624 {strides = array<i32>} : memref<56x64xf32, #tpu.memory_space<vmem>>, vector<8x64xf32>,
    %c2_i32_166 = arith.constant 2 : i32
    %c6_i32_167 = arith.constant 6 : i32
    %629 = arith.subi %c6_i32_167, %c2_i32_166 : i32
    %c8_i32_168 = arith.constant 8 : i32
    %630 = arith.muli %c2_i32_166, %c8_i32_168 : i32
    %631 = tpu.assume_multiple %630, 8 : i32
    %c8_i32_169 = arith.constant 8 : i32
    %632 = arith.muli %629, %c8_i32_169 : i32
    %633 = tpu.assume_multiple %632, 8 : i32
    %634 = arith.index_cast %631 : i32 to index
    %c0_170 = arith.constant 0 : index
    %635 = vector.load %arg15[%634, %c0_170] : memref<56x512xf32, #tpu.memory_space<vmem>>, vector<8x256xf32>
    %636 = arith.index_cast %633 : i32 to index
    %c256_171 = arith.constant 256 : index
    %637 = vector.load %arg15[%636, %c256_171] : memref<56x512xf32, #tpu.memory_space<vmem>>, vector<8x256xf32>
    %cst_172 = arith.constant dense<0.000000e+00> : vector<8x256xf32>
    %638 = tpu.matmul %599, %492, %cst_172 {dimension_numbers = #tpu.dot_dimension_numbers<[1], [0], [0], [1], [0, 0, 1, 1], [], []>} : vector<8x64xf32>, vector<64x256xf32>, vector<8x256xf32> -> vector<8x256xf32>
    %639 = arith.addf %635, %638 : vector<8x256xf32>
    %cst_173 = arith.constant dense<0.000000e+00> : vector<8x256xf32>
    %640 = tpu.matmul %624, %493, %cst_173 {dimension_numbers = #tpu.dot_dimension_numbers<[1], [0], [0], [1], [0, 0, 1, 1], [], []>} : vector<8x64xf32>, vector<64x256xf32>, vector<8x256xf32> -> vector<8x256xf32>
    %641 = arith.addf %637, %640 : vector<8x256xf32>
    %642 = vector.extract_strided_slice %639 {offsets = [0, 0], sizes = [8, 64], strides = [1, 1]} : vector<8x256xf32> to vector<8x64xf32>
    %643 = arith.negf %642 : vector<8x64xf32>
    %644 = math.exp %643 : vector<8x64xf32>
    %cst_174 = arith.constant 1.000000e+00 : f32
    %645 = vector.broadcast %cst_174 : f32 to vector<8x64xf32>
    %646 = arith.addf %645, %644 : vector<8x64xf32>
    %647 = arith.divf %645, %646 : vector<8x64xf32>
    %648 = vector.extract_strided_slice %639 {offsets = [0, 64], sizes = [8, 64], strides = [1, 1]} : vector<8x256xf32> to vector<8x64xf32>
    %649 = arith.negf %648 : vector<8x64xf32>
    %650 = math.exp %649 : vector<8x64xf32>
    %cst_175 = arith.constant 1.000000e+00 : f32
    %651 = vector.broadcast %cst_175 : f32 to vector<8x64xf32>
    %652 = arith.addf %651, %650 : vector<8x64xf32>
    %653 = arith.divf %651, %652 : vector<8x64xf32>
    %654 = vector.extract_strided_slice %639 {offsets = [0, 128], sizes = [8, 64], strides = [1, 1]} : vector<8x256xf32> to vector<8x64xf32>
    %655 = math.tanh %654 : vector<8x64xf32>
    %656 = vector.extract_strided_slice %639 {offsets = [0, 192], sizes = [8, 64], strides = [1, 1]} : vector<8x256xf32> to vector<8x64xf32>
    %657 = arith.negf %656 : vector<8x64xf32>
    %658 = math.exp %657 : vector<8x64xf32>
    %cst_176 = arith.constant 1.000000e+00 : f32
    %659 = vector.broadcast %cst_176 : f32 to vector<8x64xf32>
    %660 = arith.addf %659, %658 : vector<8x64xf32>
    %661 = arith.divf %659, %660 : vector<8x64xf32>
    %662 = arith.mulf %653, %597 : vector<8x64xf32>
    %663 = arith.mulf %647, %655 : vector<8x64xf32>
    %664 = arith.addf %662, %663 : vector<8x64xf32>
    %665 = math.tanh %664 : vector<8x64xf32>
    %666 = arith.mulf %661, %665 : vector<8x64xf32>
    %667 = vector.extract_strided_slice %641 {offsets = [0, 0], sizes = [8, 64], strides = [1, 1]} : vector<8x256xf32> to vector<8x64xf32>
    %668 = arith.negf %667 : vector<8x64xf32>
    %669 = math.exp %668 : vector<8x64xf32>
    %cst_177 = arith.constant 1.000000e+00 : f32
    %670 = vector.broadcast %cst_177 : f32 to vector<8x64xf32>
    %671 = arith.addf %670, %669 : vector<8x64xf32>
    %672 = arith.divf %670, %671 : vector<8x64xf32>
    %673 = vector.extract_strided_slice %641 {offsets = [0, 64], sizes = [8, 64], strides = [1, 1]} : vector<8x256xf32> to vector<8x64xf32>
    %674 = arith.negf %673 : vector<8x64xf32>
    %675 = math.exp %674 : vector<8x64xf32>
    %cst_178 = arith.constant 1.000000e+00 : f32
    %676 = vector.broadcast %cst_178 : f32 to vector<8x64xf32>
    %677 = arith.addf %676, %675 : vector<8x64xf32>
    %678 = arith.divf %676, %677 : vector<8x64xf32>
    %679 = vector.extract_strided_slice %641 {offsets = [0, 128], sizes = [8, 64], strides = [1, 1]} : vector<8x256xf32> to vector<8x64xf32>
    %680 = math.tanh %679 : vector<8x64xf32>
    %681 = vector.extract_strided_slice %641 {offsets = [0, 192], sizes = [8, 64], strides = [1, 1]} : vector<8x256xf32> to vector<8x64xf32>
    %682 = arith.negf %681 : vector<8x64xf32>
    %683 = math.exp %682 : vector<8x64xf32>
    %cst_179 = arith.constant 1.000000e+00 : f32
    %684 = vector.broadcast %cst_179 : f32 to vector<8x64xf32>
    %685 = arith.addf %684, %683 : vector<8x64xf32>
    %686 = arith.divf %684, %685 : vector<8x64xf32>
    %687 = arith.mulf %678, %622 : vector<8x64xf32>
    %688 = arith.mulf %672, %680 : vector<8x64xf32>
    %689 = arith.addf %687, %688 : vector<8x64xf32>
    %690 = math.tanh %689 : vector<8x64xf32>
    %691 = arith.mulf %686, %690 : vector<8x64xf32>
    %692 = arith.index_cast %631 : i32 to index
    %c0_180 = arith.constant 0 : index
    %693 = vector.load %arg16[%692, %c0_180] : memref<56x64xf32, #tpu.memory_space<vmem>>, vector<8x64xf32>
    tpu.vector_store %arg16[%692, %c0_180], %666 {strides = array<i32>} : memref<56x64xf32, #tpu.memory_space<vmem>>, vector<8x64xf32>,
    %694 = arith.index_cast %633 : i32 to index
    %c0_181 = arith.constant 0 : index
    %695 = vector.load %arg17[%694, %c0_181] : memref<56x64xf32, #tpu.memory_space<vmem>>, vector<8x64xf32>
    tpu.vector_store %arg17[%694, %c0_181], %691 {strides = array<i32>} : memref<56x64xf32, #tpu.memory_space<vmem>>, vector<8x64xf32>,
    %c3_i32_182 = arith.constant 3 : i32
    %c6_i32_183 = arith.constant 6 : i32
    %696 = arith.subi %c6_i32_183, %c3_i32_182 : i32
    %c8_i32_184 = arith.constant 8 : i32
    %697 = arith.muli %c3_i32_182, %c8_i32_184 : i32
    %698 = tpu.assume_multiple %697, 8 : i32
    %c8_i32_185 = arith.constant 8 : i32
    %699 = arith.muli %696, %c8_i32_185 : i32
    %700 = tpu.assume_multiple %699, 8 : i32
    %701 = arith.index_cast %698 : i32 to index
    %c0_186 = arith.constant 0 : index
    %702 = vector.load %arg15[%701, %c0_186] : memref<56x512xf32, #tpu.memory_space<vmem>>, vector<8x256xf32>
    %703 = arith.index_cast %700 : i32 to index
    %c256_187 = arith.constant 256 : index
    %704 = vector.load %arg15[%703, %c256_187] : memref<56x512xf32, #tpu.memory_space<vmem>>, vector<8x256xf32>
    %cst_188 = arith.constant dense<0.000000e+00> : vector<8x256xf32>
    %705 = tpu.matmul %666, %492, %cst_188 {dimension_numbers = #tpu.dot_dimension_numbers<[1], [0], [0], [1], [0, 0, 1, 1], [], []>} : vector<8x64xf32>, vector<64x256xf32>, vector<8x256xf32> -> vector<8x256xf32>
    %706 = arith.addf %702, %705 : vector<8x256xf32>
    %cst_189 = arith.constant dense<0.000000e+00> : vector<8x256xf32>
    %707 = tpu.matmul %691, %493, %cst_189 {dimension_numbers = #tpu.dot_dimension_numbers<[1], [0], [0], [1], [0, 0, 1, 1], [], []>} : vector<8x64xf32>, vector<64x256xf32>, vector<8x256xf32> -> vector<8x256xf32>
    %708 = arith.addf %704, %707 : vector<8x256xf32>
    %709 = vector.extract_strided_slice %706 {offsets = [0, 0], sizes = [8, 64], strides = [1, 1]} : vector<8x256xf32> to vector<8x64xf32>
    %710 = arith.negf %709 : vector<8x64xf32>
    %711 = math.exp %710 : vector<8x64xf32>
    %cst_190 = arith.constant 1.000000e+00 : f32
    %712 = vector.broadcast %cst_190 : f32 to vector<8x64xf32>
    %713 = arith.addf %712, %711 : vector<8x64xf32>
    %714 = arith.divf %712, %713 : vector<8x64xf32>
    %715 = vector.extract_strided_slice %706 {offsets = [0, 64], sizes = [8, 64], strides = [1, 1]} : vector<8x256xf32> to vector<8x64xf32>
    %716 = arith.negf %715 : vector<8x64xf32>
    %717 = math.exp %716 : vector<8x64xf32>
    %cst_191 = arith.constant 1.000000e+00 : f32
    %718 = vector.broadcast %cst_191 : f32 to vector<8x64xf32>
    %719 = arith.addf %718, %717 : vector<8x64xf32>
    %720 = arith.divf %718, %719 : vector<8x64xf32>
    %721 = vector.extract_strided_slice %706 {offsets = [0, 128], sizes = [8, 64], strides = [1, 1]} : vector<8x256xf32> to vector<8x64xf32>
    %722 = math.tanh %721 : vector<8x64xf32>
    %723 = vector.extract_strided_slice %706 {offsets = [0, 192], sizes = [8, 64], strides = [1, 1]} : vector<8x256xf32> to vector<8x64xf32>
    %724 = arith.negf %723 : vector<8x64xf32>
    %725 = math.exp %724 : vector<8x64xf32>
    %cst_192 = arith.constant 1.000000e+00 : f32
    %726 = vector.broadcast %cst_192 : f32 to vector<8x64xf32>
    %727 = arith.addf %726, %725 : vector<8x64xf32>
    %728 = arith.divf %726, %727 : vector<8x64xf32>
    %729 = arith.mulf %720, %664 : vector<8x64xf32>
    %730 = arith.mulf %714, %722 : vector<8x64xf32>
    %731 = arith.addf %729, %730 : vector<8x64xf32>
    %732 = math.tanh %731 : vector<8x64xf32>
    %733 = arith.mulf %728, %732 : vector<8x64xf32>
    %734 = vector.extract_strided_slice %708 {offsets = [0, 0], sizes = [8, 64], strides = [1, 1]} : vector<8x256xf32> to vector<8x64xf32>
    %735 = arith.negf %734 : vector<8x64xf32>
    %736 = math.exp %735 : vector<8x64xf32>
    %cst_193 = arith.constant 1.000000e+00 : f32
    %737 = vector.broadcast %cst_193 : f32 to vector<8x64xf32>
    %738 = arith.addf %737, %736 : vector<8x64xf32>
    %739 = arith.divf %737, %738 : vector<8x64xf32>
    %740 = vector.extract_strided_slice %708 {offsets = [0, 64], sizes = [8, 64], strides = [1, 1]} : vector<8x256xf32> to vector<8x64xf32>
    %741 = arith.negf %740 : vector<8x64xf32>
    %742 = math.exp %741 : vector<8x64xf32>
    %cst_194 = arith.constant 1.000000e+00 : f32
    %743 = vector.broadcast %cst_194 : f32 to vector<8x64xf32>
    %744 = arith.addf %743, %742 : vector<8x64xf32>
    %745 = arith.divf %743, %744 : vector<8x64xf32>
    %746 = vector.extract_strided_slice %708 {offsets = [0, 128], sizes = [8, 64], strides = [1, 1]} : vector<8x256xf32> to vector<8x64xf32>
    %747 = math.tanh %746 : vector<8x64xf32>
    %748 = vector.extract_strided_slice %708 {offsets = [0, 192], sizes = [8, 64], strides = [1, 1]} : vector<8x256xf32> to vector<8x64xf32>
    %749 = arith.negf %748 : vector<8x64xf32>
    %750 = math.exp %749 : vector<8x64xf32>
    %cst_195 = arith.constant 1.000000e+00 : f32
    %751 = vector.broadcast %cst_195 : f32 to vector<8x64xf32>
    %752 = arith.addf %751, %750 : vector<8x64xf32>
    %753 = arith.divf %751, %752 : vector<8x64xf32>
    %754 = arith.mulf %745, %689 : vector<8x64xf32>
    %755 = arith.mulf %739, %747 : vector<8x64xf32>
    %756 = arith.addf %754, %755 : vector<8x64xf32>
    %757 = math.tanh %756 : vector<8x64xf32>
    %758 = arith.mulf %753, %757 : vector<8x64xf32>
    %759 = arith.index_cast %698 : i32 to index
    %c0_196 = arith.constant 0 : index
    %760 = vector.load %arg16[%759, %c0_196] : memref<56x64xf32, #tpu.memory_space<vmem>>, vector<8x64xf32>
    tpu.vector_store %arg16[%759, %c0_196], %733 {strides = array<i32>} : memref<56x64xf32, #tpu.memory_space<vmem>>, vector<8x64xf32>,
    %761 = arith.index_cast %700 : i32 to index
    %c0_197 = arith.constant 0 : index
    %762 = vector.load %arg17[%761, %c0_197] : memref<56x64xf32, #tpu.memory_space<vmem>>, vector<8x64xf32>
    tpu.vector_store %arg17[%761, %c0_197], %758 {strides = array<i32>} : memref<56x64xf32, #tpu.memory_space<vmem>>, vector<8x64xf32>,
    %c4_i32_198 = arith.constant 4 : i32
    %c6_i32_199 = arith.constant 6 : i32
    %763 = arith.subi %c6_i32_199, %c4_i32_198 : i32
    %c8_i32_200 = arith.constant 8 : i32
    %764 = arith.muli %c4_i32_198, %c8_i32_200 : i32
    %765 = tpu.assume_multiple %764, 8 : i32
    %c8_i32_201 = arith.constant 8 : i32
    %766 = arith.muli %763, %c8_i32_201 : i32
    %767 = tpu.assume_multiple %766, 8 : i32
    %768 = arith.index_cast %765 : i32 to index
    %c0_202 = arith.constant 0 : index
    %769 = vector.load %arg15[%768, %c0_202] : memref<56x512xf32, #tpu.memory_space<vmem>>, vector<8x256xf32>
    %770 = arith.index_cast %767 : i32 to index
    %c256_203 = arith.constant 256 : index
    %771 = vector.load %arg15[%770, %c256_203] : memref<56x512xf32, #tpu.memory_space<vmem>>, vector<8x256xf32>
    %cst_204 = arith.constant dense<0.000000e+00> : vector<8x256xf32>
    %772 = tpu.matmul %733, %492, %cst_204 {dimension_numbers = #tpu.dot_dimension_numbers<[1], [0], [0], [1], [0, 0, 1, 1], [], []>} : vector<8x64xf32>, vector<64x256xf32>, vector<8x256xf32> -> vector<8x256xf32>
    %773 = arith.addf %769, %772 : vector<8x256xf32>
    %cst_205 = arith.constant dense<0.000000e+00> : vector<8x256xf32>
    %774 = tpu.matmul %758, %493, %cst_205 {dimension_numbers = #tpu.dot_dimension_numbers<[1], [0], [0], [1], [0, 0, 1, 1], [], []>} : vector<8x64xf32>, vector<64x256xf32>, vector<8x256xf32> -> vector<8x256xf32>
    %775 = arith.addf %771, %774 : vector<8x256xf32>
    %776 = vector.extract_strided_slice %773 {offsets = [0, 0], sizes = [8, 64], strides = [1, 1]} : vector<8x256xf32> to vector<8x64xf32>
    %777 = arith.negf %776 : vector<8x64xf32>
    %778 = math.exp %777 : vector<8x64xf32>
    %cst_206 = arith.constant 1.000000e+00 : f32
    %779 = vector.broadcast %cst_206 : f32 to vector<8x64xf32>
    %780 = arith.addf %779, %778 : vector<8x64xf32>
    %781 = arith.divf %779, %780 : vector<8x64xf32>
    %782 = vector.extract_strided_slice %773 {offsets = [0, 64], sizes = [8, 64], strides = [1, 1]} : vector<8x256xf32> to vector<8x64xf32>
    %783 = arith.negf %782 : vector<8x64xf32>
    %784 = math.exp %783 : vector<8x64xf32>
    %cst_207 = arith.constant 1.000000e+00 : f32
    %785 = vector.broadcast %cst_207 : f32 to vector<8x64xf32>
    %786 = arith.addf %785, %784 : vector<8x64xf32>
    %787 = arith.divf %785, %786 : vector<8x64xf32>
    %788 = vector.extract_strided_slice %773 {offsets = [0, 128], sizes = [8, 64], strides = [1, 1]} : vector<8x256xf32> to vector<8x64xf32>
    %789 = math.tanh %788 : vector<8x64xf32>
    %790 = vector.extract_strided_slice %773 {offsets = [0, 192], sizes = [8, 64], strides = [1, 1]} : vector<8x256xf32> to vector<8x64xf32>
    %791 = arith.negf %790 : vector<8x64xf32>
    %792 = math.exp %791 : vector<8x64xf32>
    %cst_208 = arith.constant 1.000000e+00 : f32
    %793 = vector.broadcast %cst_208 : f32 to vector<8x64xf32>
    %794 = arith.addf %793, %792 : vector<8x64xf32>
    %795 = arith.divf %793, %794 : vector<8x64xf32>
    %796 = arith.mulf %787, %731 : vector<8x64xf32>
    %797 = arith.mulf %781, %789 : vector<8x64xf32>
    %798 = arith.addf %796, %797 : vector<8x64xf32>
    %799 = math.tanh %798 : vector<8x64xf32>
    %800 = arith.mulf %795, %799 : vector<8x64xf32>
    %801 = vector.extract_strided_slice %775 {offsets = [0, 0], sizes = [8, 64], strides = [1, 1]} : vector<8x256xf32> to vector<8x64xf32>
    %802 = arith.negf %801 : vector<8x64xf32>
    %803 = math.exp %802 : vector<8x64xf32>
    %cst_209 = arith.constant 1.000000e+00 : f32
    %804 = vector.broadcast %cst_209 : f32 to vector<8x64xf32>
    %805 = arith.addf %804, %803 : vector<8x64xf32>
    %806 = arith.divf %804, %805 : vector<8x64xf32>
    %807 = vector.extract_strided_slice %775 {offsets = [0, 64], sizes = [8, 64], strides = [1, 1]} : vector<8x256xf32> to vector<8x64xf32>
    %808 = arith.negf %807 : vector<8x64xf32>
    %809 = math.exp %808 : vector<8x64xf32>
    %cst_210 = arith.constant 1.000000e+00 : f32
    %810 = vector.broadcast %cst_210 : f32 to vector<8x64xf32>
    %811 = arith.addf %810, %809 : vector<8x64xf32>
    %812 = arith.divf %810, %811 : vector<8x64xf32>
    %813 = vector.extract_strided_slice %775 {offsets = [0, 128], sizes = [8, 64], strides = [1, 1]} : vector<8x256xf32> to vector<8x64xf32>
    %814 = math.tanh %813 : vector<8x64xf32>
    %815 = vector.extract_strided_slice %775 {offsets = [0, 192], sizes = [8, 64], strides = [1, 1]} : vector<8x256xf32> to vector<8x64xf32>
    %816 = arith.negf %815 : vector<8x64xf32>
    %817 = math.exp %816 : vector<8x64xf32>
    %cst_211 = arith.constant 1.000000e+00 : f32
    %818 = vector.broadcast %cst_211 : f32 to vector<8x64xf32>
    %819 = arith.addf %818, %817 : vector<8x64xf32>
    %820 = arith.divf %818, %819 : vector<8x64xf32>
    %821 = arith.mulf %812, %756 : vector<8x64xf32>
    %822 = arith.mulf %806, %814 : vector<8x64xf32>
    %823 = arith.addf %821, %822 : vector<8x64xf32>
    %824 = math.tanh %823 : vector<8x64xf32>
    %825 = arith.mulf %820, %824 : vector<8x64xf32>
    %826 = arith.index_cast %765 : i32 to index
    %c0_212 = arith.constant 0 : index
    %827 = vector.load %arg16[%826, %c0_212] : memref<56x64xf32, #tpu.memory_space<vmem>>, vector<8x64xf32>
    tpu.vector_store %arg16[%826, %c0_212], %800 {strides = array<i32>} : memref<56x64xf32, #tpu.memory_space<vmem>>, vector<8x64xf32>,
    %828 = arith.index_cast %767 : i32 to index
    %c0_213 = arith.constant 0 : index
    %829 = vector.load %arg17[%828, %c0_213] : memref<56x64xf32, #tpu.memory_space<vmem>>, vector<8x64xf32>
    tpu.vector_store %arg17[%828, %c0_213], %825 {strides = array<i32>} : memref<56x64xf32, #tpu.memory_space<vmem>>, vector<8x64xf32>,
    %c5_i32_214 = arith.constant 5 : i32
    %c6_i32_215 = arith.constant 6 : i32
    %830 = arith.subi %c6_i32_215, %c5_i32_214 : i32
    %c8_i32_216 = arith.constant 8 : i32
    %831 = arith.muli %c5_i32_214, %c8_i32_216 : i32
    %832 = tpu.assume_multiple %831, 8 : i32
    %c8_i32_217 = arith.constant 8 : i32
    %833 = arith.muli %830, %c8_i32_217 : i32
    %834 = tpu.assume_multiple %833, 8 : i32
    %835 = arith.index_cast %832 : i32 to index
    %c0_218 = arith.constant 0 : index
    %836 = vector.load %arg15[%835, %c0_218] : memref<56x512xf32, #tpu.memory_space<vmem>>, vector<8x256xf32>
    %837 = arith.index_cast %834 : i32 to index
    %c256_219 = arith.constant 256 : index
    %838 = vector.load %arg15[%837, %c256_219] : memref<56x512xf32, #tpu.memory_space<vmem>>, vector<8x256xf32>
    %cst_220 = arith.constant dense<0.000000e+00> : vector<8x256xf32>
    %839 = tpu.matmul %800, %492, %cst_220 {dimension_numbers = #tpu.dot_dimension_numbers<[1], [0], [0], [1], [0, 0, 1, 1], [], []>} : vector<8x64xf32>, vector<64x256xf32>, vector<8x256xf32> -> vector<8x256xf32>
    %840 = arith.addf %836, %839 : vector<8x256xf32>
    %cst_221 = arith.constant dense<0.000000e+00> : vector<8x256xf32>
    %841 = tpu.matmul %825, %493, %cst_221 {dimension_numbers = #tpu.dot_dimension_numbers<[1], [0], [0], [1], [0, 0, 1, 1], [], []>} : vector<8x64xf32>, vector<64x256xf32>, vector<8x256xf32> -> vector<8x256xf32>
    %842 = arith.addf %838, %841 : vector<8x256xf32>
    %843 = vector.extract_strided_slice %840 {offsets = [0, 0], sizes = [8, 64], strides = [1, 1]} : vector<8x256xf32> to vector<8x64xf32>
    %844 = arith.negf %843 : vector<8x64xf32>
    %845 = math.exp %844 : vector<8x64xf32>
    %cst_222 = arith.constant 1.000000e+00 : f32
    %846 = vector.broadcast %cst_222 : f32 to vector<8x64xf32>
    %847 = arith.addf %846, %845 : vector<8x64xf32>
    %848 = arith.divf %846, %847 : vector<8x64xf32>
    %849 = vector.extract_strided_slice %840 {offsets = [0, 64], sizes = [8, 64], strides = [1, 1]} : vector<8x256xf32> to vector<8x64xf32>
    %850 = arith.negf %849 : vector<8x64xf32>
    %851 = math.exp %850 : vector<8x64xf32>
    %cst_223 = arith.constant 1.000000e+00 : f32
    %852 = vector.broadcast %cst_223 : f32 to vector<8x64xf32>
    %853 = arith.addf %852, %851 : vector<8x64xf32>
    %854 = arith.divf %852, %853 : vector<8x64xf32>
    %855 = vector.extract_strided_slice %840 {offsets = [0, 128], sizes = [8, 64], strides = [1, 1]} : vector<8x256xf32> to vector<8x64xf32>
    %856 = math.tanh %855 : vector<8x64xf32>
    %857 = vector.extract_strided_slice %840 {offsets = [0, 192], sizes = [8, 64], strides = [1, 1]} : vector<8x256xf32> to vector<8x64xf32>
    %858 = arith.negf %857 : vector<8x64xf32>
    %859 = math.exp %858 : vector<8x64xf32>
    %cst_224 = arith.constant 1.000000e+00 : f32
    %860 = vector.broadcast %cst_224 : f32 to vector<8x64xf32>
    %861 = arith.addf %860, %859 : vector<8x64xf32>
    %862 = arith.divf %860, %861 : vector<8x64xf32>
    %863 = arith.mulf %854, %798 : vector<8x64xf32>
    %864 = arith.mulf %848, %856 : vector<8x64xf32>
    %865 = arith.addf %863, %864 : vector<8x64xf32>
    %866 = math.tanh %865 : vector<8x64xf32>
    %867 = arith.mulf %862, %866 : vector<8x64xf32>
    %868 = vector.extract_strided_slice %842 {offsets = [0, 0], sizes = [8, 64], strides = [1, 1]} : vector<8x256xf32> to vector<8x64xf32>
    %869 = arith.negf %868 : vector<8x64xf32>
    %870 = math.exp %869 : vector<8x64xf32>
    %cst_225 = arith.constant 1.000000e+00 : f32
    %871 = vector.broadcast %cst_225 : f32 to vector<8x64xf32>
    %872 = arith.addf %871, %870 : vector<8x64xf32>
    %873 = arith.divf %871, %872 : vector<8x64xf32>
    %874 = vector.extract_strided_slice %842 {offsets = [0, 64], sizes = [8, 64], strides = [1, 1]} : vector<8x256xf32> to vector<8x64xf32>
    %875 = arith.negf %874 : vector<8x64xf32>
    %876 = math.exp %875 : vector<8x64xf32>
    %cst_226 = arith.constant 1.000000e+00 : f32
    %877 = vector.broadcast %cst_226 : f32 to vector<8x64xf32>
    %878 = arith.addf %877, %876 : vector<8x64xf32>
    %879 = arith.divf %877, %878 : vector<8x64xf32>
    %880 = vector.extract_strided_slice %842 {offsets = [0, 128], sizes = [8, 64], strides = [1, 1]} : vector<8x256xf32> to vector<8x64xf32>
    %881 = math.tanh %880 : vector<8x64xf32>
    %882 = vector.extract_strided_slice %842 {offsets = [0, 192], sizes = [8, 64], strides = [1, 1]} : vector<8x256xf32> to vector<8x64xf32>
    %883 = arith.negf %882 : vector<8x64xf32>
    %884 = math.exp %883 : vector<8x64xf32>
    %cst_227 = arith.constant 1.000000e+00 : f32
    %885 = vector.broadcast %cst_227 : f32 to vector<8x64xf32>
    %886 = arith.addf %885, %884 : vector<8x64xf32>
    %887 = arith.divf %885, %886 : vector<8x64xf32>
    %888 = arith.mulf %879, %823 : vector<8x64xf32>
    %889 = arith.mulf %873, %881 : vector<8x64xf32>
    %890 = arith.addf %888, %889 : vector<8x64xf32>
    %891 = math.tanh %890 : vector<8x64xf32>
    %892 = arith.mulf %887, %891 : vector<8x64xf32>
    %893 = arith.index_cast %832 : i32 to index
    %c0_228 = arith.constant 0 : index
    %894 = vector.load %arg16[%893, %c0_228] : memref<56x64xf32, #tpu.memory_space<vmem>>, vector<8x64xf32>
    tpu.vector_store %arg16[%893, %c0_228], %867 {strides = array<i32>} : memref<56x64xf32, #tpu.memory_space<vmem>>, vector<8x64xf32>,
    %895 = arith.index_cast %834 : i32 to index
    %c0_229 = arith.constant 0 : index
    %896 = vector.load %arg17[%895, %c0_229] : memref<56x64xf32, #tpu.memory_space<vmem>>, vector<8x64xf32>
    tpu.vector_store %arg17[%895, %c0_229], %892 {strides = array<i32>} : memref<56x64xf32, #tpu.memory_space<vmem>>, vector<8x64xf32>,
    %c6_i32_230 = arith.constant 6 : i32
    %c6_i32_231 = arith.constant 6 : i32
    %897 = arith.subi %c6_i32_231, %c6_i32_230 : i32
    %c8_i32_232 = arith.constant 8 : i32
    %898 = arith.muli %c6_i32_230, %c8_i32_232 : i32
    %899 = tpu.assume_multiple %898, 8 : i32
    %c8_i32_233 = arith.constant 8 : i32
    %900 = arith.muli %897, %c8_i32_233 : i32
    %901 = tpu.assume_multiple %900, 8 : i32
    %902 = arith.index_cast %899 : i32 to index
    %c0_234 = arith.constant 0 : index
    %903 = vector.load %arg15[%902, %c0_234] : memref<56x512xf32, #tpu.memory_space<vmem>>, vector<8x256xf32>
    %904 = arith.index_cast %901 : i32 to index
    %c256_235 = arith.constant 256 : index
    %905 = vector.load %arg15[%904, %c256_235] : memref<56x512xf32, #tpu.memory_space<vmem>>, vector<8x256xf32>
    %cst_236 = arith.constant dense<0.000000e+00> : vector<8x256xf32>
    %906 = tpu.matmul %867, %492, %cst_236 {dimension_numbers = #tpu.dot_dimension_numbers<[1], [0], [0], [1], [0, 0, 1, 1], [], []>} : vector<8x64xf32>, vector<64x256xf32>, vector<8x256xf32> -> vector<8x256xf32>
    %907 = arith.addf %903, %906 : vector<8x256xf32>
    %cst_237 = arith.constant dense<0.000000e+00> : vector<8x256xf32>
    %908 = tpu.matmul %892, %493, %cst_237 {dimension_numbers = #tpu.dot_dimension_numbers<[1], [0], [0], [1], [0, 0, 1, 1], [], []>} : vector<8x64xf32>, vector<64x256xf32>, vector<8x256xf32> -> vector<8x256xf32>
    %909 = arith.addf %905, %908 : vector<8x256xf32>
    %910 = vector.extract_strided_slice %907 {offsets = [0, 0], sizes = [8, 64], strides = [1, 1]} : vector<8x256xf32> to vector<8x64xf32>
    %911 = arith.negf %910 : vector<8x64xf32>
    %912 = math.exp %911 : vector<8x64xf32>
    %cst_238 = arith.constant 1.000000e+00 : f32
    %913 = vector.broadcast %cst_238 : f32 to vector<8x64xf32>
    %914 = arith.addf %913, %912 : vector<8x64xf32>
    %915 = arith.divf %913, %914 : vector<8x64xf32>
    %916 = vector.extract_strided_slice %907 {offsets = [0, 64], sizes = [8, 64], strides = [1, 1]} : vector<8x256xf32> to vector<8x64xf32>
    %917 = arith.negf %916 : vector<8x64xf32>
    %918 = math.exp %917 : vector<8x64xf32>
    %cst_239 = arith.constant 1.000000e+00 : f32
    %919 = vector.broadcast %cst_239 : f32 to vector<8x64xf32>
    %920 = arith.addf %919, %918 : vector<8x64xf32>
    %921 = arith.divf %919, %920 : vector<8x64xf32>
    %922 = vector.extract_strided_slice %907 {offsets = [0, 128], sizes = [8, 64], strides = [1, 1]} : vector<8x256xf32> to vector<8x64xf32>
    %923 = math.tanh %922 : vector<8x64xf32>
    %924 = vector.extract_strided_slice %907 {offsets = [0, 192], sizes = [8, 64], strides = [1, 1]} : vector<8x256xf32> to vector<8x64xf32>
    %925 = arith.negf %924 : vector<8x64xf32>
    %926 = math.exp %925 : vector<8x64xf32>
    %cst_240 = arith.constant 1.000000e+00 : f32
    %927 = vector.broadcast %cst_240 : f32 to vector<8x64xf32>
    %928 = arith.addf %927, %926 : vector<8x64xf32>
    %929 = arith.divf %927, %928 : vector<8x64xf32>
    %930 = arith.mulf %921, %865 : vector<8x64xf32>
    %931 = arith.mulf %915, %923 : vector<8x64xf32>
    %932 = arith.addf %930, %931 : vector<8x64xf32>
    %933 = math.tanh %932 : vector<8x64xf32>
    %934 = arith.mulf %929, %933 : vector<8x64xf32>
    %935 = vector.extract_strided_slice %909 {offsets = [0, 0], sizes = [8, 64], strides = [1, 1]} : vector<8x256xf32> to vector<8x64xf32>
    %936 = arith.negf %935 : vector<8x64xf32>
    %937 = math.exp %936 : vector<8x64xf32>
    %cst_241 = arith.constant 1.000000e+00 : f32
    %938 = vector.broadcast %cst_241 : f32 to vector<8x64xf32>
    %939 = arith.addf %938, %937 : vector<8x64xf32>
    %940 = arith.divf %938, %939 : vector<8x64xf32>
    %941 = vector.extract_strided_slice %909 {offsets = [0, 64], sizes = [8, 64], strides = [1, 1]} : vector<8x256xf32> to vector<8x64xf32>
    %942 = arith.negf %941 : vector<8x64xf32>
    %943 = math.exp %942 : vector<8x64xf32>
    %cst_242 = arith.constant 1.000000e+00 : f32
    %944 = vector.broadcast %cst_242 : f32 to vector<8x64xf32>
    %945 = arith.addf %944, %943 : vector<8x64xf32>
    %946 = arith.divf %944, %945 : vector<8x64xf32>
    %947 = vector.extract_strided_slice %909 {offsets = [0, 128], sizes = [8, 64], strides = [1, 1]} : vector<8x256xf32> to vector<8x64xf32>
    %948 = math.tanh %947 : vector<8x64xf32>
    %949 = vector.extract_strided_slice %909 {offsets = [0, 192], sizes = [8, 64], strides = [1, 1]} : vector<8x256xf32> to vector<8x64xf32>
    %950 = arith.negf %949 : vector<8x64xf32>
    %951 = math.exp %950 : vector<8x64xf32>
    %cst_243 = arith.constant 1.000000e+00 : f32
    %952 = vector.broadcast %cst_243 : f32 to vector<8x64xf32>
    %953 = arith.addf %952, %951 : vector<8x64xf32>
    %954 = arith.divf %952, %953 : vector<8x64xf32>
    %955 = arith.mulf %946, %890 : vector<8x64xf32>
    %956 = arith.mulf %940, %948 : vector<8x64xf32>
    %957 = arith.addf %955, %956 : vector<8x64xf32>
    %958 = math.tanh %957 : vector<8x64xf32>
    %959 = arith.mulf %954, %958 : vector<8x64xf32>
    %960 = arith.index_cast %899 : i32 to index
    %c0_244 = arith.constant 0 : index
    %961 = vector.load %arg16[%960, %c0_244] : memref<56x64xf32, #tpu.memory_space<vmem>>, vector<8x64xf32>
    tpu.vector_store %arg16[%960, %c0_244], %934 {strides = array<i32>} : memref<56x64xf32, #tpu.memory_space<vmem>>, vector<8x64xf32>,
    %962 = arith.index_cast %901 : i32 to index
    %c0_245 = arith.constant 0 : index
    %963 = vector.load %arg17[%962, %c0_245] : memref<56x64xf32, #tpu.memory_space<vmem>>, vector<8x64xf32>
    tpu.vector_store %arg17[%962, %c0_245], %959 {strides = array<i32>} : memref<56x64xf32, #tpu.memory_space<vmem>>, vector<8x64xf32>,
    %c7_i32_246 = arith.constant 7 : i32
    %c0_247 = arith.constant 0 : index
    %c0_248 = arith.constant 0 : index
    %964 = vector.load %arg16[%c0_247, %c0_248] : memref<56x64xf32, #tpu.memory_space<vmem>>, vector<56x64xf32>
    %965 = arith.truncf %964 : vector<56x64xf32> to vector<56x64xbf16>
    %c0_249 = arith.constant 0 : index
    %c0_250 = arith.constant 0 : index
    %966 = vector.load %arg17[%c0_249, %c0_250] : memref<56x64xf32, #tpu.memory_space<vmem>>, vector<56x64xf32>
    %967 = arith.truncf %966 : vector<56x64xf32> to vector<56x64xbf16>
    %c0_251 = arith.constant 0 : index
    %c0_252 = arith.constant 0 : index
    %968 = vector.load %arg11[%c0_251, %c0_252] : memref<64x128xbf16, #tpu.memory_space<vmem>>, vector<64x128xbf16>
    %cst_253 = arith.constant dense<0.000000e+00> : vector<56x128xf32>
    %969 = tpu.matmul %965, %968, %cst_253 {dimension_numbers = #tpu.dot_dimension_numbers<[1], [0], [0], [1], [0, 0, 1, 1], [], []>} : vector<56x64xbf16>, vector<64x128xbf16>, vector<56x128xf32> -> vector<56x128xf32>
    %c0_254 = arith.constant 0 : index
    %c0_255 = arith.constant 0 : index
    %970 = vector.load %arg12[%c0_254, %c0_255] : memref<64x128xbf16, #tpu.memory_space<vmem>>, vector<64x128xbf16>
    %cst_256 = arith.constant dense<0.000000e+00> : vector<56x128xf32>
    %971 = tpu.matmul %967, %970, %cst_256 {dimension_numbers = #tpu.dot_dimension_numbers<[1], [0], [0], [1], [0, 0, 1, 1], [], []>} : vector<56x64xbf16>, vector<64x128xbf16>, vector<56x128xf32> -> vector<56x128xf32>
    %972 = arith.addf %969, %971 : vector<56x128xf32>
    %c0_257 = arith.constant 0 : index
    %c0_258 = arith.constant 0 : index
    %973 = vector.load %arg13[%c0_257, %c0_258] : memref<1x128xf32, #tpu.memory_space<vmem>>, vector<1x128xf32>
    %974 = vector.broadcast %973 : vector<1x128xf32> to vector<56x128xf32>
    %975 = arith.addf %972, %974 : vector<56x128xf32>
    %c0_259 = arith.constant 0 : index
    %c0_260 = arith.constant 0 : index
    %976 = vector.load %arg14[%c0_259, %c0_260] : memref<56x128xf32, #tpu.memory_space<vmem>>, vector<56x128xf32>
    tpu.vector_store %arg14[%c0_259, %c0_260], %975 {strides = array<i32>} : memref<56x128xf32, #tpu.memory_space<vmem>>, vector<56x128xf32>,
    return
  }
  func.func @transform_0(%arg0: i32) -> (i32, i32) {
    %c0_i32 = arith.constant 0 : i32
    %c0_i32_0 = arith.constant 0 : i32
    return %arg0, %c0_i32 : i32, i32
  }
  func.func @transform_1(%arg0: i32) -> (i32, i32) {
    %c0_i32 = arith.constant 0 : i32
    %c0_i32_0 = arith.constant 0 : i32
    %c0_i32_1 = arith.constant 0 : i32
    return %c0_i32, %c0_i32_0 : i32, i32
  }
  func.func @transform_2(%arg0: i32) -> (i32, i32) {
    %c0_i32 = arith.constant 0 : i32
    %c0_i32_0 = arith.constant 0 : i32
    %c0_i32_1 = arith.constant 0 : i32
    return %c0_i32, %c0_i32_0 : i32, i32
  }
  func.func @transform_3(%arg0: i32) -> (i32, i32) {
    %c0_i32 = arith.constant 0 : i32
    %c0_i32_0 = arith.constant 0 : i32
    %c0_i32_1 = arith.constant 0 : i32
    return %c0_i32, %c0_i32_0 : i32, i32
  }
  func.func @transform_4(%arg0: i32) -> (i32, i32) {
    %c0_i32 = arith.constant 0 : i32
    %c0_i32_0 = arith.constant 0 : i32
    %c0_i32_1 = arith.constant 0 : i32
    return %c0_i32, %c0_i32_0 : i32, i32
  }
  func.func @transform_5(%arg0: i32) -> (i32, i32) {
    %c0_i32 = arith.constant 0 : i32
    %c0_i32_0 = arith.constant 0 : i32
    %c0_i32_1 = arith.constant 0 : i32
    return %c0_i32, %c0_i32_0 : i32, i32
  }
  func.func @transform_6(%arg0: i32) -> (i32, i32) {
    %c0_i32 = arith.constant 0 : i32
    %c0_i32_0 = arith.constant 0 : i32
    %c0_i32_1 = arith.constant 0 : i32
    return %c0_i32, %c0_i32_0 : i32, i32
  }
  func.func @transform_7(%arg0: i32) -> (i32, i32) {
    %c0_i32 = arith.constant 0 : i32
    %c0_i32_0 = arith.constant 0 : i32
    %c0_i32_1 = arith.constant 0 : i32
    return %c0_i32, %c0_i32_0 : i32, i32
  }
  func.func @transform_8(%arg0: i32) -> (i32, i32) {
    %c0_i32 = arith.constant 0 : i32
    %c0_i32_0 = arith.constant 0 : i32
    %c0_i32_1 = arith.constant 0 : i32
    return %c0_i32, %c0_i32_0 : i32, i32
  }
  func.func @transform_9(%arg0: i32) -> (i32, i32) {
    %c0_i32 = arith.constant 0 : i32
    %c0_i32_0 = arith.constant 0 : i32
    %c0_i32_1 = arith.constant 0 : i32
    return %c0_i32, %c0_i32_0 : i32, i32
  }
  func.func @transform_10(%arg0: i32) -> (i32, i32) {
    %c0_i32 = arith.constant 0 : i32
    %c0_i32_0 = arith.constant 0 : i32
    %c0_i32_1 = arith.constant 0 : i32
    return %c0_i32, %c0_i32_0 : i32, i32
  }
  func.func @transform_11(%arg0: i32) -> (i32, i32) {
    %c0_i32 = arith.constant 0 : i32
    %c0_i32_0 = arith.constant 0 : i32
    %c0_i32_1 = arith.constant 0 : i32
    return %c0_i32, %c0_i32_0 : i32, i32
  }
  func.func @transform_12(%arg0: i32) -> (i32, i32) {
    %c0_i32 = arith.constant 0 : i32
    %c0_i32_0 = arith.constant 0 : i32
    %c0_i32_1 = arith.constant 0 : i32
    return %c0_i32, %c0_i32_0 : i32, i32
  }
  func.func @transform_13(%arg0: i32) -> (i32, i32) {
    %c0_i32 = arith.constant 0 : i32
    %c0_i32_0 = arith.constant 0 : i32
    return %arg0, %c0_i32 : i32, i32
  }
}

</mosaic_0001>

<llo_original>
// kernel: tpu_custom_call.1
$region0: #{tpu_custom_call.1}
  #allocation0 [shape = 'u32[]', space=smem, size = 0x4, offset = 0x4, fixed_abs, tag = 'smem constant byte address 0x4 - core index']
  #allocation1 [shape = 'u32[72,128]{1,0:T(1,128)}', space=vmem, size = 0x9000, scoped, tag = 'internal scratch']
  #allocation2 [shape = 'f32[56,512]{1,0:T(8,128)}', space=vmem, size = 0x1c000, scoped, tag = 'scratch operand']
  #allocation3 [shape = 'f32[56,64]{1,0:T(8,128)}', space=vmem, size = 0x7000, scoped, tag = 'scratch operand']
  #allocation4 [shape = 'f32[56,64]{1,0:T(8,128)}', space=vmem, size = 0x7000, scoped, tag = 'scratch operand']
  %s0 = inlined_call_operand.vmem [shape: bf16[112,64], index: 0, kind: input, shape index: {}]
  %s1 = inlined_call_operand.hbm [shape: bf16[64,512], index: 1, kind: input, shape index: {}]
  %s2 = inlined_call_operand.vmem [shape: f32[1,512], index: 2, kind: input, shape index: {}]
  %s3 = inlined_call_operand.hbm [shape: f32[64,256], index: 3, kind: input, shape index: {}]
  %s4 = inlined_call_operand.hbm [shape: f32[64,256], index: 4, kind: input, shape index: {}]
  %s5 = inlined_call_operand.hbm [shape: bf16[64,512], index: 5, kind: input, shape index: {}]
  %s6 = inlined_call_operand.hbm [shape: bf16[64,512], index: 6, kind: input, shape index: {}]
  %s7 = inlined_call_operand.vmem [shape: f32[1,512], index: 7, kind: input, shape index: {}]
  %s8 = inlined_call_operand.hbm [shape: f32[64,256], index: 8, kind: input, shape index: {}]
  %s9 = inlined_call_operand.hbm [shape: f32[64,256], index: 9, kind: input, shape index: {}]
  %s10 = inlined_call_operand.vmem [shape: bf16[64,128], index: 10, kind: input, shape index: {}]
  %s11 = inlined_call_operand.vmem [shape: bf16[64,128], index: 11, kind: input, shape index: {}]
  %s12 = inlined_call_operand.vmem [shape: f32[1,128], index: 12, kind: input, shape index: {}]
  %s13 = inlined_call_operand.hbm [shape: f32[112,128], index: 13, kind: output, shape index: {}]
  %s14 = sld [smem:[#allocation0]]
  $region113: #{tpu_custom_call.1} parent=0
    _
  %s16 = ssub.s32 1, %s14
  %s17 = scalar_select 0, %s16, %s14
  $region1: #{tpu_custom_call.1} parent=0
    #allocation5 [shape = 'u8[65536]{0}', space=vmem, size = 0x10000, scoped, tag = 'input window, operand 1, single buffered']
    #allocation6 [shape = 's32[2]{0}', space=sflag, size = 0x8, scoped, tag = 'scoped memory for tpu_custom_call.1']
    #allocation7 [shape = 's32[2]{0}', space=sflag, size = 0x8, scoped, tag = 'scoped memory for tpu_custom_call.1']
    #allocation8 [shape = 'u8[65536]{0}', space=vmem, size = 0x10000, scoped, tag = 'input window, operand 3, single buffered']
    #allocation9 [shape = 's32[1]{0}', space=sflag, size = 0x4, scoped, tag = 'scoped memory for tpu_custom_call.1']
    #allocation10 [shape = 'u8[65536]{0}', space=vmem, size = 0x10000, scoped, tag = 'input window, operand 4, single buffered']
    #allocation11 [shape = 'u8[65536]{0}', space=vmem, size = 0x10000, scoped, tag = 'input window, operand 5, single buffered']
    #allocation12 [shape = 's32[1]{0}', space=sflag, size = 0x4, scoped, tag = 'scoped memory for tpu_custom_call.1']
    #allocation13 [shape = 'u8[65536]{0}', space=vmem, size = 0x10000, scoped, tag = 'input window, operand 6, single buffered']
    #allocation14 [shape = 'u8[65536]{0}', space=vmem, size = 0x10000, scoped, tag = 'input window, operand 8, single buffered']
    #allocation15 [shape = 's32[1]{0}', space=sflag, size = 0x4, scoped, tag = 'scoped memory for tpu_custom_call.1']
    #allocation16 [shape = 'u8[65536]{0}', space=vmem, size = 0x10000, scoped, tag = 'input window, operand 9, single buffered']
    #allocation17 [shape = 'u8[57344]{0}', space=vmem, size = 0xe000, scoped, tag = 'output window, operand 0']
    %18 = vsyncpa [#allocation6], 0
    %19 = vsyncpa [#allocation9], 0
    %20 = vsyncpa [#allocation12], 0
    %21 = vsyncpa [#allocation15], 0
    %22 = vsyncpa [#allocation7], 0
    %s23 = scalar_lea.sflag [#allocation7], 1
    %24 = vsyncpa %s23, 0
    loop: start=0, step=1, limit=4
    $region2: #{tpu_custom_call.1} parent=1 // loop_pre_header
      _
    $region3: #{tpu_custom_call.1} parent=1 // loop_header
      %s26 = sphi 0, %s30
      %p27 = scmp.ge.s32.totalorder %s26, 4
      %s36 = sphi 0, %s38
      %s39 = sphi 0, %s36
      %s40 = sphi 0, %s39
      %s56 = sphi 0, %s40
      %s60 = sphi 0, %s60
      %s62 = sphi 0, %s60
      %s63 = sphi 0, %s62
      %s77 = sphi 0, %s63
      %s81 = sphi 0, %s81
      %s83 = sphi 0, %s81
      %s84 = sphi 0, %s83
      %s98 = sphi 0, %s84
      %s102 = sphi 0, %s102
      %s104 = sphi 0, %s102
      %s105 = sphi 0, %s104
      %s119 = sphi 0, %s105
      %s123 = sphi 0, %s123
      %s125 = sphi 0, %s123
      %s126 = sphi 0, %s125
      %s140 = sphi 0, %s126
      %s144 = sphi 0, %s144
      %s146 = sphi 0, %s144
      %s147 = sphi 0, %s146
      %s161 = sphi 0, %s147
      %s165 = sphi 0, %s165
      %s167 = sphi 0, %s165
      %s168 = sphi 0, %s167
      %s182 = sphi 0, %s168
      %s186 = sphi 0, %s186
      %s188 = sphi 0, %s186
      %s189 = sphi 0, %s188
      %s203 = sphi 0, %s189
      %s207 = sphi 0, %s207
      %s209 = sphi 0, %s207
      %s210 = sphi 0, %s209
      %s224 = sphi 0, %s210
      %s228 = sphi 0, %s228
      %s230 = sphi 0, %s228
      %s231 = sphi 0, %s230
      %s245 = sphi 0, %s231
      %s249 = sphi 0, %s249
      %s251 = sphi 0, %s249
      %s252 = sphi 0, %s251
      %s266 = sphi 0, %s252
      %s270 = sphi 0, %s270
      %s272 = sphi 0, %s270
      %s273 = sphi 0, %s272
      %s287 = sphi 0, %s273
      %s291 = sphi 0, %s291
      %s293 = sphi 0, %s291
      %s294 = sphi 0, %s293
      %s308 = sphi 0, %s294
      %s314 = sphi 0, %s316
      %s317 = sphi 0, %s314
      %s318 = sphi 0, %s317
      %s334 = sphi 0, %s318
    $region4: #{tpu_custom_call.1} parent=1 // loop_header_branch
      %29 = sbr.rel (%p27) target = $region8
    $region5: #{tpu_custom_call.1} parent=1 // loop_body
      %s31 = ssub.s32 %s26, 1
      %s32 = ssub.s32 %s26, 2
      %s33 = sadd.s32 %s26, 1
      %s34 = ssub.s32 %s26, %s33
      %p35 = scmp.eq.s32.totalorder %s34, 0
      %s37 = sadd.s32 %s36, 1
      %s38 = scalar_select %p35, %s36, %s37
      %p41 = pneg %p35
      %p42 = scmp.eq.s32.totalorder %s26, 1
      %p43 = por %p41, %p42
      %p44 = scmp.ne.s32.totalorder %s36, %s39
      %p45 = scmp.eq.s32.totalorder %s26, 0
      %p46 = por %p44, %p45
      %p47 = scmp.ne.s32.totalorder %s36, %s39
      %p48 = scmp.eq.s32.totalorder %s31, 1
      %p49 = por %p47, %p48
      %p50 = scmp.ne.s32.totalorder %s39, %s40
      %p51 = scmp.eq.s32.totalorder %s31, 0
      %p52 = por %p50, %p51
      %p53 = scmp.ne.s32.totalorder %s39, %s40
      %p54 = scmp.eq.s32.totalorder %s32, 1
      %p55 = por %p53, %p54
      %p57 = scmp.ne.s32.totalorder %s40, %s56
      %p58 = scmp.eq.s32.totalorder %s32, 0
      %p59 = por %p57, %p58
      %s61 = sadd.s32 %s60, 1
      %p64 = scmp.eq.s32.totalorder %s26, 1
      %p65 = scmp.ne.s32.totalorder %s60, %s62
      %p66 = scmp.eq.s32.totalorder %s26, 0
      %p67 = por %p65, %p66
      %p68 = scmp.ne.s32.totalorder %s60, %s62
      %p69 = scmp.eq.s32.totalorder %s31, 1
      %p70 = por %p68, %p69
      %p71 = scmp.ne.s32.totalorder %s62, %s63
      %p72 = scmp.eq.s32.totalorder %s31, 0
      %p73 = por %p71, %p72
      %p74 = scmp.ne.s32.totalorder %s62, %s63
      %p75 = scmp.eq.s32.totalorder %s32, 1
      %p76 = por %p74, %p75
      %p78 = scmp.ne.s32.totalorder %s63, %s77
      %p79 = scmp.eq.s32.totalorder %s32, 0
      %p80 = por %p78, %p79
      %s82 = sadd.s32 %s81, 1
      %p85 = scmp.eq.s32.totalorder %s26, 1
      %p86 = scmp.ne.s32.totalorder %s81, %s83
      %p87 = scmp.eq.s32.totalorder %s26, 0
      %p88 = por %p86, %p87
      %p89 = scmp.ne.s32.totalorder %s81, %s83
      %p90 = scmp.eq.s32.totalorder %s31, 1
      %p91 = por %p89, %p90
      %p92 = scmp.ne.s32.totalorder %s83, %s84
      %p93 = scmp.eq.s32.totalorder %s31, 0
      %p94 = por %p92, %p93
      %p95 = scmp.ne.s32.totalorder %s83, %s84
      %p96 = scmp.eq.s32.totalorder %s32, 1
      %p97 = por %p95, %p96
      %p99 = scmp.ne.s32.totalorder %s84, %s98
      %p100 = scmp.eq.s32.totalorder %s32, 0
      %p101 = por %p99, %p100
      %s103 = sadd.s32 %s102, 1
      %p106 = scmp.eq.s32.totalorder %s26, 1
      %p107 = scmp.ne.s32.totalorder %s102, %s104
      %p108 = scmp.eq.s32.totalorder %s26, 0
      %p109 = por %p107, %p108
      %p110 = scmp.ne.s32.totalorder %s102, %s104
      %p111 = scmp.eq.s32.totalorder %s31, 1
      %p112 = por %p110, %p111
      %p113 = scmp.ne.s32.totalorder %s104, %s105
      %p114 = scmp.eq.s32.totalorder %s31, 0
      %p115 = por %p113, %p114
      %p116 = scmp.ne.s32.totalorder %s104, %s105
      %p117 = scmp.eq.s32.totalorder %s32, 1
      %p118 = por %p116, %p117
      %p120 = scmp.ne.s32.totalorder %s105, %s119
      %p121 = scmp.eq.s32.totalorder %s32, 0
      %p122 = por %p120, %p121
      %s124 = sadd.s32 %s123, 1
      %p127 = scmp.eq.s32.totalorder %s26, 1
      %p128 = scmp.ne.s32.totalorder %s123, %s125
      %p129 = scmp.eq.s32.totalorder %s26, 0
      %p130 = por %p128, %p129
      %p131 = scmp.ne.s32.totalorder %s123, %s125
      %p132 = scmp.eq.s32.totalorder %s31, 1
      %p133 = por %p131, %p132
      %p134 = scmp.ne.s32.totalorder %s125, %s126
      %p135 = scmp.eq.s32.totalorder %s31, 0
      %p136 = por %p134, %p135
      %p137 = scmp.ne.s32.totalorder %s125, %s126
      %p138 = scmp.eq.s32.totalorder %s32, 1
      %p139 = por %p137, %p138
      %p141 = scmp.ne.s32.totalorder %s126, %s140
      %p142 = scmp.eq.s32.totalorder %s32, 0
      %p143 = por %p141, %p142
      %s145 = sadd.s32 %s144, 1
      %p148 = scmp.eq.s32.totalorder %s26, 1
      %p149 = scmp.ne.s32.totalorder %s144, %s146
      %p150 = scmp.eq.s32.totalorder %s26, 0
      %p151 = por %p149, %p150
      %p152 = scmp.ne.s32.totalorder %s144, %s146
      %p153 = scmp.eq.s32.totalorder %s31, 1
      %p154 = por %p152, %p153
      %p155 = scmp.ne.s32.totalorder %s146, %s147
      %p156 = scmp.eq.s32.totalorder %s31, 0
      %p157 = por %p155, %p156
      %p158 = scmp.ne.s32.totalorder %s146, %s147
      %p159 = scmp.eq.s32.totalorder %s32, 1
      %p160 = por %p158, %p159
      %p162 = scmp.ne.s32.totalorder %s147, %s161
      %p163 = scmp.eq.s32.totalorder %s32, 0
      %p164 = por %p162, %p163
      %s166 = sadd.s32 %s165, 1
      %p169 = scmp.eq.s32.totalorder %s26, 1
      %p170 = scmp.ne.s32.totalorder %s165, %s167
      %p171 = scmp.eq.s32.totalorder %s26, 0
      %p172 = por %p170, %p171
      %p173 = scmp.ne.s32.totalorder %s165, %s167
      %p174 = scmp.eq.s32.totalorder %s31, 1
      %p175 = por %p173, %p174
      %p176 = scmp.ne.s32.totalorder %s167, %s168
      %p177 = scmp.eq.s32.totalorder %s31, 0
      %p178 = por %p176, %p177
      %p179 = scmp.ne.s32.totalorder %s167, %s168
      %p180 = scmp.eq.s32.totalorder %s32, 1
      %p181 = por %p179, %p180
      %p183 = scmp.ne.s32.totalorder %s168, %s182
      %p184 = scmp.eq.s32.totalorder %s32, 0
      %p185 = por %p183, %p184
      %s187 = sadd.s32 %s186, 1
      %p190 = scmp.eq.s32.totalorder %s26, 1
      %p191 = scmp.ne.s32.totalorder %s186, %s188
      %p192 = scmp.eq.s32.totalorder %s26, 0
      %p193 = por %p191, %p192
      %p194 = scmp.ne.s32.totalorder %s186, %s188
      %p195 = scmp.eq.s32.totalorder %s31, 1
      %p196 = por %p194, %p195
      %p197 = scmp.ne.s32.totalorder %s188, %s189
      %p198 = scmp.eq.s32.totalorder %s31, 0
      %p199 = por %p197, %p198
      %p200 = scmp.ne.s32.totalorder %s188, %s189
      %p201 = scmp.eq.s32.totalorder %s32, 1
      %p202 = por %p200, %p201
      %p204 = scmp.ne.s32.totalorder %s189, %s203
      %p205 = scmp.eq.s32.totalorder %s32, 0
      %p206 = por %p204, %p205
      %s208 = sadd.s32 %s207, 1
      %p211 = scmp.eq.s32.totalorder %s26, 1
      %p212 = scmp.ne.s32.totalorder %s207, %s209
      %p213 = scmp.eq.s32.totalorder %s26, 0
      %p214 = por %p212, %p213
      %p215 = scmp.ne.s32.totalorder %s207, %s209
      %p216 = scmp.eq.s32.totalorder %s31, 1
      %p217 = por %p215, %p216
      %p218 = scmp.ne.s32.totalorder %s209, %s210
      %p219 = scmp.eq.s32.totalorder %s31, 0
      %p220 = por %p218, %p219
      %p221 = scmp.ne.s32.totalorder %s209, %s210
      %p222 = scmp.eq.s32.totalorder %s32, 1
      %p223 = por %p221, %p222
      %p225 = scmp.ne.s32.totalorder %s210, %s224
      %p226 = scmp.eq.s32.totalorder %s32, 0
      %p227 = por %p225, %p226
      %s229 = sadd.s32 %s228, 1
      %p232 = scmp.eq.s32.totalorder %s26, 1
      %p233 = scmp.ne.s32.totalorder %s228, %s230
      %p234 = scmp.eq.s32.totalorder %s26, 0
      %p235 = por %p233, %p234
      %p236 = scmp.ne.s32.totalorder %s228, %s230
      %p237 = scmp.eq.s32.totalorder %s31, 1
      %p238 = por %p236, %p237
      %p239 = scmp.ne.s32.totalorder %s230, %s231
      %p240 = scmp.eq.s32.totalorder %s31, 0
      %p241 = por %p239, %p240
      %p242 = scmp.ne.s32.totalorder %s230, %s231
      %p243 = scmp.eq.s32.totalorder %s32, 1
      %p244 = por %p242, %p243
      %p246 = scmp.ne.s32.totalorder %s231, %s245
      %p247 = scmp.eq.s32.totalorder %s32, 0
      %p248 = por %p246, %p247
      %s250 = sadd.s32 %s249, 1
      %p253 = scmp.eq.s32.totalorder %s26, 1
      %p254 = scmp.ne.s32.totalorder %s249, %s251
      %p255 = scmp.eq.s32.totalorder %s26, 0
      %p256 = por %p254, %p255
      %p257 = scmp.ne.s32.totalorder %s249, %s251
      %p258 = scmp.eq.s32.totalorder %s31, 1
      %p259 = por %p257, %p258
      %p260 = scmp.ne.s32.totalorder %s251, %s252
      %p261 = scmp.eq.s32.totalorder %s31, 0
      %p262 = por %p260, %p261
      %p263 = scmp.ne.s32.totalorder %s251, %s252
      %p264 = scmp.eq.s32.totalorder %s32, 1
      %p265 = por %p263, %p264
      %p267 = scmp.ne.s32.totalorder %s252, %s266
      %p268 = scmp.eq.s32.totalorder %s32, 0
      %p269 = por %p267, %p268
      %s271 = sadd.s32 %s270, 1
      %p274 = scmp.eq.s32.totalorder %s26, 1
      %p275 = scmp.ne.s32.totalorder %s270, %s272
      %p276 = scmp.eq.s32.totalorder %s26, 0
      %p277 = por %p275, %p276
      %p278 = scmp.ne.s32.totalorder %s270, %s272
      %p279 = scmp.eq.s32.totalorder %s31, 1
      %p280 = por %p278, %p279
      %p281 = scmp.ne.s32.totalorder %s272, %s273
      %p282 = scmp.eq.s32.totalorder %s31, 0
      %p283 = por %p281, %p282
      %p284 = scmp.ne.s32.totalorder %s272, %s273
      %p285 = scmp.eq.s32.totalorder %s32, 1
      %p286 = por %p284, %p285
      %p288 = scmp.ne.s32.totalorder %s273, %s287
      %p289 = scmp.eq.s32.totalorder %s32, 0
      %p290 = por %p288, %p289
      %s292 = sadd.s32 %s291, 1
      %p295 = scmp.eq.s32.totalorder %s26, 1
      %p296 = scmp.ne.s32.totalorder %s291, %s293
      %p297 = scmp.eq.s32.totalorder %s26, 0
      %p298 = por %p296, %p297
      %p299 = scmp.ne.s32.totalorder %s291, %s293
      %p300 = scmp.eq.s32.totalorder %s31, 1
      %p301 = por %p299, %p300
      %p302 = scmp.ne.s32.totalorder %s293, %s294
      %p303 = scmp.eq.s32.totalorder %s31, 0
      %p304 = por %p302, %p303
      %p305 = scmp.ne.s32.totalorder %s293, %s294
      %p306 = scmp.eq.s32.totalorder %s32, 1
      %p307 = por %p305, %p306
      %p309 = scmp.ne.s32.totalorder %s294, %s308
      %p310 = scmp.eq.s32.totalorder %s32, 0
      %p311 = por %p309, %p310
      %s312 = ssub.s32 %s26, %s33
      %p313 = scmp.eq.s32.totalorder %s312, 0
      %s315 = sadd.s32 %s314, 1
      %s316 = scalar_select %p313, %s314, %s315
      %p319 = pneg %p313
      %p320 = scmp.eq.s32.totalorder %s26, 1
      %p321 = por %p319, %p320
      %p322 = scmp.ne.s32.totalorder %s314, %s317
      %p323 = scmp.eq.s32.totalorder %s26, 0
      %p324 = por %p322, %p323
      %p325 = scmp.ne.s32.totalorder %s314, %s317
      %p326 = scmp.eq.s32.totalorder %s31, 1
      %p327 = por %p325, %p326
      %p328 = scmp.ne.s32.totalorder %s317, %s318
      %p329 = scmp.eq.s32.totalorder %s31, 0
      %p330 = por %p328, %p329
      %p331 = scmp.ne.s32.totalorder %s317, %s318
      %p332 = scmp.eq.s32.totalorder %s32, 1
      %p333 = por %p331, %p332
      %p335 = scmp.ne.s32.totalorder %s318, %s334
      %p336 = scmp.eq.s32.totalorder %s32, 0
      %p337 = por %p335, %p336
      %p338 = scmp.le.s32.totalorder 1, %s26
      %p339 = scmp.lt.s32.totalorder %s26, 3
      %p340 = pnand %p338, %p339
      %p341 = pneg %p340
      // Predicated region
      $region9: #{tpu_custom_call.1} parent=5 // pred_check
        _
      $region10: #{tpu_custom_call.1} parent=5 // pred_check_branch
        %343 = sbr.rel (%p340) target = $region12
      $region11: #{tpu_custom_call.1} parent=5 // pred_region
        %s344 = ssub.s32 %s26, 1
        // Predicated region
        $region13: #{tpu_custom_call.1} parent=11 // pred_check
          %p345 = pneg %p73
        $region14: #{tpu_custom_call.1} parent=11 // pred_check_branch
          %347 = sbr.rel (%p345) target = $region16
        $region15: #{tpu_custom_call.1} parent=11 // pred_region
          %349 = vsyncadd [#allocation6], 0
          %s350 = sshll.u32 %s1, 4
          %s351 = int_to_ptr.hbm [resolvable:$true] %s350
          %s352 = sshll.u32 [#allocation5], 4
          %s353 = int_to_ptr.vmem [resolvable:$true] %s352
          %358 = dma.hbm_to_vmem [thread:$0]  %s351, 2048, %s353, [#allocation6], 256, 256, 16
        $region16: #{tpu_custom_call.1} parent=11 // pred_fallthru
          _
        // Predicated region
        $region17: #{tpu_custom_call.1} parent=11 // pred_check
          %p359 = pneg %p94
        $region18: #{tpu_custom_call.1} parent=11 // pred_check_branch
          %361 = sbr.rel (%p359) target = $region20
        $region19: #{tpu_custom_call.1} parent=11 // pred_region
          _
        $region20: #{tpu_custom_call.1} parent=11 // pred_fallthru
          _
        // Predicated region
        $region21: #{tpu_custom_call.1} parent=11 // pred_check
          %p362 = pneg %p115
        $region22: #{tpu_custom_call.1} parent=11 // pred_check_branch
          %364 = sbr.rel (%p362) target = $region24
        $region23: #{tpu_custom_call.1} parent=11 // pred_region
          %366 = vsyncadd [#allocation9], 0
          %s367 = sshll.u32 %s3, 4
          %s368 = int_to_ptr.hbm [resolvable:$true] %s367
          %s369 = sshll.u32 [#allocation8], 4
          %s370 = int_to_ptr.vmem [resolvable:$true] %s369
          %375 = dma.hbm_to_vmem [thread:$0]  %s368, 2048, %s370, [#allocation9], 256, 256, 16
        $region24: #{tpu_custom_call.1} parent=11 // pred_fallthru
          _
        // Predicated region
        $region25: #{tpu_custom_call.1} parent=11 // pred_check
          %p376 = pneg %p136
        $region26: #{tpu_custom_call.1} parent=11 // pred_check_branch
          %378 = sbr.rel (%p376) target = $region28
        $region27: #{tpu_custom_call.1} parent=11 // pred_region
          %380 = vsyncadd [#allocation9], 0
          %s381 = sshll.u32 %s4, 4
          %s382 = int_to_ptr.hbm [resolvable:$true] %s381
          %s383 = sshll.u32 [#allocation10], 4
          %s384 = int_to_ptr.vmem [resolvable:$true] %s383
          %389 = dma.hbm_to_vmem [thread:$0]  %s382, 2048, %s384, [#allocation9], 256, 256, 16
        $region28: #{tpu_custom_call.1} parent=11 // pred_fallthru
          _
        // Predicated region
        $region29: #{tpu_custom_call.1} parent=11 // pred_check
          %p390 = pneg %p157
        $region30: #{tpu_custom_call.1} parent=11 // pred_check_branch
          %392 = sbr.rel (%p390) target = $region32
        $region31: #{tpu_custom_call.1} parent=11 // pred_region
          %394 = vsyncadd [#allocation12], 0
          %s395 = sshll.u32 %s5, 4
          %s396 = int_to_ptr.hbm [resolvable:$true] %s395
          %s397 = sshll.u32 [#allocation11], 4
          %s398 = int_to_ptr.vmem [resolvable:$true] %s397
          %403 = dma.hbm_to_vmem [thread:$0]  %s396, 2048, %s398, [#allocation12], 256, 256, 16
        $region32: #{tpu_custom_call.1} parent=11 // pred_fallthru
          _
        // Predicated region
        $region33: #{tpu_custom_call.1} parent=11 // pred_check
          %p404 = pneg %p178
        $region34: #{tpu_custom_call.1} parent=11 // pred_check_branch
          %406 = sbr.rel (%p404) target = $region36
        $region35: #{tpu_custom_call.1} parent=11 // pred_region
          %408 = vsyncadd [#allocation12], 0
          %s409 = sshll.u32 %s6, 4
          %s410 = int_to_ptr.hbm [resolvable:$true] %s409
          %s411 = sshll.u32 [#allocation13], 4
          %s412 = int_to_ptr.vmem [resolvable:$true] %s411
          %417 = dma.hbm_to_vmem [thread:$0]  %s410, 2048, %s412, [#allocation12], 256, 256, 16
        $region36: #{tpu_custom_call.1} parent=11 // pred_fallthru
          _
        // Predicated region
        $region37: #{tpu_custom_call.1} parent=11 // pred_check
          %p418 = pneg %p199
        $region38: #{tpu_custom_call.1} parent=11 // pred_check_branch
          %420 = sbr.rel (%p418) target = $region40
        $region39: #{tpu_custom_call.1} parent=11 // pred_region
          _
        $region40: #{tpu_custom_call.1} parent=11 // pred_fallthru
          _
        // Predicated region
        $region41: #{tpu_custom_call.1} parent=11 // pred_check
          %p421 = pneg %p220
        $region42: #{tpu_custom_call.1} parent=11 // pred_check_branch
          %423 = sbr.rel (%p421) target = $region44
        $region43: #{tpu_custom_call.1} parent=11 // pred_region
          %425 = vsyncadd [#allocation15], 0
          %s426 = sshll.u32 %s8, 4
          %s427 = int_to_ptr.hbm [resolvable:$true] %s426
          %s428 = sshll.u32 [#allocation14], 4
          %s429 = int_to_ptr.vmem [resolvable:$true] %s428
          %434 = dma.hbm_to_vmem [thread:$0]  %s427, 2048, %s429, [#allocation15], 256, 256, 16
        $region44: #{tpu_custom_call.1} parent=11 // pred_fallthru
          _
        // Predicated region
        $region45: #{tpu_custom_call.1} parent=11 // pred_check
          %p435 = pneg %p241
        $region46: #{tpu_custom_call.1} parent=11 // pred_check_branch
          %437 = sbr.rel (%p435) target = $region48
        $region47: #{tpu_custom_call.1} parent=11 // pred_region
          %439 = vsyncadd [#allocation15], 0
          %s440 = sshll.u32 %s9, 4
          %s441 = int_to_ptr.hbm [resolvable:$true] %s440
          %s442 = sshll.u32 [#allocation16], 4
          %s443 = int_to_ptr.vmem [resolvable:$true] %s442
          %448 = dma.hbm_to_vmem [thread:$0]  %s441, 2048, %s443, [#allocation15], 256, 256, 16
        $region48: #{tpu_custom_call.1} parent=11 // pred_fallthru
          _
        // Predicated region
        $region49: #{tpu_custom_call.1} parent=11 // pred_check
          %p449 = pneg %p262
        $region50: #{tpu_custom_call.1} parent=11 // pred_check_branch
          %451 = sbr.rel (%p449) target = $region52
        $region51: #{tpu_custom_call.1} parent=11 // pred_region
          _
        $region52: #{tpu_custom_call.1} parent=11 // pred_fallthru
          _
        // Predicated region
        $region53: #{tpu_custom_call.1} parent=11 // pred_check
          %p452 = pneg %p283
        $region54: #{tpu_custom_call.1} parent=11 // pred_check_branch
          %454 = sbr.rel (%p452) target = $region56
        $region55: #{tpu_custom_call.1} parent=11 // pred_region
          _
        $region56: #{tpu_custom_call.1} parent=11 // pred_fallthru
          _
        // Predicated region
        $region57: #{tpu_custom_call.1} parent=11 // pred_check
          %p455 = pneg %p304
        $region58: #{tpu_custom_call.1} parent=11 // pred_check_branch
          %457 = sbr.rel (%p455) target = $region60
        $region59: #{tpu_custom_call.1} parent=11 // pred_region
          _
        $region60: #{tpu_custom_call.1} parent=11 // pred_fallthru
          _
      $region12: #{tpu_custom_call.1} parent=5 // pred_fallthru
        _
      %p458 = scmp.lt.s32.totalorder %s26, 2
      // Predicated region
      $region61: #{tpu_custom_call.1} parent=5 // pred_check
        %p459 = pneg %p458
      $region62: #{tpu_custom_call.1} parent=5 // pred_check_branch
        %461 = sbr.rel (%p459) target = $region64
      $region63: #{tpu_custom_call.1} parent=5 // pred_region
        // Predicated region
        $region65: #{tpu_custom_call.1} parent=63 // pred_check
          %p462 = pneg %p46
        $region66: #{tpu_custom_call.1} parent=63 // pred_check_branch
          %464 = sbr.rel (%p462) target = $region68
        $region67: #{tpu_custom_call.1} parent=63 // pred_region
          %s465 = smul.u32 7, %s26
          %p466 = scmp.lt.s32.totalorder %s465, 13
          %s467 = scalar_select %p466, %s465, 13
          %s468 = smul.addr %s467, 4
          %s469 = scalar_lea.vmem %s0, %s468
          %s470 = smul.u32 7, %s26
        $region68: #{tpu_custom_call.1} parent=63 // pred_fallthru
          _
      $region64: #{tpu_custom_call.1} parent=5 // pred_fallthru
        _
      %p471 = scmp.le.s32.totalorder 1, %s26
      %p472 = scmp.lt.s32.totalorder %s26, 3
      %p473 = pnand %p471, %p472
      %p474 = pneg %p473
      // Predicated region
      $region69: #{tpu_custom_call.1} parent=5 // pred_check
        _
      $region70: #{tpu_custom_call.1} parent=5 // pred_check_branch
        %476 = sbr.rel (%p473) target = $region72
      $region71: #{tpu_custom_call.1} parent=5 // pred_region
        %s477 = ssub.s32 %s26, 1
        // Predicated region
        $region73: #{tpu_custom_call.1} parent=71 // pred_check
          %p478 = pneg %p73
        $region74: #{tpu_custom_call.1} parent=71 // pred_check_branch
          %480 = sbr.rel (%p478) target = $region76
        $region75: #{tpu_custom_call.1} parent=71 // pred_region
          %482 = dma.done [#allocation6], 2048
        $region76: #{tpu_custom_call.1} parent=71 // pred_fallthru
          _
        // Predicated region
        $region77: #{tpu_custom_call.1} parent=71 // pred_check
          %p483 = pneg %p115
        $region78: #{tpu_custom_call.1} parent=71 // pred_check_branch
          %485 = sbr.rel (%p483) target = $region80
        $region79: #{tpu_custom_call.1} parent=71 // pred_region
          %487 = dma.done [#allocation9], 2048
        $region80: #{tpu_custom_call.1} parent=71 // pred_fallthru
          _
        // Predicated region
        $region81: #{tpu_custom_call.1} parent=71 // pred_check
          %p488 = pneg %p136
        $region82: #{tpu_custom_call.1} parent=71 // pred_check_branch
          %490 = sbr.rel (%p488) target = $region84
        $region83: #{tpu_custom_call.1} parent=71 // pred_region
          %492 = dma.done [#allocation9], 2048
        $region84: #{tpu_custom_call.1} parent=71 // pred_fallthru
          _
        // Predicated region
        $region85: #{tpu_custom_call.1} parent=71 // pred_check
          %p493 = pneg %p157
        $region86: #{tpu_custom_call.1} parent=71 // pred_check_branch
          %495 = sbr.rel (%p493) target = $region88
        $region87: #{tpu_custom_call.1} parent=71 // pred_region
          %497 = dma.done [#allocation12], 2048
        $region88: #{tpu_custom_call.1} parent=71 // pred_fallthru
          _
        // Predicated region
        $region89: #{tpu_custom_call.1} parent=71 // pred_check
          %p498 = pneg %p178
        $region90: #{tpu_custom_call.1} parent=71 // pred_check_branch
          %500 = sbr.rel (%p498) target = $region92
        $region91: #{tpu_custom_call.1} parent=71 // pred_region
          %502 = dma.done [#allocation12], 2048
        $region92: #{tpu_custom_call.1} parent=71 // pred_fallthru
          _
        // Predicated region
        $region93: #{tpu_custom_call.1} parent=71 // pred_check
          %p503 = pneg %p220
        $region94: #{tpu_custom_call.1} parent=71 // pred_check_branch
          %505 = sbr.rel (%p503) target = $region96
        $region95: #{tpu_custom_call.1} parent=71 // pred_region
          %507 = dma.done [#allocation15], 2048
        $region96: #{tpu_custom_call.1} parent=71 // pred_fallthru
          _
        // Predicated region
        $region97: #{tpu_custom_call.1} parent=71 // pred_check
          %p508 = pneg %p241
        $region98: #{tpu_custom_call.1} parent=71 // pred_check_branch
          %510 = sbr.rel (%p508) target = $region100
        $region99: #{tpu_custom_call.1} parent=71 // pred_region
          %512 = dma.done [#allocation15], 2048
        $region100: #{tpu_custom_call.1} parent=71 // pred_fallthru
          _
        %s513 = smul.u32 7, %s31
        %p514 = scmp.lt.s32.totalorder %s513, 13
        %s515 = scalar_select %p514, %s513, 13
        %s516 = smul.addr %s515, 4
        %s517 = scalar_lea.vmem %s0, %s516
        %p518 = pneg %p52
        %p519 = pneg %p49
        %p520 = pneg %p73
        %p521 = pneg %p70
        %p522 = pneg %p94
        %p523 = pneg %p91
        %p524 = pneg %p115
        %p525 = pneg %p112
        %p526 = pneg %p136
        %p527 = pneg %p133
        %p528 = pneg %p157
        %p529 = pneg %p154
        %p530 = pneg %p178
        %p531 = pneg %p175
        %p532 = pneg %p199
        %p533 = pneg %p196
        %p534 = pneg %p220
        %p535 = pneg %p217
        %p536 = pneg %p241
        %p537 = pneg %p238
        %p538 = pneg %p262
        %p539 = pneg %p259
        %p540 = pneg %p283
        %p541 = pneg %p280
        %p542 = pneg %p304
        %p543 = pneg %p301
        %p544 = pneg %p330
        %p545 = pneg %p327
        %s546 = sand.u32 %s317, 1
        %s547 = scalar_lea.sflag [#allocation7], %s546
        %s548 = sand.u32 %s317, 1
        %s549 = smul.addr %s548, 56
        %s550 = scalar_lea.vmem [#allocation17], %s549
        %s551 = smul.u32 7, %s31
        %p552 = scmp.lt.s32.totalorder %s551, 13
        %s553 = scalar_select %p552, %s551, 13
        %s554 = smul.addr %s553, 4
        %s555 = scalar_lea.vmem %s0, %s554
        %s556 = smul.u32 7, %s31
        %s557 = smul.u32 7, %s31
        %v559 = vld [vmem:[%s555] sm:$0xf]
        %v560 = vld [vmem:[%s555 + $0x4] sm:$0xf]
        %v561 = vld [vmem:[%s555 + $0x8] sm:$0xf]
        %v562 = vld [vmem:[%s555 + $0xc] sm:$0xf]
        %v563 = vld [vmem:[%s555 + $0x10] sm:$0xf]
        %v564 = vld [vmem:[%s555 + $0x14] sm:$0xf]
        %v565 = vld [vmem:[%s555 + $0x18] sm:$0xf]
        %v566 = vld [vmem:[#allocation5] sm:$0xff]
        %v567 = vld [vmem:[#allocation5 + $0x8] sm:$0xff]
        %v568 = vld [vmem:[#allocation5 + $0x10] sm:$0xff]
        %v569 = vld [vmem:[#allocation5 + $0x18] sm:$0xff]
        %v570 = vld [vmem:[#allocation5 + $0x20] sm:$0xff]
        %v571 = vld [vmem:[#allocation5 + $0x28] sm:$0xff]
        %v572 = vld [vmem:[#allocation5 + $0x30] sm:$0xff]
        %v573 = vld [vmem:[#allocation5 + $0x38] sm:$0xff]
        %v574 = vld [vmem:[#allocation5 + $0x40] sm:$0xff]
        %v575 = vld [vmem:[#allocation5 + $0x48] sm:$0xff]
        %v576 = vld [vmem:[#allocation5 + $0x50] sm:$0xff]
        %v577 = vld [vmem:[#allocation5 + $0x58] sm:$0xff]
        %v578 = vld [vmem:[#allocation5 + $0x60] sm:$0xff]
        %v579 = vld [vmem:[#allocation5 + $0x68] sm:$0xff]
        %v580 = vld [vmem:[#allocation5 + $0x70] sm:$0xff]
        %v581 = vld [vmem:[#allocation5 + $0x78] sm:$0xff]
        %v582 = vld [vmem:[%s2] sm:$0xf]
        %v584 = vperm.slane %v582, 0
        %v585 = vperm.slane %v582, 1
        %v586 = vperm.slane %v582, 2
        %v587 = vperm.slane %v582, 3
        %v599 = vunpack.c.l.b16 %v559
        %v600 = vunpack.c.l.b16 %v560
        %v601 = vunpack.c.l.b16 %v561
        %v602 = vunpack.c.l.b16 %v562
        %v603 = vunpack.c.l.b16 %v563
        %v604 = vunpack.c.l.b16 %v564
        %v605 = vunpack.c.l.b16 %v565
        %v606 = vpack.c.b16 %v600, %v599
        %v607 = vpack.c.b16 %v602, %v601
        %v608 = vpack.c.b16 %v604, %v603
        %v609 = vpack.c.b16 %v605, %v605
        %v626 = vunpack.c.l.b16 %v566
        %v627 = vunpack.c.h.b16 %v566
        %v628 = vunpack.c.l.b16 %v567
        %v629 = vunpack.c.h.b16 %v567
        %v630 = vunpack.c.l.b16 %v568
        %v631 = vunpack.c.h.b16 %v568
        %v632 = vunpack.c.l.b16 %v569
        %v633 = vunpack.c.h.b16 %v569
        %v634 = vunpack.c.l.b16 %v570
        %v635 = vunpack.c.h.b16 %v570
        %v636 = vunpack.c.l.b16 %v571
        %v637 = vunpack.c.h.b16 %v571
        %v638 = vunpack.c.l.b16 %v572
        %v639 = vunpack.c.h.b16 %v572
        %v640 = vunpack.c.l.b16 %v573
        %v641 = vunpack.c.h.b16 %v573
        %v642 = vunpack.c.l.b16 %v574
        %v643 = vunpack.c.h.b16 %v574
        %v644 = vunpack.c.l.b16 %v575
        %v645 = vunpack.c.h.b16 %v575
        %v646 = vunpack.c.l.b16 %v576
        %v647 = vunpack.c.h.b16 %v576
        %v648 = vunpack.c.l.b16 %v577
        %v649 = vunpack.c.h.b16 %v577
        %v650 = vunpack.c.l.b16 %v578
        %v651 = vunpack.c.h.b16 %v578
        %v652 = vunpack.c.l.b16 %v579
        %v653 = vunpack.c.h.b16 %v579
        %v654 = vunpack.c.l.b16 %v580
        %v655 = vunpack.c.h.b16 %v580
        %v656 = vunpack.c.l.b16 %v581
        %v657 = vunpack.c.h.b16 %v581
        %v658 = vpack.c.b16 %v630, %v626
        %v659 = vpack.c.b16 %v631, %v627
        %v660 = vpack.c.b16 %v632, %v628
        %v661 = vpack.c.b16 %v633, %v629
        %v662 = vpack.c.b16 %v638, %v634
        %v663 = vpack.c.b16 %v639, %v635
        %v664 = vpack.c.b16 %v640, %v636
        %v665 = vpack.c.b16 %v641, %v637
        %v666 = vpack.c.b16 %v646, %v642
        %v667 = vpack.c.b16 %v647, %v643
        %v668 = vpack.c.b16 %v648, %v644
        %v669 = vpack.c.b16 %v649, %v645
        %v670 = vpack.c.b16 %v654, %v650
        %v671 = vpack.c.b16 %v655, %v651
        %v672 = vpack.c.b16 %v656, %v652
        %v673 = vpack.c.b16 %v657, %v653
        %vm690 = vcmask 523264
        %v692 = vsel %vm690, %v606, 0
        %v695 = vsel %vm690, %v607, 0
        %v698 = vsel %vm690, %v608, 0
        %v701 = vsel %vm690, %v609, 0
        %703 = vmatpush.bf16.msra.mxu0 0
        %704 = vmatpush.bf16.msra.mxu0 0
        %705 = vmatpush.bf16.msra.mxu0 0
        %706 = vmatpush.bf16.msra.mxu0 0
        %707 = vmatpush.bf16.msra.mxu0 %v670
        %708 = vmatpush.bf16.msra.mxu0 %v666
        %709 = vmatpush.bf16.msra.mxu0 %v662
        %710 = vmatpush.bf16.msra.mxu0 %v658
        %711 = vmatmul.bf16.gmra.mxu0 %v692
        %v712 = vpop.f32.mrf.mxu0
        %v713 = vadd.f32 %v584, %v712
        %v714 = vpop.f32.mrf.mxu0
        %v715 = vadd.f32 %v584, %v714
        %716 = vmatmul.bf16.gmra.mxu0 %v695
        %v717 = vpop.f32.mrf.mxu0
        %v718 = vadd.f32 %v584, %v717
        %v719 = vpop.f32.mrf.mxu0
        %v720 = vadd.f32 %v584, %v719
        %721 = vmatmul.bf16.gmra.mxu0 %v698
        %v722 = vpop.f32.mrf.mxu0
        %v723 = vadd.f32 %v584, %v722
        %v724 = vpop.f32.mrf.mxu0
        %v725 = vadd.f32 %v584, %v724
        %726 = vmatmul.bf16.gmra.mxu0 %v701
        %v727 = vpop.f32.mrf.mxu0
        %v728 = vadd.f32 %v584, %v727
        %v729 = vpop.f32.mrf.mxu0
        %730 = vdwg.mxu0
        %731 = vmatpush.bf16.msra.mxu0 0
        %732 = vmatpush.bf16.msra.mxu0 0
        %733 = vmatpush.bf16.msra.mxu0 0
        %734 = vmatpush.bf16.msra.mxu0 0
        %735 = vmatpush.bf16.msra.mxu0 %v671
        %736 = vmatpush.bf16.msra.mxu0 %v667
        %737 = vmatpush.bf16.msra.mxu0 %v663
        %738 = vmatpush.bf16.msra.mxu0 %v659
        %739 = vmatmul.bf16.gmra.mxu0 %v692
        %v740 = vpop.f32.mrf.mxu0
        %v741 = vadd.f32 %v585, %v740
        %v742 = vpop.f32.mrf.mxu0
        %v743 = vadd.f32 %v585, %v742
        %744 = vmatmul.bf16.gmra.mxu0 %v695
        %v745 = vpop.f32.mrf.mxu0
        %v746 = vadd.f32 %v585, %v745
        %v747 = vpop.f32.mrf.mxu0
        %v748 = vadd.f32 %v585, %v747
        %749 = vmatmul.bf16.gmra.mxu0 %v698
        %v750 = vpop.f32.mrf.mxu0
        %v751 = vadd.f32 %v585, %v750
        %v752 = vpop.f32.mrf.mxu0
        %v753 = vadd.f32 %v585, %v752
        %754 = vmatmul.bf16.gmra.mxu0 %v701
        %v755 = vpop.f32.mrf.mxu0
        %v756 = vadd.f32 %v585, %v755
        %v757 = vpop.f32.mrf.mxu0
        %758 = vdwg.mxu0
        %759 = vmatpush.bf16.msra.mxu0 0
        %760 = vmatpush.bf16.msra.mxu0 0
        %761 = vmatpush.bf16.msra.mxu0 0
        %762 = vmatpush.bf16.msra.mxu0 0
        %763 = vmatpush.bf16.msra.mxu0 %v672
        %764 = vmatpush.bf16.msra.mxu0 %v668
        %765 = vmatpush.bf16.msra.mxu0 %v664
        %766 = vmatpush.bf16.msra.mxu0 %v660
        %767 = vmatmul.bf16.gmra.mxu0 %v692
        %v768 = vpop.f32.mrf.mxu0
        %v769 = vadd.f32 %v586, %v768
        %v770 = vpop.f32.mrf.mxu0
        %v771 = vadd.f32 %v586, %v770
        %772 = vmatmul.bf16.gmra.mxu0 %v695
        %v773 = vpop.f32.mrf.mxu0
        %v774 = vadd.f32 %v586, %v773
        %v775 = vpop.f32.mrf.mxu0
        %v776 = vadd.f32 %v586, %v775
        %777 = vmatmul.bf16.gmra.mxu0 %v698
        %v778 = vpop.f32.mrf.mxu0
        %v779 = vadd.f32 %v586, %v778
        %v780 = vpop.f32.mrf.mxu0
        %v781 = vadd.f32 %v586, %v780
        %782 = vmatmul.bf16.gmra.mxu0 %v701
        %v783 = vpop.f32.mrf.mxu0
        %v784 = vadd.f32 %v586, %v783
        %v785 = vpop.f32.mrf.mxu0
        %786 = vdwg.mxu0
        %787 = vmatpush.bf16.msra.mxu0 0
        %788 = vmatpush.bf16.msra.mxu0 0
        %789 = vmatpush.bf16.msra.mxu0 0
        %790 = vmatpush.bf16.msra.mxu0 0
        %791 = vmatpush.bf16.msra.mxu0 %v673
        %792 = vmatpush.bf16.msra.mxu0 %v669
        %793 = vmatpush.bf16.msra.mxu0 %v665
        %794 = vmatpush.bf16.msra.mxu0 %v661
        %795 = vmatmul.bf16.gmra.mxu0 %v692
        %v796 = vpop.f32.mrf.mxu0
        %v797 = vadd.f32 %v587, %v796
        %v798 = vpop.f32.mrf.mxu0
        %v799 = vadd.f32 %v587, %v798
        %800 = vmatmul.bf16.gmra.mxu0 %v695
        %v801 = vpop.f32.mrf.mxu0
        %v802 = vadd.f32 %v587, %v801
        %v803 = vpop.f32.mrf.mxu0
        %v804 = vadd.f32 %v587, %v803
        %805 = vmatmul.bf16.gmra.mxu0 %v698
        %v806 = vpop.f32.mrf.mxu0
        %v807 = vadd.f32 %v587, %v806
        %v808 = vpop.f32.mrf.mxu0
        %v809 = vadd.f32 %v587, %v808
        %810 = vmatmul.bf16.gmra.mxu0 %v701
        %v811 = vpop.f32.mrf.mxu0
        %v812 = vadd.f32 %v587, %v811
        %v813 = vpop.f32.mrf.mxu0
        %814 = vdwg.mxu0
        %815 = vst [vmem:[#allocation2] sm:$0xff] %v713
        %816 = vst [vmem:[#allocation2 + $0x8] sm:$0xff] %v741
        %817 = vst [vmem:[#allocation2 + $0x10] sm:$0xff] %v769
        %818 = vst [vmem:[#allocation2 + $0x18] sm:$0xff] %v797
        %819 = vst [vmem:[#allocation2 + $0x20] sm:$0xff] %v715
        %820 = vst [vmem:[#allocation2 + $0x28] sm:$0xff] %v743
        %821 = vst [vmem:[#allocation2 + $0x30] sm:$0xff] %v771
        %822 = vst [vmem:[#allocation2 + $0x38] sm:$0xff] %v799
        %823 = vst [vmem:[#allocation2 + $0x40] sm:$0xff] %v718
        %824 = vst [vmem:[#allocation2 + $0x48] sm:$0xff] %v746
        %825 = vst [vmem:[#allocation2 + $0x50] sm:$0xff] %v774
        %826 = vst [vmem:[#allocation2 + $0x58] sm:$0xff] %v802
        %827 = vst [vmem:[#allocation2 + $0x60] sm:$0xff] %v720
        %828 = vst [vmem:[#allocation2 + $0x68] sm:$0xff] %v748
        %829 = vst [vmem:[#allocation2 + $0x70] sm:$0xff] %v776
        %830 = vst [vmem:[#allocation2 + $0x78] sm:$0xff] %v804
        %831 = vst [vmem:[#allocation2 + $0x80] sm:$0xff] %v723
        %832 = vst [vmem:[#allocation2 + $0x88] sm:$0xff] %v751
        %833 = vst [vmem:[#allocation2 + $0x90] sm:$0xff] %v779
        %834 = vst [vmem:[#allocation2 + $0x98] sm:$0xff] %v807
        %835 = vst [vmem:[#allocation2 + $0xa0] sm:$0xff] %v725
        %836 = vst [vmem:[#allocation2 + $0xa8] sm:$0xff] %v753
        %837 = vst [vmem:[#allocation2 + $0xb0] sm:$0xff] %v781
        %838 = vst [vmem:[#allocation2 + $0xb8] sm:$0xff] %v809
        %839 = vst [vmem:[#allocation2 + $0xc0] sm:$0xff] %v728
        %840 = vst [vmem:[#allocation2 + $0xc8] sm:$0xff] %v756
        %841 = vst [vmem:[#allocation2 + $0xd0] sm:$0xff] %v784
        %842 = vst [vmem:[#allocation2 + $0xd8] sm:$0xff] %v812
        %v843 = vld [vmem:[#allocation8] sm:$0xff]
        %v844 = vld [vmem:[#allocation8 + $0x8] sm:$0xff]
        %v845 = vld [vmem:[#allocation8 + $0x10] sm:$0xff]
        %v846 = vld [vmem:[#allocation8 + $0x18] sm:$0xff]
        %v847 = vld [vmem:[#allocation8 + $0x20] sm:$0xff]
        %v848 = vld [vmem:[#allocation8 + $0x28] sm:$0xff]
        %v849 = vld [vmem:[#allocation8 + $0x30] sm:$0xff]
        %v850 = vld [vmem:[#allocation8 + $0x38] sm:$0xff]
        %v851 = vld [vmem:[#allocation8 + $0x40] sm:$0xff]
        %v852 = vld [vmem:[#allocation8 + $0x48] sm:$0xff]
        %v853 = vld [vmem:[#allocation8 + $0x50] sm:$0xff]
        %v854 = vld [vmem:[#allocation8 + $0x58] sm:$0xff]
        %v855 = vld [vmem:[#allocation8 + $0x60] sm:$0xff]
        %v856 = vld [vmem:[#allocation8 + $0x68] sm:$0xff]
        %v857 = vld [vmem:[#allocation8 + $0x70] sm:$0xff]
        %v858 = vld [vmem:[#allocation8 + $0x78] sm:$0xff]
        %v859 = vld [vmem:[#allocation10] sm:$0xff]
        %v860 = vld [vmem:[#allocation10 + $0x8] sm:$0xff]
        %v861 = vld [vmem:[#allocation10 + $0x10] sm:$0xff]
        %v862 = vld [vmem:[#allocation10 + $0x18] sm:$0xff]
        %v863 = vld [vmem:[#allocation10 + $0x20] sm:$0xff]
        %v864 = vld [vmem:[#allocation10 + $0x28] sm:$0xff]
        %v865 = vld [vmem:[#allocation10 + $0x30] sm:$0xff]
        %v866 = vld [vmem:[#allocation10 + $0x38] sm:$0xff]
        %v867 = vld [vmem:[#allocation10 + $0x40] sm:$0xff]
        %v868 = vld [vmem:[#allocation10 + $0x48] sm:$0xff]
        %v869 = vld [vmem:[#allocation10 + $0x50] sm:$0xff]
        %v870 = vld [vmem:[#allocation10 + $0x58] sm:$0xff]
        %v871 = vld [vmem:[#allocation10 + $0x60] sm:$0xff]
        %v872 = vld [vmem:[#allocation10 + $0x68] sm:$0xff]
        %v873 = vld [vmem:[#allocation10 + $0x70] sm:$0xff]
        %v874 = vld [vmem:[#allocation10 + $0x78] sm:$0xff]
        %s875 = smul.u32 0, 4
        %s876 = smul.addr %s875, 8
        %s877 = scalar_lea.vmem [#allocation2], %s876
        %v878 = vld [vmem:[%s877] sm:$0xff]
        %v879 = vld [vmem:[%s877 + $0x8] sm:$0xff]
        %s880 = smul.u32 6, 4
        %s881 = smul.addr %s880, 8
        %s882 = scalar_lea.vmem [#allocation2], %s881
        %v883 = vld [vmem:[%s882 + $0x10] sm:$0xff]
        %v884 = vld [vmem:[%s882 + $0x18] sm:$0xff]
        %v886 = vsel %vm690, 0.0, 0
        %888 = vmatpush.msra.mxu0 0.0
        %889 = vmatpush.msra.mxu0 0.0
        %890 = vmatpush.msra.mxu0 0.0
        %891 = vmatpush.msra.mxu0 0.0
        %892 = vmatpush.msra.mxu0 0.0
        %893 = vmatpush.msra.mxu0 0.0
        %894 = vmatpush.msra.mxu0 0.0
        %895 = vmatpush.msra.mxu0 0.0
        %896 = vmatpush.msra.mxu0 %v857
        %897 = vmatpush.msra.mxu0 %v855
        %898 = vmatpush.msra.mxu0 %v853
        %899 = vmatpush.msra.mxu0 %v851
        %900 = vmatpush.msra.mxu0 %v849
        %901 = vmatpush.msra.mxu0 %v847
        %902 = vmatpush.msra.mxu0 %v845
        %903 = vmatpush.msra.mxu0 %v843
        %904 = vmatmul.f32.gmra.mxu0 %v886
        %v905 = vpop.f32.mrf.mxu0
        %v906 = vadd.f32 0.0, %v905
        %907 = vdwg.mxu0
        %908 = vmatpush.msra.mxu0 0.0
        %909 = vmatpush.msra.mxu0 0.0
        %910 = vmatpush.msra.mxu0 0.0
        %911 = vmatpush.msra.mxu0 0.0
        %912 = vmatpush.msra.mxu0 0.0
        %913 = vmatpush.msra.mxu0 0.0
        %914 = vmatpush.msra.mxu0 0.0
        %915 = vmatpush.msra.mxu0 0.0
        %916 = vmatpush.msra.mxu0 %v858
        %917 = vmatpush.msra.mxu0 %v856
        %918 = vmatpush.msra.mxu0 %v854
        %919 = vmatpush.msra.mxu0 %v852
        %920 = vmatpush.msra.mxu0 %v850
        %921 = vmatpush.msra.mxu0 %v848
        %922 = vmatpush.msra.mxu0 %v846
        %923 = vmatpush.msra.mxu0 %v844
        %924 = vmatmul.f32.gmra.mxu0 %v886
        %v925 = vpop.f32.mrf.mxu0
        %v926 = vadd.f32 0.0, %v925
        %927 = vdwg.mxu0
        %v928 = vadd.f32 %v878, %v906
        %v929 = vadd.f32 %v879, %v926
        %930 = vmatpush.msra.mxu0 0.0
        %931 = vmatpush.msra.mxu0 0.0
        %932 = vmatpush.msra.mxu0 0.0
        %933 = vmatpush.msra.mxu0 0.0
        %934 = vmatpush.msra.mxu0 0.0
        %935 = vmatpush.msra.mxu0 0.0
        %936 = vmatpush.msra.mxu0 0.0
        %937 = vmatpush.msra.mxu0 0.0
        %938 = vmatpush.msra.mxu0 %v873
        %939 = vmatpush.msra.mxu0 %v871
        %940 = vmatpush.msra.mxu0 %v869
        %941 = vmatpush.msra.mxu0 %v867
        %942 = vmatpush.msra.mxu0 %v865
        %943 = vmatpush.msra.mxu0 %v863
        %944 = vmatpush.msra.mxu0 %v861
        %945 = vmatpush.msra.mxu0 %v859
        %946 = vmatmul.f32.gmra.mxu0 %v886
        %v947 = vpop.f32.mrf.mxu0
        %v948 = vadd.f32 0.0, %v947
        %949 = vdwg.mxu0
        %950 = vmatpush.msra.mxu0 0.0
        %951 = vmatpush.msra.mxu0 0.0
        %952 = vmatpush.msra.mxu0 0.0
        %953 = vmatpush.msra.mxu0 0.0
        %954 = vmatpush.msra.mxu0 0.0
        %955 = vmatpush.msra.mxu0 0.0
        %956 = vmatpush.msra.mxu0 0.0
        %957 = vmatpush.msra.mxu0 0.0
        %958 = vmatpush.msra.mxu0 %v874
        %959 = vmatpush.msra.mxu0 %v872
        %960 = vmatpush.msra.mxu0 %v870
        %961 = vmatpush.msra.mxu0 %v868
        %962 = vmatpush.msra.mxu0 %v866
        %963 = vmatpush.msra.mxu0 %v864
        %964 = vmatpush.msra.mxu0 %v862
        %965 = vmatpush.msra.mxu0 %v860
        %966 = vmatmul.f32.gmra.mxu0 %v886
        %v967 = vpop.f32.mrf.mxu0
        %v968 = vadd.f32 0.0, %v967
        %969 = vdwg.mxu0
        %v970 = vadd.f32 %v883, %v948
        %v971 = vadd.f32 %v884, %v968
        %v972 = vxor.u32 %v928, 2147483648
        %v973 = vmul.f32 %v972, 1.442695
        %v974 = vpow.pop %v973
        %v975 = vadd.f32 %v974, 1.0
        %v976 = vrcp.pop %v975
        %v977 = vmul.f32 %v975, %v976
        %v978 = vsub.f32 1.0, %v977
        %v979 = vmul.f32 %v976, %v978
        %v980 = vadd.f32 %v976, %v979
        %vm981 = vweird.f32 %v975
        %vm982 = vweird.f32 %v976
        %vm983 = vmor %vm981, %vm982
        %v984 = vsel %vm983, %v976, %v980
        %v985 = vand.u32 2147483647, %v975
        %vm986 = vcmp.eq.f32.partialorder %v985, 8.507059e+37
        %v987 = vand.u32 %v975, 2147483648
        %v988 = vor.u32 1.1754944e-38, %v987
        %v989 = vsel %vm986, %v988, %v984
        %v990 = vmul.f32 1.0, %v989
        %v991 = vtanh.pop %v929
        %v992 = vxor.u32 %v929, 2147483648
        %v993 = vmul.f32 %v992, 1.442695
        %v994 = vpow.pop %v993
        %v995 = vadd.f32 %v994, 1.0
        %v996 = vrcp.pop %v995
        %v997 = vmul.f32 %v995, %v996
        %v998 = vsub.f32 1.0, %v997
        %v999 = vmul.f32 %v996, %v998
        %v1000 = vadd.f32 %v996, %v999
        %vm1001 = vweird.f32 %v995
        %vm1002 = vweird.f32 %v996
        %vm1003 = vmor %vm1001, %vm1002
        %v1004 = vsel %vm1003, %v996, %v1000
        %v1005 = vand.u32 2147483647, %v995
        %vm1006 = vcmp.eq.f32.partialorder %v1005, 8.507059e+37
        %v1007 = vand.u32 %v995, 2147483648
        %v1008 = vor.u32 1.1754944e-38, %v1007
        %v1009 = vsel %vm1006, %v1008, %v1004
        %v1010 = vmul.f32 1.0, %v1009
        %v1011 = vmul.f32 %v990, 0.0
        %v1012 = vmul.f32 %v990, %v991
        %1014 = vrot.lane.b32.xlu0 %v1012, 64
        %v1015 = vpop.permute.xlu0 %1014
        %v1017 = vadd.f32 %v1011, %v1015
        %v1018 = vtanh.pop %v1017
        %v1019 = vmul.f32 %v1010, %v1018
        %v1020 = vxor.u32 %v970, 2147483648
        %v1021 = vmul.f32 %v1020, 1.442695
        %v1022 = vpow.pop %v1021
        %v1023 = vadd.f32 %v1022, 1.0
        %v1024 = vrcp.pop %v1023
        %v1025 = vmul.f32 %v1023, %v1024
        %v1026 = vsub.f32 1.0, %v1025
        %v1027 = vmul.f32 %v1024, %v1026
        %v1028 = vadd.f32 %v1024, %v1027
        %vm1029 = vweird.f32 %v1023
        %vm1030 = vweird.f32 %v1024
        %vm1031 = vmor %vm1029, %vm1030
        %v1032 = vsel %vm1031, %v1024, %v1028
        %v1033 = vand.u32 2147483647, %v1023
        %vm1034 = vcmp.eq.f32.partialorder %v1033, 8.507059e+37
        %v1035 = vand.u32 %v1023, 2147483648
        %v1036 = vor.u32 1.1754944e-38, %v1035
        %v1037 = vsel %vm1034, %v1036, %v1032
        %v1038 = vmul.f32 1.0, %v1037
        %v1039 = vtanh.pop %v971
        %v1040 = vxor.u32 %v971, 2147483648
        %v1041 = vmul.f32 %v1040, 1.442695
        %v1042 = vpow.pop %v1041
        %v1043 = vadd.f32 %v1042, 1.0
        %v1044 = vrcp.pop %v1043
        %v1045 = vmul.f32 %v1043, %v1044
        %v1046 = vsub.f32 1.0, %v1045
        %v1047 = vmul.f32 %v1044, %v1046
        %v1048 = vadd.f32 %v1044, %v1047
        %vm1049 = vweird.f32 %v1043
        %vm1050 = vweird.f32 %v1044
        %vm1051 = vmor %vm1049, %vm1050
        %v1052 = vsel %vm1051, %v1044, %v1048
        %v1053 = vand.u32 2147483647, %v1043
        %vm1054 = vcmp.eq.f32.partialorder %v1053, 8.507059e+37
        %v1055 = vand.u32 %v1043, 2147483648
        %v1056 = vor.u32 1.1754944e-38, %v1055
        %v1057 = vsel %vm1054, %v1056, %v1052
        %v1058 = vmul.f32 1.0, %v1057
        %v1059 = vmul.f32 %v1038, 0.0
        %v1060 = vmul.f32 %v1038, %v1039
        %1062 = vrot.lane.b32.xlu0 %v1060, 64
        %v1063 = vpop.permute.xlu0 %1062
        %v1065 = vadd.f32 %v1059, %v1063
        %v1066 = vtanh.pop %v1065
        %v1067 = vmul.f32 %v1058, %v1066
        %1069 = vrot.lane.b32.xlu0 %v1019, 64
        %v1070 = vpop.permute.xlu0 %1069
        %1072 = vst.msk [vmem:[#allocation3] sm:$0xff] %vm690, %v1070
        %1074 = vrot.lane.b32.xlu0 %v1067, 64
        %v1075 = vpop.permute.xlu0 %1074
        %s1077 = scalar_lea.vmem [#allocation4], 48
        %1078 = vst.msk [vmem:[%s1077] sm:$0xff] %vm690, %v1075
        %s1079 = smul.u32 1, 4
        %s1080 = smul.addr %s1079, 8
        %s1081 = scalar_lea.vmem [#allocation2], %s1080
        %v1082 = vld [vmem:[%s1081] sm:$0xff]
        %v1083 = vld [vmem:[%s1081 + $0x8] sm:$0xff]
        %s1084 = smul.u32 5, 4
        %s1085 = smul.addr %s1084, 8
        %s1086 = scalar_lea.vmem [#allocation2], %s1085
        %v1087 = vld [vmem:[%s1086 + $0x10] sm:$0xff]
        %v1088 = vld [vmem:[%s1086 + $0x18] sm:$0xff]
        %v1089 = vsel %vm690, %v1070, 0
        %1091 = vmatpush.msra.mxu0 0.0
        %1092 = vmatpush.msra.mxu0 0.0
        %1093 = vmatpush.msra.mxu0 0.0
        %1094 = vmatpush.msra.mxu0 0.0
        %1095 = vmatpush.msra.mxu0 0.0
        %1096 = vmatpush.msra.mxu0 0.0
        %1097 = vmatpush.msra.mxu0 0.0
        %1098 = vmatpush.msra.mxu0 0.0
        %1099 = vmatpush.msra.mxu0 %v857
        %1100 = vmatpush.msra.mxu0 %v855
        %1101 = vmatpush.msra.mxu0 %v853
        %1102 = vmatpush.msra.mxu0 %v851
        %1103 = vmatpush.msra.mxu0 %v849
        %1104 = vmatpush.msra.mxu0 %v847
        %1105 = vmatpush.msra.mxu0 %v845
        %1106 = vmatpush.msra.mxu0 %v843
        %1107 = vmatmul.f32.gmra.mxu0 %v1089
        %v1108 = vpop.f32.mrf.mxu0
        %v1109 = vadd.f32 0.0, %v1108
        %1110 = vdwg.mxu0
        %1111 = vmatpush.msra.mxu0 0.0
        %1112 = vmatpush.msra.mxu0 0.0
        %1113 = vmatpush.msra.mxu0 0.0
        %1114 = vmatpush.msra.mxu0 0.0
        %1115 = vmatpush.msra.mxu0 0.0
        %1116 = vmatpush.msra.mxu0 0.0
        %1117 = vmatpush.msra.mxu0 0.0
        %1118 = vmatpush.msra.mxu0 0.0
        %1119 = vmatpush.msra.mxu0 %v858
        %1120 = vmatpush.msra.mxu0 %v856
        %1121 = vmatpush.msra.mxu0 %v854
        %1122 = vmatpush.msra.mxu0 %v852
        %1123 = vmatpush.msra.mxu0 %v850
        %1124 = vmatpush.msra.mxu0 %v848
        %1125 = vmatpush.msra.mxu0 %v846
        %1126 = vmatpush.msra.mxu0 %v844
        %1127 = vmatmul.f32.gmra.mxu0 %v1089
        %v1128 = vpop.f32.mrf.mxu0
        %v1129 = vadd.f32 0.0, %v1128
        %1130 = vdwg.mxu0
        %v1131 = vadd.f32 %v1082, %v1109
        %v1132 = vadd.f32 %v1083, %v1129
        %v1133 = vsel %vm690, %v1075, 0
        %1135 = vmatpush.msra.mxu0 0.0
        %1136 = vmatpush.msra.mxu0 0.0
        %1137 = vmatpush.msra.mxu0 0.0
        %1138 = vmatpush.msra.mxu0 0.0
        %1139 = vmatpush.msra.mxu0 0.0
        %1140 = vmatpush.msra.mxu0 0.0
        %1141 = vmatpush.msra.mxu0 0.0
        %1142 = vmatpush.msra.mxu0 0.0
        %1143 = vmatpush.msra.mxu0 %v873
        %1144 = vmatpush.msra.mxu0 %v871
        %1145 = vmatpush.msra.mxu0 %v869
        %1146 = vmatpush.msra.mxu0 %v867
        %1147 = vmatpush.msra.mxu0 %v865
        %1148 = vmatpush.msra.mxu0 %v863
        %1149 = vmatpush.msra.mxu0 %v861
        %1150 = vmatpush.msra.mxu0 %v859
        %1151 = vmatmul.f32.gmra.mxu0 %v1133
        %v1152 = vpop.f32.mrf.mxu0
        %v1153 = vadd.f32 0.0, %v1152
        %1154 = vdwg.mxu0
        %1155 = vmatpush.msra.mxu0 0.0
        %1156 = vmatpush.msra.mxu0 0.0
        %1157 = vmatpush.msra.mxu0 0.0
        %1158 = vmatpush.msra.mxu0 0.0
        %1159 = vmatpush.msra.mxu0 0.0
        %1160 = vmatpush.msra.mxu0 0.0
        %1161 = vmatpush.msra.mxu0 0.0
        %1162 = vmatpush.msra.mxu0 0.0
        %1163 = vmatpush.msra.mxu0 %v874
        %1164 = vmatpush.msra.mxu0 %v872
        %1165 = vmatpush.msra.mxu0 %v870
        %1166 = vmatpush.msra.mxu0 %v868
        %1167 = vmatpush.msra.mxu0 %v866
        %1168 = vmatpush.msra.mxu0 %v864
        %1169 = vmatpush.msra.mxu0 %v862
        %1170 = vmatpush.msra.mxu0 %v860
        %1171 = vmatmul.f32.gmra.mxu0 %v1133
        %v1172 = vpop.f32.mrf.mxu0
        %v1173 = vadd.f32 0.0, %v1172
        %1174 = vdwg.mxu0
        %v1175 = vadd.f32 %v1087, %v1153
        %v1176 = vadd.f32 %v1088, %v1173
        %v1177 = vxor.u32 %v1131, 2147483648
        %v1178 = vmul.f32 %v1177, 1.442695
        %v1179 = vpow.pop %v1178
        %v1180 = vadd.f32 %v1179, 1.0
        %v1181 = vrcp.pop %v1180
        %v1182 = vmul.f32 %v1180, %v1181
        %v1183 = vsub.f32 1.0, %v1182
        %v1184 = vmul.f32 %v1181, %v1183
        %v1185 = vadd.f32 %v1181, %v1184
        %vm1186 = vweird.f32 %v1180
        %vm1187 = vweird.f32 %v1181
        %vm1188 = vmor %vm1186, %vm1187
        %v1189 = vsel %vm1188, %v1181, %v1185
        %v1190 = vand.u32 2147483647, %v1180
        %vm1191 = vcmp.eq.f32.partialorder %v1190, 8.507059e+37
        %v1192 = vand.u32 %v1180, 2147483648
        %v1193 = vor.u32 1.1754944e-38, %v1192
        %v1194 = vsel %vm1191, %v1193, %v1189
        %v1195 = vmul.f32 1.0, %v1194
        %v1196 = vtanh.pop %v1132
        %v1197 = vxor.u32 %v1132, 2147483648
        %v1198 = vmul.f32 %v1197, 1.442695
        %v1199 = vpow.pop %v1198
        %v1200 = vadd.f32 %v1199, 1.0
        %v1201 = vrcp.pop %v1200
        %v1202 = vmul.f32 %v1200, %v1201
        %v1203 = vsub.f32 1.0, %v1202
        %v1204 = vmul.f32 %v1201, %v1203
        %v1205 = vadd.f32 %v1201, %v1204
        %vm1206 = vweird.f32 %v1200
        %vm1207 = vweird.f32 %v1201
        %vm1208 = vmor %vm1206, %vm1207
        %v1209 = vsel %vm1208, %v1201, %v1205
        %v1210 = vand.u32 2147483647, %v1200
        %vm1211 = vcmp.eq.f32.partialorder %v1210, 8.507059e+37
        %v1212 = vand.u32 %v1200, 2147483648
        %v1213 = vor.u32 1.1754944e-38, %v1212
        %v1214 = vsel %vm1211, %v1213, %v1209
        %v1215 = vmul.f32 1.0, %v1214
        %v1216 = vmul.f32 %v1195, %v1017
        %v1217 = vmul.f32 %v1195, %v1196
        %1219 = vrot.lane.b32.xlu0 %v1217, 64
        %v1220 = vpop.permute.xlu0 %1219
        %v1222 = vadd.f32 %v1216, %v1220
        %v1223 = vtanh.pop %v1222
        %v1224 = vmul.f32 %v1215, %v1223
        %v1225 = vxor.u32 %v1175, 2147483648
        %v1226 = vmul.f32 %v1225, 1.442695
        %v1227 = vpow.pop %v1226
        %v1228 = vadd.f32 %v1227, 1.0
        %v1229 = vrcp.pop %v1228
        %v1230 = vmul.f32 %v1228, %v1229
        %v1231 = vsub.f32 1.0, %v1230
        %v1232 = vmul.f32 %v1229, %v1231
        %v1233 = vadd.f32 %v1229, %v1232
        %vm1234 = vweird.f32 %v1228
        %vm1235 = vweird.f32 %v1229
        %vm1236 = vmor %vm1234, %vm1235
        %v1237 = vsel %vm1236, %v1229, %v1233
        %v1238 = vand.u32 2147483647, %v1228
        %vm1239 = vcmp.eq.f32.partialorder %v1238, 8.507059e+37
        %v1240 = vand.u32 %v1228, 2147483648
        %v1241 = vor.u32 1.1754944e-38, %v1240
        %v1242 = vsel %vm1239, %v1241, %v1237
        %v1243 = vmul.f32 1.0, %v1242
        %v1244 = vtanh.pop %v1176
        %v1245 = vxor.u32 %v1176, 2147483648
        %v1246 = vmul.f32 %v1245, 1.442695
        %v1247 = vpow.pop %v1246
        %v1248 = vadd.f32 %v1247, 1.0
        %v1249 = vrcp.pop %v1248
        %v1250 = vmul.f32 %v1248, %v1249
        %v1251 = vsub.f32 1.0, %v1250
        %v1252 = vmul.f32 %v1249, %v1251
        %v1253 = vadd.f32 %v1249, %v1252
        %vm1254 = vweird.f32 %v1248
        %vm1255 = vweird.f32 %v1249
        %vm1256 = vmor %vm1254, %vm1255
        %v1257 = vsel %vm1256, %v1249, %v1253
        %v1258 = vand.u32 2147483647, %v1248
        %vm1259 = vcmp.eq.f32.partialorder %v1258, 8.507059e+37
        %v1260 = vand.u32 %v1248, 2147483648
        %v1261 = vor.u32 1.1754944e-38, %v1260
        %v1262 = vsel %vm1259, %v1261, %v1257
        %v1263 = vmul.f32 1.0, %v1262
        %v1264 = vmul.f32 %v1243, %v1065
        %v1265 = vmul.f32 %v1243, %v1244
        %1267 = vrot.lane.b32.xlu0 %v1265, 64
        %v1268 = vpop.permute.xlu0 %1267
        %v1270 = vadd.f32 %v1264, %v1268
        %v1271 = vtanh.pop %v1270
        %v1272 = vmul.f32 %v1263, %v1271
        %1274 = vrot.lane.b32.xlu0 %v1224, 64
        %v1275 = vpop.permute.xlu0 %1274
        %s1277 = scalar_lea.vmem [#allocation3], 8
        %1278 = vst.msk [vmem:[%s1277] sm:$0xff] %vm690, %v1275
        %1280 = vrot.lane.b32.xlu0 %v1272, 64
        %v1281 = vpop.permute.xlu0 %1280
        %s1283 = scalar_lea.vmem [#allocation4], 40
        %1284 = vst.msk [vmem:[%s1283] sm:$0xff] %vm690, %v1281
        %s1285 = smul.u32 2, 4
        %s1286 = smul.addr %s1285, 8
        %s1287 = scalar_lea.vmem [#allocation2], %s1286
        %v1288 = vld [vmem:[%s1287] sm:$0xff]
        %v1289 = vld [vmem:[%s1287 + $0x8] sm:$0xff]
        %s1290 = smul.u32 4, 4
        %s1291 = smul.addr %s1290, 8
        %s1292 = scalar_lea.vmem [#allocation2], %s1291
        %v1293 = vld [vmem:[%s1292 + $0x10] sm:$0xff]
        %v1294 = vld [vmem:[%s1292 + $0x18] sm:$0xff]
        %v1295 = vsel %vm690, %v1275, 0
        %1297 = vmatpush.msra.mxu0 0.0
        %1298 = vmatpush.msra.mxu0 0.0
        %1299 = vmatpush.msra.mxu0 0.0
        %1300 = vmatpush.msra.mxu0 0.0
        %1301 = vmatpush.msra.mxu0 0.0
        %1302 = vmatpush.msra.mxu0 0.0
        %1303 = vmatpush.msra.mxu0 0.0
        %1304 = vmatpush.msra.mxu0 0.0
        %1305 = vmatpush.msra.mxu0 %v857
        %1306 = vmatpush.msra.mxu0 %v855
        %1307 = vmatpush.msra.mxu0 %v853
        %1308 = vmatpush.msra.mxu0 %v851
        %1309 = vmatpush.msra.mxu0 %v849
        %1310 = vmatpush.msra.mxu0 %v847
        %1311 = vmatpush.msra.mxu0 %v845
        %1312 = vmatpush.msra.mxu0 %v843
        %1313 = vmatmul.f32.gmra.mxu0 %v1295
        %v1314 = vpop.f32.mrf.mxu0
        %v1315 = vadd.f32 0.0, %v1314
        %1316 = vdwg.mxu0
        %1317 = vmatpush.msra.mxu0 0.0
        %1318 = vmatpush.msra.mxu0 0.0
        %1319 = vmatpush.msra.mxu0 0.0
        %1320 = vmatpush.msra.mxu0 0.0
        %1321 = vmatpush.msra.mxu0 0.0
        %1322 = vmatpush.msra.mxu0 0.0
        %1323 = vmatpush.msra.mxu0 0.0
        %1324 = vmatpush.msra.mxu0 0.0
        %1325 = vmatpush.msra.mxu0 %v858
        %1326 = vmatpush.msra.mxu0 %v856
        %1327 = vmatpush.msra.mxu0 %v854
        %1328 = vmatpush.msra.mxu0 %v852
        %1329 = vmatpush.msra.mxu0 %v850
        %1330 = vmatpush.msra.mxu0 %v848
        %1331 = vmatpush.msra.mxu0 %v846
        %1332 = vmatpush.msra.mxu0 %v844
        %1333 = vmatmul.f32.gmra.mxu0 %v1295
        %v1334 = vpop.f32.mrf.mxu0
        %v1335 = vadd.f32 0.0, %v1334
        %1336 = vdwg.mxu0
        %v1337 = vadd.f32 %v1288, %v1315
        %v1338 = vadd.f32 %v1289, %v1335
        %v1339 = vsel %vm690, %v1281, 0
        %1341 = vmatpush.msra.mxu0 0.0
        %1342 = vmatpush.msra.mxu0 0.0
        %1343 = vmatpush.msra.mxu0 0.0
        %1344 = vmatpush.msra.mxu0 0.0
        %1345 = vmatpush.msra.mxu0 0.0
        %1346 = vmatpush.msra.mxu0 0.0
        %1347 = vmatpush.msra.mxu0 0.0
        %1348 = vmatpush.msra.mxu0 0.0
        %1349 = vmatpush.msra.mxu0 %v873
        %1350 = vmatpush.msra.mxu0 %v871
        %1351 = vmatpush.msra.mxu0 %v869
        %1352 = vmatpush.msra.mxu0 %v867
        %1353 = vmatpush.msra.mxu0 %v865
        %1354 = vmatpush.msra.mxu0 %v863
        %1355 = vmatpush.msra.mxu0 %v861
        %1356 = vmatpush.msra.mxu0 %v859
        %1357 = vmatmul.f32.gmra.mxu0 %v1339
        %v1358 = vpop.f32.mrf.mxu0
        %v1359 = vadd.f32 0.0, %v1358
        %1360 = vdwg.mxu0
        %1361 = vmatpush.msra.mxu0 0.0
        %1362 = vmatpush.msra.mxu0 0.0
        %1363 = vmatpush.msra.mxu0 0.0
        %1364 = vmatpush.msra.mxu0 0.0
        %1365 = vmatpush.msra.mxu0 0.0
        %1366 = vmatpush.msra.mxu0 0.0
        %1367 = vmatpush.msra.mxu0 0.0
        %1368 = vmatpush.msra.mxu0 0.0
        %1369 = vmatpush.msra.mxu0 %v874
        %1370 = vmatpush.msra.mxu0 %v872
        %1371 = vmatpush.msra.mxu0 %v870
        %1372 = vmatpush.msra.mxu0 %v868
        %1373 = vmatpush.msra.mxu0 %v866
        %1374 = vmatpush.msra.mxu0 %v864
        %1375 = vmatpush.msra.mxu0 %v862
        %1376 = vmatpush.msra.mxu0 %v860
        %1377 = vmatmul.f32.gmra.mxu0 %v1339
        %v1378 = vpop.f32.mrf.mxu0
        %v1379 = vadd.f32 0.0, %v1378
        %1380 = vdwg.mxu0
        %v1381 = vadd.f32 %v1293, %v1359
        %v1382 = vadd.f32 %v1294, %v1379
        %v1383 = vxor.u32 %v1337, 2147483648
        %v1384 = vmul.f32 %v1383, 1.442695
        %v1385 = vpow.pop %v1384
        %v1386 = vadd.f32 %v1385, 1.0
        %v1387 = vrcp.pop %v1386
        %v1388 = vmul.f32 %v1386, %v1387
        %v1389 = vsub.f32 1.0, %v1388
        %v1390 = vmul.f32 %v1387, %v1389
        %v1391 = vadd.f32 %v1387, %v1390
        %vm1392 = vweird.f32 %v1386
        %vm1393 = vweird.f32 %v1387
        %vm1394 = vmor %vm1392, %vm1393
        %v1395 = vsel %vm1394, %v1387, %v1391
        %v1396 = vand.u32 2147483647, %v1386
        %vm1397 = vcmp.eq.f32.partialorder %v1396, 8.507059e+37
        %v1398 = vand.u32 %v1386, 2147483648
        %v1399 = vor.u32 1.1754944e-38, %v1398
        %v1400 = vsel %vm1397, %v1399, %v1395
        %v1401 = vmul.f32 1.0, %v1400
        %v1402 = vtanh.pop %v1338
        %v1403 = vxor.u32 %v1338, 2147483648
        %v1404 = vmul.f32 %v1403, 1.442695
        %v1405 = vpow.pop %v1404
        %v1406 = vadd.f32 %v1405, 1.0
        %v1407 = vrcp.pop %v1406
        %v1408 = vmul.f32 %v1406, %v1407
        %v1409 = vsub.f32 1.0, %v1408
        %v1410 = vmul.f32 %v1407, %v1409
        %v1411 = vadd.f32 %v1407, %v1410
        %vm1412 = vweird.f32 %v1406
        %vm1413 = vweird.f32 %v1407
        %vm1414 = vmor %vm1412, %vm1413
        %v1415 = vsel %vm1414, %v1407, %v1411
        %v1416 = vand.u32 2147483647, %v1406
        %vm1417 = vcmp.eq.f32.partialorder %v1416, 8.507059e+37
        %v1418 = vand.u32 %v1406, 2147483648
        %v1419 = vor.u32 1.1754944e-38, %v1418
        %v1420 = vsel %vm1417, %v1419, %v1415
        %v1421 = vmul.f32 1.0, %v1420
        %v1422 = vmul.f32 %v1401, %v1222
        %v1423 = vmul.f32 %v1401, %v1402
        %1425 = vrot.lane.b32.xlu0 %v1423, 64
        %v1426 = vpop.permute.xlu0 %1425
        %v1428 = vadd.f32 %v1422, %v1426
        %v1429 = vtanh.pop %v1428
        %v1430 = vmul.f32 %v1421, %v1429
        %v1431 = vxor.u32 %v1381, 2147483648
        %v1432 = vmul.f32 %v1431, 1.442695
        %v1433 = vpow.pop %v1432
        %v1434 = vadd.f32 %v1433, 1.0
        %v1435 = vrcp.pop %v1434
        %v1436 = vmul.f32 %v1434, %v1435
        %v1437 = vsub.f32 1.0, %v1436
        %v1438 = vmul.f32 %v1435, %v1437
        %v1439 = vadd.f32 %v1435, %v1438
        %vm1440 = vweird.f32 %v1434
        %vm1441 = vweird.f32 %v1435
        %vm1442 = vmor %vm1440, %vm1441
        %v1443 = vsel %vm1442, %v1435, %v1439
        %v1444 = vand.u32 2147483647, %v1434
        %vm1445 = vcmp.eq.f32.partialorder %v1444, 8.507059e+37
        %v1446 = vand.u32 %v1434, 2147483648
        %v1447 = vor.u32 1.1754944e-38, %v1446
        %v1448 = vsel %vm1445, %v1447, %v1443
        %v1449 = vmul.f32 1.0, %v1448
        %v1450 = vtanh.pop %v1382
        %v1451 = vxor.u32 %v1382, 2147483648
        %v1452 = vmul.f32 %v1451, 1.442695
        %v1453 = vpow.pop %v1452
        %v1454 = vadd.f32 %v1453, 1.0
        %v1455 = vrcp.pop %v1454
        %v1456 = vmul.f32 %v1454, %v1455
        %v1457 = vsub.f32 1.0, %v1456
        %v1458 = vmul.f32 %v1455, %v1457
        %v1459 = vadd.f32 %v1455, %v1458
        %vm1460 = vweird.f32 %v1454
        %vm1461 = vweird.f32 %v1455
        %vm1462 = vmor %vm1460, %vm1461
        %v1463 = vsel %vm1462, %v1455, %v1459
        %v1464 = vand.u32 2147483647, %v1454
        %vm1465 = vcmp.eq.f32.partialorder %v1464, 8.507059e+37
        %v1466 = vand.u32 %v1454, 2147483648
        %v1467 = vor.u32 1.1754944e-38, %v1466
        %v1468 = vsel %vm1465, %v1467, %v1463
        %v1469 = vmul.f32 1.0, %v1468
        %v1470 = vmul.f32 %v1449, %v1270
        %v1471 = vmul.f32 %v1449, %v1450
        %1473 = vrot.lane.b32.xlu0 %v1471, 64
        %v1474 = vpop.permute.xlu0 %1473
        %v1476 = vadd.f32 %v1470, %v1474
        %v1477 = vtanh.pop %v1476
        %v1478 = vmul.f32 %v1469, %v1477
        %1480 = vrot.lane.b32.xlu0 %v1430, 64
        %v1481 = vpop.permute.xlu0 %1480
        %s1483 = scalar_lea.vmem [#allocation3], 16
        %1484 = vst.msk [vmem:[%s1483] sm:$0xff] %vm690, %v1481
        %1486 = vrot.lane.b32.xlu0 %v1478, 64
        %v1487 = vpop.permute.xlu0 %1486
        %s1489 = scalar_lea.vmem [#allocation4], 32
        %1490 = vst.msk [vmem:[%s1489] sm:$0xff] %vm690, %v1487
        %s1491 = smul.u32 3, 4
        %s1492 = smul.addr %s1491, 8
        %s1493 = scalar_lea.vmem [#allocation2], %s1492
        %v1494 = vld [vmem:[%s1493] sm:$0xff]
        %v1495 = vld [vmem:[%s1493 + $0x8] sm:$0xff]
        %v1496 = vld [vmem:[%s1493 + $0x10] sm:$0xff]
        %v1497 = vld [vmem:[%s1493 + $0x18] sm:$0xff]
        %v1498 = vsel %vm690, %v1481, 0
        %1500 = vmatpush.msra.mxu0 0.0
        %1501 = vmatpush.msra.mxu0 0.0
        %1502 = vmatpush.msra.mxu0 0.0
        %1503 = vmatpush.msra.mxu0 0.0
        %1504 = vmatpush.msra.mxu0 0.0
        %1505 = vmatpush.msra.mxu0 0.0
        %1506 = vmatpush.msra.mxu0 0.0
        %1507 = vmatpush.msra.mxu0 0.0
        %1508 = vmatpush.msra.mxu0 %v857
        %1509 = vmatpush.msra.mxu0 %v855
        %1510 = vmatpush.msra.mxu0 %v853
        %1511 = vmatpush.msra.mxu0 %v851
        %1512 = vmatpush.msra.mxu0 %v849
        %1513 = vmatpush.msra.mxu0 %v847
        %1514 = vmatpush.msra.mxu0 %v845
        %1515 = vmatpush.msra.mxu0 %v843
        %1516 = vmatmul.f32.gmra.mxu0 %v1498
        %v1517 = vpop.f32.mrf.mxu0
        %v1518 = vadd.f32 0.0, %v1517
        %1519 = vdwg.mxu0
        %1520 = vmatpush.msra.mxu0 0.0
        %1521 = vmatpush.msra.mxu0 0.0
        %1522 = vmatpush.msra.mxu0 0.0
        %1523 = vmatpush.msra.mxu0 0.0
        %1524 = vmatpush.msra.mxu0 0.0
        %1525 = vmatpush.msra.mxu0 0.0
        %1526 = vmatpush.msra.mxu0 0.0
        %1527 = vmatpush.msra.mxu0 0.0
        %1528 = vmatpush.msra.mxu0 %v858
        %1529 = vmatpush.msra.mxu0 %v856
        %1530 = vmatpush.msra.mxu0 %v854
        %1531 = vmatpush.msra.mxu0 %v852
        %1532 = vmatpush.msra.mxu0 %v850
        %1533 = vmatpush.msra.mxu0 %v848
        %1534 = vmatpush.msra.mxu0 %v846
        %1535 = vmatpush.msra.mxu0 %v844
        %1536 = vmatmul.f32.gmra.mxu0 %v1498
        %v1537 = vpop.f32.mrf.mxu0
        %v1538 = vadd.f32 0.0, %v1537
        %1539 = vdwg.mxu0
        %v1540 = vadd.f32 %v1494, %v1518
        %v1541 = vadd.f32 %v1495, %v1538
        %v1542 = vsel %vm690, %v1487, 0
        %1544 = vmatpush.msra.mxu0 0.0
        %1545 = vmatpush.msra.mxu0 0.0
        %1546 = vmatpush.msra.mxu0 0.0
        %1547 = vmatpush.msra.mxu0 0.0
        %1548 = vmatpush.msra.mxu0 0.0
        %1549 = vmatpush.msra.mxu0 0.0
        %1550 = vmatpush.msra.mxu0 0.0
        %1551 = vmatpush.msra.mxu0 0.0
        %1552 = vmatpush.msra.mxu0 %v873
        %1553 = vmatpush.msra.mxu0 %v871
        %1554 = vmatpush.msra.mxu0 %v869
        %1555 = vmatpush.msra.mxu0 %v867
        %1556 = vmatpush.msra.mxu0 %v865
        %1557 = vmatpush.msra.mxu0 %v863
        %1558 = vmatpush.msra.mxu0 %v861
        %1559 = vmatpush.msra.mxu0 %v859
        %1560 = vmatmul.f32.gmra.mxu0 %v1542
        %v1561 = vpop.f32.mrf.mxu0
        %v1562 = vadd.f32 0.0, %v1561
        %1563 = vdwg.mxu0
        %1564 = vmatpush.msra.mxu0 0.0
        %1565 = vmatpush.msra.mxu0 0.0
        %1566 = vmatpush.msra.mxu0 0.0
        %1567 = vmatpush.msra.mxu0 0.0
        %1568 = vmatpush.msra.mxu0 0.0
        %1569 = vmatpush.msra.mxu0 0.0
        %1570 = vmatpush.msra.mxu0 0.0
        %1571 = vmatpush.msra.mxu0 0.0
        %1572 = vmatpush.msra.mxu0 %v874
        %1573 = vmatpush.msra.mxu0 %v872
        %1574 = vmatpush.msra.mxu0 %v870
        %1575 = vmatpush.msra.mxu0 %v868
        %1576 = vmatpush.msra.mxu0 %v866
        %1577 = vmatpush.msra.mxu0 %v864
        %1578 = vmatpush.msra.mxu0 %v862
        %1579 = vmatpush.msra.mxu0 %v860
        %1580 = vmatmul.f32.gmra.mxu0 %v1542
        %v1581 = vpop.f32.mrf.mxu0
        %v1582 = vadd.f32 0.0, %v1581
        %1583 = vdwg.mxu0
        %v1584 = vadd.f32 %v1496, %v1562
        %v1585 = vadd.f32 %v1497, %v1582
        %v1586 = vxor.u32 %v1540, 2147483648
        %v1587 = vmul.f32 %v1586, 1.442695
        %v1588 = vpow.pop %v1587
        %v1589 = vadd.f32 %v1588, 1.0
        %v1590 = vrcp.pop %v1589
        %v1591 = vmul.f32 %v1589, %v1590
        %v1592 = vsub.f32 1.0, %v1591
        %v1593 = vmul.f32 %v1590, %v1592
        %v1594 = vadd.f32 %v1590, %v1593
        %vm1595 = vweird.f32 %v1589
        %vm1596 = vweird.f32 %v1590
        %vm1597 = vmor %vm1595, %vm1596
        %v1598 = vsel %vm1597, %v1590, %v1594
        %v1599 = vand.u32 2147483647, %v1589
        %vm1600 = vcmp.eq.f32.partialorder %v1599, 8.507059e+37
        %v1601 = vand.u32 %v1589, 2147483648
        %v1602 = vor.u32 1.1754944e-38, %v1601
        %v1603 = vsel %vm1600, %v1602, %v1598
        %v1604 = vmul.f32 1.0, %v1603
        %v1605 = vtanh.pop %v1541
        %v1606 = vxor.u32 %v1541, 2147483648
        %v1607 = vmul.f32 %v1606, 1.442695
        %v1608 = vpow.pop %v1607
        %v1609 = vadd.f32 %v1608, 1.0
        %v1610 = vrcp.pop %v1609
        %v1611 = vmul.f32 %v1609, %v1610
        %v1612 = vsub.f32 1.0, %v1611
        %v1613 = vmul.f32 %v1610, %v1612
        %v1614 = vadd.f32 %v1610, %v1613
        %vm1615 = vweird.f32 %v1609
        %vm1616 = vweird.f32 %v1610
        %vm1617 = vmor %vm1615, %vm1616
        %v1618 = vsel %vm1617, %v1610, %v1614
        %v1619 = vand.u32 2147483647, %v1609
        %vm1620 = vcmp.eq.f32.partialorder %v1619, 8.507059e+37
        %v1621 = vand.u32 %v1609, 2147483648
        %v1622 = vor.u32 1.1754944e-38, %v1621
        %v1623 = vsel %vm1620, %v1622, %v1618
        %v1624 = vmul.f32 1.0, %v1623
        %v1625 = vmul.f32 %v1604, %v1428
        %v1626 = vmul.f32 %v1604, %v1605
        %1628 = vrot.lane.b32.xlu0 %v1626, 64
        %v1629 = vpop.permute.xlu0 %1628
        %v1631 = vadd.f32 %v1625, %v1629
        %v1632 = vtanh.pop %v1631
        %v1633 = vmul.f32 %v1624, %v1632
        %v1634 = vxor.u32 %v1584, 2147483648
        %v1635 = vmul.f32 %v1634, 1.442695
        %v1636 = vpow.pop %v1635
        %v1637 = vadd.f32 %v1636, 1.0
        %v1638 = vrcp.pop %v1637
        %v1639 = vmul.f32 %v1637, %v1638
        %v1640 = vsub.f32 1.0, %v1639
        %v1641 = vmul.f32 %v1638, %v1640
        %v1642 = vadd.f32 %v1638, %v1641
        %vm1643 = vweird.f32 %v1637
        %vm1644 = vweird.f32 %v1638
        %vm1645 = vmor %vm1643, %vm1644
        %v1646 = vsel %vm1645, %v1638, %v1642
        %v1647 = vand.u32 2147483647, %v1637
        %vm1648 = vcmp.eq.f32.partialorder %v1647, 8.507059e+37
        %v1649 = vand.u32 %v1637, 2147483648
        %v1650 = vor.u32 1.1754944e-38, %v1649
        %v1651 = vsel %vm1648, %v1650, %v1646
        %v1652 = vmul.f32 1.0, %v1651
        %v1653 = vtanh.pop %v1585
        %v1654 = vxor.u32 %v1585, 2147483648
        %v1655 = vmul.f32 %v1654, 1.442695
        %v1656 = vpow.pop %v1655
        %v1657 = vadd.f32 %v1656, 1.0
        %v1658 = vrcp.pop %v1657
        %v1659 = vmul.f32 %v1657, %v1658
        %v1660 = vsub.f32 1.0, %v1659
        %v1661 = vmul.f32 %v1658, %v1660
        %v1662 = vadd.f32 %v1658, %v1661
        %vm1663 = vweird.f32 %v1657
        %vm1664 = vweird.f32 %v1658
        %vm1665 = vmor %vm1663, %vm1664
        %v1666 = vsel %vm1665, %v1658, %v1662
        %v1667 = vand.u32 2147483647, %v1657
        %vm1668 = vcmp.eq.f32.partialorder %v1667, 8.507059e+37
        %v1669 = vand.u32 %v1657, 2147483648
        %v1670 = vor.u32 1.1754944e-38, %v1669
        %v1671 = vsel %vm1668, %v1670, %v1666
        %v1672 = vmul.f32 1.0, %v1671
        %v1673 = vmul.f32 %v1652, %v1476
        %v1674 = vmul.f32 %v1652, %v1653
        %1676 = vrot.lane.b32.xlu0 %v1674, 64
        %v1677 = vpop.permute.xlu0 %1676
        %v1679 = vadd.f32 %v1673, %v1677
        %v1680 = vtanh.pop %v1679
        %v1681 = vmul.f32 %v1672, %v1680
        %1683 = vrot.lane.b32.xlu0 %v1633, 64
        %v1684 = vpop.permute.xlu0 %1683
        %s1686 = scalar_lea.vmem [#allocation3], 24
        %1687 = vst.msk [vmem:[%s1686] sm:$0xff] %vm690, %v1684
        %1689 = vrot.lane.b32.xlu0 %v1681, 64
        %v1690 = vpop.permute.xlu0 %1689
        %s1692 = scalar_lea.vmem [#allocation4], 24
        %1693 = vst.msk [vmem:[%s1692] sm:$0xff] %vm690, %v1690
        %v1694 = vld [vmem:[%s1292] sm:$0xff]
        %v1695 = vld [vmem:[%s1292 + $0x8] sm:$0xff]
        %v1696 = vld [vmem:[%s1287 + $0x10] sm:$0xff]
        %v1697 = vld [vmem:[%s1287 + $0x18] sm:$0xff]
        %v1698 = vsel %vm690, %v1684, 0
        %1700 = vmatpush.msra.mxu0 0.0
        %1701 = vmatpush.msra.mxu0 0.0
        %1702 = vmatpush.msra.mxu0 0.0
        %1703 = vmatpush.msra.mxu0 0.0
        %1704 = vmatpush.msra.mxu0 0.0
        %1705 = vmatpush.msra.mxu0 0.0
        %1706 = vmatpush.msra.mxu0 0.0
        %1707 = vmatpush.msra.mxu0 0.0
        %1708 = vmatpush.msra.mxu0 %v857
        %1709 = vmatpush.msra.mxu0 %v855
        %1710 = vmatpush.msra.mxu0 %v853
        %1711 = vmatpush.msra.mxu0 %v851
        %1712 = vmatpush.msra.mxu0 %v849
        %1713 = vmatpush.msra.mxu0 %v847
        %1714 = vmatpush.msra.mxu0 %v845
        %1715 = vmatpush.msra.mxu0 %v843
        %1716 = vmatmul.f32.gmra.mxu0 %v1698
        %v1717 = vpop.f32.mrf.mxu0
        %v1718 = vadd.f32 0.0, %v1717
        %1719 = vdwg.mxu0
        %1720 = vmatpush.msra.mxu0 0.0
        %1721 = vmatpush.msra.mxu0 0.0
        %1722 = vmatpush.msra.mxu0 0.0
        %1723 = vmatpush.msra.mxu0 0.0
        %1724 = vmatpush.msra.mxu0 0.0
        %1725 = vmatpush.msra.mxu0 0.0
        %1726 = vmatpush.msra.mxu0 0.0
        %1727 = vmatpush.msra.mxu0 0.0
        %1728 = vmatpush.msra.mxu0 %v858
        %1729 = vmatpush.msra.mxu0 %v856
        %1730 = vmatpush.msra.mxu0 %v854
        %1731 = vmatpush.msra.mxu0 %v852
        %1732 = vmatpush.msra.mxu0 %v850
        %1733 = vmatpush.msra.mxu0 %v848
        %1734 = vmatpush.msra.mxu0 %v846
        %1735 = vmatpush.msra.mxu0 %v844
        %1736 = vmatmul.f32.gmra.mxu0 %v1698
        %v1737 = vpop.f32.mrf.mxu0
        %v1738 = vadd.f32 0.0, %v1737
        %1739 = vdwg.mxu0
        %v1740 = vadd.f32 %v1694, %v1718
        %v1741 = vadd.f32 %v1695, %v1738
        %v1742 = vsel %vm690, %v1690, 0
        %1744 = vmatpush.msra.mxu0 0.0
        %1745 = vmatpush.msra.mxu0 0.0
        %1746 = vmatpush.msra.mxu0 0.0
        %1747 = vmatpush.msra.mxu0 0.0
        %1748 = vmatpush.msra.mxu0 0.0
        %1749 = vmatpush.msra.mxu0 0.0
        %1750 = vmatpush.msra.mxu0 0.0
        %1751 = vmatpush.msra.mxu0 0.0
        %1752 = vmatpush.msra.mxu0 %v873
        %1753 = vmatpush.msra.mxu0 %v871
        %1754 = vmatpush.msra.mxu0 %v869
        %1755 = vmatpush.msra.mxu0 %v867
        %1756 = vmatpush.msra.mxu0 %v865
        %1757 = vmatpush.msra.mxu0 %v863
        %1758 = vmatpush.msra.mxu0 %v861
        %1759 = vmatpush.msra.mxu0 %v859
        %1760 = vmatmul.f32.gmra.mxu0 %v1742
        %v1761 = vpop.f32.mrf.mxu0
        %v1762 = vadd.f32 0.0, %v1761
        %1763 = vdwg.mxu0
        %1764 = vmatpush.msra.mxu0 0.0
        %1765 = vmatpush.msra.mxu0 0.0
        %1766 = vmatpush.msra.mxu0 0.0
        %1767 = vmatpush.msra.mxu0 0.0
        %1768 = vmatpush.msra.mxu0 0.0
        %1769 = vmatpush.msra.mxu0 0.0
        %1770 = vmatpush.msra.mxu0 0.0
        %1771 = vmatpush.msra.mxu0 0.0
        %1772 = vmatpush.msra.mxu0 %v874
        %1773 = vmatpush.msra.mxu0 %v872
        %1774 = vmatpush.msra.mxu0 %v870
        %1775 = vmatpush.msra.mxu0 %v868
        %1776 = vmatpush.msra.mxu0 %v866
        %1777 = vmatpush.msra.mxu0 %v864
        %1778 = vmatpush.msra.mxu0 %v862
        %1779 = vmatpush.msra.mxu0 %v860
        %1780 = vmatmul.f32.gmra.mxu0 %v1742
        %v1781 = vpop.f32.mrf.mxu0
        %v1782 = vadd.f32 0.0, %v1781
        %1783 = vdwg.mxu0
        %v1784 = vadd.f32 %v1696, %v1762
        %v1785 = vadd.f32 %v1697, %v1782
        %v1786 = vxor.u32 %v1740, 2147483648
        %v1787 = vmul.f32 %v1786, 1.442695
        %v1788 = vpow.pop %v1787
        %v1789 = vadd.f32 %v1788, 1.0
        %v1790 = vrcp.pop %v1789
        %v1791 = vmul.f32 %v1789, %v1790
        %v1792 = vsub.f32 1.0, %v1791
        %v1793 = vmul.f32 %v1790, %v1792
        %v1794 = vadd.f32 %v1790, %v1793
        %vm1795 = vweird.f32 %v1789
        %vm1796 = vweird.f32 %v1790
        %vm1797 = vmor %vm1795, %vm1796
        %v1798 = vsel %vm1797, %v1790, %v1794
        %v1799 = vand.u32 2147483647, %v1789
        %vm1800 = vcmp.eq.f32.partialorder %v1799, 8.507059e+37
        %v1801 = vand.u32 %v1789, 2147483648
        %v1802 = vor.u32 1.1754944e-38, %v1801
        %v1803 = vsel %vm1800, %v1802, %v1798
        %v1804 = vmul.f32 1.0, %v1803
        %v1805 = vtanh.pop %v1741
        %v1806 = vxor.u32 %v1741, 2147483648
        %v1807 = vmul.f32 %v1806, 1.442695
        %v1808 = vpow.pop %v1807
        %v1809 = vadd.f32 %v1808, 1.0
        %v1810 = vrcp.pop %v1809
        %v1811 = vmul.f32 %v1809, %v1810
        %v1812 = vsub.f32 1.0, %v1811
        %v1813 = vmul.f32 %v1810, %v1812
        %v1814 = vadd.f32 %v1810, %v1813
        %vm1815 = vweird.f32 %v1809
        %vm1816 = vweird.f32 %v1810
        %vm1817 = vmor %vm1815, %vm1816
        %v1818 = vsel %vm1817, %v1810, %v1814
        %v1819 = vand.u32 2147483647, %v1809
        %vm1820 = vcmp.eq.f32.partialorder %v1819, 8.507059e+37
        %v1821 = vand.u32 %v1809, 2147483648
        %v1822 = vor.u32 1.1754944e-38, %v1821
        %v1823 = vsel %vm1820, %v1822, %v1818
        %v1824 = vmul.f32 1.0, %v1823
        %v1825 = vmul.f32 %v1804, %v1631
        %v1826 = vmul.f32 %v1804, %v1805
        %1828 = vrot.lane.b32.xlu0 %v1826, 64
        %v1829 = vpop.permute.xlu0 %1828
        %v1831 = vadd.f32 %v1825, %v1829
        %v1832 = vtanh.pop %v1831
        %v1833 = vmul.f32 %v1824, %v1832
        %v1834 = vxor.u32 %v1784, 2147483648
        %v1835 = vmul.f32 %v1834, 1.442695
        %v1836 = vpow.pop %v1835
        %v1837 = vadd.f32 %v1836, 1.0
        %v1838 = vrcp.pop %v1837
        %v1839 = vmul.f32 %v1837, %v1838
        %v1840 = vsub.f32 1.0, %v1839
        %v1841 = vmul.f32 %v1838, %v1840
        %v1842 = vadd.f32 %v1838, %v1841
        %vm1843 = vweird.f32 %v1837
        %vm1844 = vweird.f32 %v1838
        %vm1845 = vmor %vm1843, %vm1844
        %v1846 = vsel %vm1845, %v1838, %v1842
        %v1847 = vand.u32 2147483647, %v1837
        %vm1848 = vcmp.eq.f32.partialorder %v1847, 8.507059e+37
        %v1849 = vand.u32 %v1837, 2147483648
        %v1850 = vor.u32 1.1754944e-38, %v1849
        %v1851 = vsel %vm1848, %v1850, %v1846
        %v1852 = vmul.f32 1.0, %v1851
        %v1853 = vtanh.pop %v1785
        %v1854 = vxor.u32 %v1785, 2147483648
        %v1855 = vmul.f32 %v1854, 1.442695
        %v1856 = vpow.pop %v1855
        %v1857 = vadd.f32 %v1856, 1.0
        %v1858 = vrcp.pop %v1857
        %v1859 = vmul.f32 %v1857, %v1858
        %v1860 = vsub.f32 1.0, %v1859
        %v1861 = vmul.f32 %v1858, %v1860
        %v1862 = vadd.f32 %v1858, %v1861
        %vm1863 = vweird.f32 %v1857
        %vm1864 = vweird.f32 %v1858
        %vm1865 = vmor %vm1863, %vm1864
        %v1866 = vsel %vm1865, %v1858, %v1862
        %v1867 = vand.u32 2147483647, %v1857
        %vm1868 = vcmp.eq.f32.partialorder %v1867, 8.507059e+37
        %v1869 = vand.u32 %v1857, 2147483648
        %v1870 = vor.u32 1.1754944e-38, %v1869
        %v1871 = vsel %vm1868, %v1870, %v1866
        %v1872 = vmul.f32 1.0, %v1871
        %v1873 = vmul.f32 %v1852, %v1679
        %v1874 = vmul.f32 %v1852, %v1853
        %1876 = vrot.lane.b32.xlu0 %v1874, 64
        %v1877 = vpop.permute.xlu0 %1876
        %v1879 = vadd.f32 %v1873, %v1877
        %v1880 = vtanh.pop %v1879
        %v1881 = vmul.f32 %v1872, %v1880
        %1883 = vrot.lane.b32.xlu0 %v1833, 64
        %v1884 = vpop.permute.xlu0 %1883
        %s1886 = scalar_lea.vmem [#allocation3], 32
        %1887 = vst.msk [vmem:[%s1886] sm:$0xff] %vm690, %v1884
        %1889 = vrot.lane.b32.xlu0 %v1881, 64
        %v1890 = vpop.permute.xlu0 %1889
        %s1892 = scalar_lea.vmem [#allocation4], 16
        %1893 = vst.msk [vmem:[%s1892] sm:$0xff] %vm690, %v1890
        %v1894 = vld [vmem:[%s1086] sm:$0xff]
        %v1895 = vld [vmem:[%s1086 + $0x8] sm:$0xff]
        %v1896 = vld [vmem:[%s1081 + $0x10] sm:$0xff]
        %v1897 = vld [vmem:[%s1081 + $0x18] sm:$0xff]
        %v1898 = vsel %vm690, %v1884, 0
        %1900 = vmatpush.msra.mxu0 0.0
        %1901 = vmatpush.msra.mxu0 0.0
        %1902 = vmatpush.msra.mxu0 0.0
        %1903 = vmatpush.msra.mxu0 0.0
        %1904 = vmatpush.msra.mxu0 0.0
        %1905 = vmatpush.msra.mxu0 0.0
        %1906 = vmatpush.msra.mxu0 0.0
        %1907 = vmatpush.msra.mxu0 0.0
        %1908 = vmatpush.msra.mxu0 %v857
        %1909 = vmatpush.msra.mxu0 %v855
        %1910 = vmatpush.msra.mxu0 %v853
        %1911 = vmatpush.msra.mxu0 %v851
        %1912 = vmatpush.msra.mxu0 %v849
        %1913 = vmatpush.msra.mxu0 %v847
        %1914 = vmatpush.msra.mxu0 %v845
        %1915 = vmatpush.msra.mxu0 %v843
        %1916 = vmatmul.f32.gmra.mxu0 %v1898
        %v1917 = vpop.f32.mrf.mxu0
        %v1918 = vadd.f32 0.0, %v1917
        %1919 = vdwg.mxu0
        %1920 = vmatpush.msra.mxu0 0.0
        %1921 = vmatpush.msra.mxu0 0.0
        %1922 = vmatpush.msra.mxu0 0.0
        %1923 = vmatpush.msra.mxu0 0.0
        %1924 = vmatpush.msra.mxu0 0.0
        %1925 = vmatpush.msra.mxu0 0.0
        %1926 = vmatpush.msra.mxu0 0.0
        %1927 = vmatpush.msra.mxu0 0.0
        %1928 = vmatpush.msra.mxu0 %v858
        %1929 = vmatpush.msra.mxu0 %v856
        %1930 = vmatpush.msra.mxu0 %v854
        %1931 = vmatpush.msra.mxu0 %v852
        %1932 = vmatpush.msra.mxu0 %v850
        %1933 = vmatpush.msra.mxu0 %v848
        %1934 = vmatpush.msra.mxu0 %v846
        %1935 = vmatpush.msra.mxu0 %v844
        %1936 = vmatmul.f32.gmra.mxu0 %v1898
        %v1937 = vpop.f32.mrf.mxu0
        %v1938 = vadd.f32 0.0, %v1937
        %1939 = vdwg.mxu0
        %v1940 = vadd.f32 %v1894, %v1918
        %v1941 = vadd.f32 %v1895, %v1938
        %v1942 = vsel %vm690, %v1890, 0
        %1944 = vmatpush.msra.mxu0 0.0
        %1945 = vmatpush.msra.mxu0 0.0
        %1946 = vmatpush.msra.mxu0 0.0
        %1947 = vmatpush.msra.mxu0 0.0
        %1948 = vmatpush.msra.mxu0 0.0
        %1949 = vmatpush.msra.mxu0 0.0
        %1950 = vmatpush.msra.mxu0 0.0
        %1951 = vmatpush.msra.mxu0 0.0
        %1952 = vmatpush.msra.mxu0 %v873
        %1953 = vmatpush.msra.mxu0 %v871
        %1954 = vmatpush.msra.mxu0 %v869
        %1955 = vmatpush.msra.mxu0 %v867
        %1956 = vmatpush.msra.mxu0 %v865
        %1957 = vmatpush.msra.mxu0 %v863
        %1958 = vmatpush.msra.mxu0 %v861
        %1959 = vmatpush.msra.mxu0 %v859
        %1960 = vmatmul.f32.gmra.mxu0 %v1942
        %v1961 = vpop.f32.mrf.mxu0
        %v1962 = vadd.f32 0.0, %v1961
        %1963 = vdwg.mxu0
        %1964 = vmatpush.msra.mxu0 0.0
        %1965 = vmatpush.msra.mxu0 0.0
        %1966 = vmatpush.msra.mxu0 0.0
        %1967 = vmatpush.msra.mxu0 0.0
        %1968 = vmatpush.msra.mxu0 0.0
        %1969 = vmatpush.msra.mxu0 0.0
        %1970 = vmatpush.msra.mxu0 0.0
        %1971 = vmatpush.msra.mxu0 0.0
        %1972 = vmatpush.msra.mxu0 %v874
        %1973 = vmatpush.msra.mxu0 %v872
        %1974 = vmatpush.msra.mxu0 %v870
        %1975 = vmatpush.msra.mxu0 %v868
        %1976 = vmatpush.msra.mxu0 %v866
        %1977 = vmatpush.msra.mxu0 %v864
        %1978 = vmatpush.msra.mxu0 %v862
        %1979 = vmatpush.msra.mxu0 %v860
        %1980 = vmatmul.f32.gmra.mxu0 %v1942
        %v1981 = vpop.f32.mrf.mxu0
        %v1982 = vadd.f32 0.0, %v1981
        %1983 = vdwg.mxu0
        %v1984 = vadd.f32 %v1896, %v1962
        %v1985 = vadd.f32 %v1897, %v1982
        %v1986 = vxor.u32 %v1940, 2147483648
        %v1987 = vmul.f32 %v1986, 1.442695
        %v1988 = vpow.pop %v1987
        %v1989 = vadd.f32 %v1988, 1.0
        %v1990 = vrcp.pop %v1989
        %v1991 = vmul.f32 %v1989, %v1990
        %v1992 = vsub.f32 1.0, %v1991
        %v1993 = vmul.f32 %v1990, %v1992
        %v1994 = vadd.f32 %v1990, %v1993
        %vm1995 = vweird.f32 %v1989
        %vm1996 = vweird.f32 %v1990
        %vm1997 = vmor %vm1995, %vm1996
        %v1998 = vsel %vm1997, %v1990, %v1994
        %v1999 = vand.u32 2147483647, %v1989
        %vm2000 = vcmp.eq.f32.partialorder %v1999, 8.507059e+37
        %v2001 = vand.u32 %v1989, 2147483648
        %v2002 = vor.u32 1.1754944e-38, %v2001
        %v2003 = vsel %vm2000, %v2002, %v1998
        %v2004 = vmul.f32 1.0, %v2003
        %v2005 = vtanh.pop %v1941
        %v2006 = vxor.u32 %v1941, 2147483648
        %v2007 = vmul.f32 %v2006, 1.442695
        %v2008 = vpow.pop %v2007
        %v2009 = vadd.f32 %v2008, 1.0
        %v2010 = vrcp.pop %v2009
        %v2011 = vmul.f32 %v2009, %v2010
        %v2012 = vsub.f32 1.0, %v2011
        %v2013 = vmul.f32 %v2010, %v2012
        %v2014 = vadd.f32 %v2010, %v2013
        %vm2015 = vweird.f32 %v2009
        %vm2016 = vweird.f32 %v2010
        %vm2017 = vmor %vm2015, %vm2016
        %v2018 = vsel %vm2017, %v2010, %v2014
        %v2019 = vand.u32 2147483647, %v2009
        %vm2020 = vcmp.eq.f32.partialorder %v2019, 8.507059e+37
        %v2021 = vand.u32 %v2009, 2147483648
        %v2022 = vor.u32 1.1754944e-38, %v2021
        %v2023 = vsel %vm2020, %v2022, %v2018
        %v2024 = vmul.f32 1.0, %v2023
        %v2025 = vmul.f32 %v2004, %v1831
        %v2026 = vmul.f32 %v2004, %v2005
        %2028 = vrot.lane.b32.xlu0 %v2026, 64
        %v2029 = vpop.permute.xlu0 %2028
        %v2031 = vadd.f32 %v2025, %v2029
        %v2032 = vtanh.pop %v2031
        %v2033 = vmul.f32 %v2024, %v2032
        %v2034 = vxor.u32 %v1984, 2147483648
        %v2035 = vmul.f32 %v2034, 1.442695
        %v2036 = vpow.pop %v2035
        %v2037 = vadd.f32 %v2036, 1.0
        %v2038 = vrcp.pop %v2037
        %v2039 = vmul.f32 %v2037, %v2038
        %v2040 = vsub.f32 1.0, %v2039
        %v2041 = vmul.f32 %v2038, %v2040
        %v2042 = vadd.f32 %v2038, %v2041
        %vm2043 = vweird.f32 %v2037
        %vm2044 = vweird.f32 %v2038
        %vm2045 = vmor %vm2043, %vm2044
        %v2046 = vsel %vm2045, %v2038, %v2042
        %v2047 = vand.u32 2147483647, %v2037
        %vm2048 = vcmp.eq.f32.partialorder %v2047, 8.507059e+37
        %v2049 = vand.u32 %v2037, 2147483648
        %v2050 = vor.u32 1.1754944e-38, %v2049
        %v2051 = vsel %vm2048, %v2050, %v2046
        %v2052 = vmul.f32 1.0, %v2051
        %v2053 = vtanh.pop %v1985
        %v2054 = vxor.u32 %v1985, 2147483648
        %v2055 = vmul.f32 %v2054, 1.442695
        %v2056 = vpow.pop %v2055
        %v2057 = vadd.f32 %v2056, 1.0
        %v2058 = vrcp.pop %v2057
        %v2059 = vmul.f32 %v2057, %v2058
        %v2060 = vsub.f32 1.0, %v2059
        %v2061 = vmul.f32 %v2058, %v2060
        %v2062 = vadd.f32 %v2058, %v2061
        %vm2063 = vweird.f32 %v2057
        %vm2064 = vweird.f32 %v2058
        %vm2065 = vmor %vm2063, %vm2064
        %v2066 = vsel %vm2065, %v2058, %v2062
        %v2067 = vand.u32 2147483647, %v2057
        %vm2068 = vcmp.eq.f32.partialorder %v2067, 8.507059e+37
        %v2069 = vand.u32 %v2057, 2147483648
        %v2070 = vor.u32 1.1754944e-38, %v2069
        %v2071 = vsel %vm2068, %v2070, %v2066
        %v2072 = vmul.f32 1.0, %v2071
        %v2073 = vmul.f32 %v2052, %v1879
        %v2074 = vmul.f32 %v2052, %v2053
        %2076 = vrot.lane.b32.xlu0 %v2074, 64
        %v2077 = vpop.permute.xlu0 %2076
        %v2079 = vadd.f32 %v2073, %v2077
        %v2080 = vtanh.pop %v2079
        %v2081 = vmul.f32 %v2072, %v2080
        %2083 = vrot.lane.b32.xlu0 %v2033, 64
        %v2084 = vpop.permute.xlu0 %2083
        %s2086 = scalar_lea.vmem [#allocation3], 40
        %2087 = vst.msk [vmem:[%s2086] sm:$0xff] %vm690, %v2084
        %2089 = vrot.lane.b32.xlu0 %v2081, 64
        %v2090 = vpop.permute.xlu0 %2089
        %s2092 = scalar_lea.vmem [#allocation4], 8
        %2093 = vst.msk [vmem:[%s2092] sm:$0xff] %vm690, %v2090
        %v2094 = vld [vmem:[%s882] sm:$0xff]
        %v2095 = vld [vmem:[%s882 + $0x8] sm:$0xff]
        %v2096 = vld [vmem:[%s877 + $0x10] sm:$0xff]
        %v2097 = vld [vmem:[%s877 + $0x18] sm:$0xff]
        %v2098 = vsel %vm690, %v2084, 0
        %2100 = vmatpush.msra.mxu0 0.0
        %2101 = vmatpush.msra.mxu0 0.0
        %2102 = vmatpush.msra.mxu0 0.0
        %2103 = vmatpush.msra.mxu0 0.0
        %2104 = vmatpush.msra.mxu0 0.0
        %2105 = vmatpush.msra.mxu0 0.0
        %2106 = vmatpush.msra.mxu0 0.0
        %2107 = vmatpush.msra.mxu0 0.0
        %2108 = vmatpush.msra.mxu0 %v857
        %2109 = vmatpush.msra.mxu0 %v855
        %2110 = vmatpush.msra.mxu0 %v853
        %2111 = vmatpush.msra.mxu0 %v851
        %2112 = vmatpush.msra.mxu0 %v849
        %2113 = vmatpush.msra.mxu0 %v847
        %2114 = vmatpush.msra.mxu0 %v845
        %2115 = vmatpush.msra.mxu0 %v843
        %2116 = vmatmul.f32.gmra.mxu0 %v2098
        %v2117 = vpop.f32.mrf.mxu0
        %v2118 = vadd.f32 0.0, %v2117
        %2119 = vdwg.mxu0
        %2120 = vmatpush.msra.mxu0 0.0
        %2121 = vmatpush.msra.mxu0 0.0
        %2122 = vmatpush.msra.mxu0 0.0
        %2123 = vmatpush.msra.mxu0 0.0
        %2124 = vmatpush.msra.mxu0 0.0
        %2125 = vmatpush.msra.mxu0 0.0
        %2126 = vmatpush.msra.mxu0 0.0
        %2127 = vmatpush.msra.mxu0 0.0
        %2128 = vmatpush.msra.mxu0 %v858
        %2129 = vmatpush.msra.mxu0 %v856
        %2130 = vmatpush.msra.mxu0 %v854
        %2131 = vmatpush.msra.mxu0 %v852
        %2132 = vmatpush.msra.mxu0 %v850
        %2133 = vmatpush.msra.mxu0 %v848
        %2134 = vmatpush.msra.mxu0 %v846
        %2135 = vmatpush.msra.mxu0 %v844
        %2136 = vmatmul.f32.gmra.mxu0 %v2098
        %v2137 = vpop.f32.mrf.mxu0
        %v2138 = vadd.f32 0.0, %v2137
        %2139 = vdwg.mxu0
        %v2140 = vadd.f32 %v2094, %v2118
        %v2141 = vadd.f32 %v2095, %v2138
        %v2142 = vsel %vm690, %v2090, 0
        %2144 = vmatpush.msra.mxu0 0.0
        %2145 = vmatpush.msra.mxu0 0.0
        %2146 = vmatpush.msra.mxu0 0.0
        %2147 = vmatpush.msra.mxu0 0.0
        %2148 = vmatpush.msra.mxu0 0.0
        %2149 = vmatpush.msra.mxu0 0.0
        %2150 = vmatpush.msra.mxu0 0.0
        %2151 = vmatpush.msra.mxu0 0.0
        %2152 = vmatpush.msra.mxu0 %v873
        %2153 = vmatpush.msra.mxu0 %v871
        %2154 = vmatpush.msra.mxu0 %v869
        %2155 = vmatpush.msra.mxu0 %v867
        %2156 = vmatpush.msra.mxu0 %v865
        %2157 = vmatpush.msra.mxu0 %v863
        %2158 = vmatpush.msra.mxu0 %v861
        %2159 = vmatpush.msra.mxu0 %v859
        %2160 = vmatmul.f32.gmra.mxu0 %v2142
        %v2161 = vpop.f32.mrf.mxu0
        %v2162 = vadd.f32 0.0, %v2161
        %2163 = vdwg.mxu0
        %2164 = vmatpush.msra.mxu0 0.0
        %2165 = vmatpush.msra.mxu0 0.0
        %2166 = vmatpush.msra.mxu0 0.0
        %2167 = vmatpush.msra.mxu0 0.0
        %2168 = vmatpush.msra.mxu0 0.0
        %2169 = vmatpush.msra.mxu0 0.0
        %2170 = vmatpush.msra.mxu0 0.0
        %2171 = vmatpush.msra.mxu0 0.0
        %2172 = vmatpush.msra.mxu0 %v874
        %2173 = vmatpush.msra.mxu0 %v872
        %2174 = vmatpush.msra.mxu0 %v870
        %2175 = vmatpush.msra.mxu0 %v868
        %2176 = vmatpush.msra.mxu0 %v866
        %2177 = vmatpush.msra.mxu0 %v864
        %2178 = vmatpush.msra.mxu0 %v862
        %2179 = vmatpush.msra.mxu0 %v860
        %2180 = vmatmul.f32.gmra.mxu0 %v2142
        %v2181 = vpop.f32.mrf.mxu0
        %v2182 = vadd.f32 0.0, %v2181
        %2183 = vdwg.mxu0
        %v2184 = vadd.f32 %v2096, %v2162
        %v2185 = vadd.f32 %v2097, %v2182
        %v2186 = vxor.u32 %v2140, 2147483648
        %v2187 = vmul.f32 %v2186, 1.442695
        %v2188 = vpow.pop %v2187
        %v2189 = vadd.f32 %v2188, 1.0
        %v2190 = vrcp.pop %v2189
        %v2191 = vmul.f32 %v2189, %v2190
        %v2192 = vsub.f32 1.0, %v2191
        %v2193 = vmul.f32 %v2190, %v2192
        %v2194 = vadd.f32 %v2190, %v2193
        %vm2195 = vweird.f32 %v2189
        %vm2196 = vweird.f32 %v2190
        %vm2197 = vmor %vm2195, %vm2196
        %v2198 = vsel %vm2197, %v2190, %v2194
        %v2199 = vand.u32 2147483647, %v2189
        %vm2200 = vcmp.eq.f32.partialorder %v2199, 8.507059e+37
        %v2201 = vand.u32 %v2189, 2147483648
        %v2202 = vor.u32 1.1754944e-38, %v2201
        %v2203 = vsel %vm2200, %v2202, %v2198
        %v2204 = vmul.f32 1.0, %v2203
        %v2205 = vtanh.pop %v2141
        %v2206 = vxor.u32 %v2141, 2147483648
        %v2207 = vmul.f32 %v2206, 1.442695
        %v2208 = vpow.pop %v2207
        %v2209 = vadd.f32 %v2208, 1.0
        %v2210 = vrcp.pop %v2209
        %v2211 = vmul.f32 %v2209, %v2210
        %v2212 = vsub.f32 1.0, %v2211
        %v2213 = vmul.f32 %v2210, %v2212
        %v2214 = vadd.f32 %v2210, %v2213
        %vm2215 = vweird.f32 %v2209
        %vm2216 = vweird.f32 %v2210
        %vm2217 = vmor %vm2215, %vm2216
        %v2218 = vsel %vm2217, %v2210, %v2214
        %v2219 = vand.u32 2147483647, %v2209
        %vm2220 = vcmp.eq.f32.partialorder %v2219, 8.507059e+37
        %v2221 = vand.u32 %v2209, 2147483648
        %v2222 = vor.u32 1.1754944e-38, %v2221
        %v2223 = vsel %vm2220, %v2222, %v2218
        %v2224 = vmul.f32 1.0, %v2223
        %v2225 = vmul.f32 %v2204, %v2031
        %v2226 = vmul.f32 %v2204, %v2205
        %2228 = vrot.lane.b32.xlu0 %v2226, 64
        %v2229 = vpop.permute.xlu0 %2228
        %v2231 = vadd.f32 %v2225, %v2229
        %v2232 = vtanh.pop %v2231
        %v2233 = vmul.f32 %v2224, %v2232
        %v2234 = vxor.u32 %v2184, 2147483648
        %v2235 = vmul.f32 %v2234, 1.442695
        %v2236 = vpow.pop %v2235
        %v2237 = vadd.f32 %v2236, 1.0
        %v2238 = vrcp.pop %v2237
        %v2239 = vmul.f32 %v2237, %v2238
        %v2240 = vsub.f32 1.0, %v2239
        %v2241 = vmul.f32 %v2238, %v2240
        %v2242 = vadd.f32 %v2238, %v2241
        %vm2243 = vweird.f32 %v2237
        %vm2244 = vweird.f32 %v2238
        %vm2245 = vmor %vm2243, %vm2244
        %v2246 = vsel %vm2245, %v2238, %v2242
        %v2247 = vand.u32 2147483647, %v2237
        %vm2248 = vcmp.eq.f32.partialorder %v2247, 8.507059e+37
        %v2249 = vand.u32 %v2237, 2147483648
        %v2250 = vor.u32 1.1754944e-38, %v2249
        %v2251 = vsel %vm2248, %v2250, %v2246
        %v2252 = vmul.f32 1.0, %v2251
        %v2253 = vtanh.pop %v2185
        %v2254 = vxor.u32 %v2185, 2147483648
        %v2255 = vmul.f32 %v2254, 1.442695
        %v2256 = vpow.pop %v2255
        %v2257 = vadd.f32 %v2256, 1.0
        %v2258 = vrcp.pop %v2257
        %v2259 = vmul.f32 %v2257, %v2258
        %v2260 = vsub.f32 1.0, %v2259
        %v2261 = vmul.f32 %v2258, %v2260
        %v2262 = vadd.f32 %v2258, %v2261
        %vm2263 = vweird.f32 %v2257
        %vm2264 = vweird.f32 %v2258
        %vm2265 = vmor %vm2263, %vm2264
        %v2266 = vsel %vm2265, %v2258, %v2262
        %v2267 = vand.u32 2147483647, %v2257
        %vm2268 = vcmp.eq.f32.partialorder %v2267, 8.507059e+37
        %v2269 = vand.u32 %v2257, 2147483648
        %v2270 = vor.u32 1.1754944e-38, %v2269
        %v2271 = vsel %vm2268, %v2270, %v2266
        %v2272 = vmul.f32 1.0, %v2271
        %v2273 = vmul.f32 %v2252, %v2079
        %v2274 = vmul.f32 %v2252, %v2253
        %2276 = vrot.lane.b32.xlu0 %v2274, 64
        %v2277 = vpop.permute.xlu0 %2276
        %v2279 = vadd.f32 %v2273, %v2277
        %v2280 = vtanh.pop %v2279
        %v2281 = vmul.f32 %v2272, %v2280
        %2283 = vrot.lane.b32.xlu0 %v2233, 64
        %v2284 = vpop.permute.xlu0 %2283
        %s2286 = scalar_lea.vmem [#allocation3], 48
        %2287 = vst.msk [vmem:[%s2286] sm:$0xff] %vm690, %v2284
        %2289 = vrot.lane.b32.xlu0 %v2281, 64
        %v2290 = vpop.permute.xlu0 %2289
        %2292 = vst.msk [vmem:[#allocation4] sm:$0xff] %vm690, %v2290
        %v2293 = vld [vmem:[#allocation3] sm:$0xff]
        %v2294 = vld [vmem:[#allocation3 + $0x8] sm:$0xff]
        %v2295 = vld [vmem:[#allocation3 + $0x10] sm:$0xff]
        %v2296 = vld [vmem:[#allocation3 + $0x18] sm:$0xff]
        %v2297 = vld [vmem:[#allocation3 + $0x20] sm:$0xff]
        %v2298 = vld [vmem:[#allocation3 + $0x28] sm:$0xff]
        %v2299 = vld [vmem:[#allocation3 + $0x30] sm:$0xff]
        %v2300 = vpack.c.bf16 %v2294, %v2293
        %v2301 = vpack.c.bf16 %v2296, %v2295
        %v2302 = vpack.c.bf16 %v2298, %v2297
        %v2303 = vpack.c.bf16 %v2299, %v2299
        %v2304 = vld [vmem:[#allocation4] sm:$0xff]
        %v2305 = vld [vmem:[#allocation4 + $0x8] sm:$0xff]
        %v2306 = vld [vmem:[#allocation4 + $0x10] sm:$0xff]
        %v2307 = vld [vmem:[#allocation4 + $0x18] sm:$0xff]
        %v2308 = vld [vmem:[#allocation4 + $0x20] sm:$0xff]
        %v2309 = vld [vmem:[#allocation4 + $0x28] sm:$0xff]
        %v2310 = vld [vmem:[#allocation4 + $0x30] sm:$0xff]
        %v2311 = vpack.c.bf16 %v2305, %v2304
        %v2312 = vpack.c.bf16 %v2307, %v2306
        %v2313 = vpack.c.bf16 %v2309, %v2308
        %v2314 = vpack.c.bf16 %v2310, %v2310
        %v2315 = vld [vmem:[#allocation11] sm:$0xff]
        %v2316 = vld [vmem:[#allocation11 + $0x8] sm:$0xff]
        %v2317 = vld [vmem:[#allocation11 + $0x10] sm:$0xff]
        %v2318 = vld [vmem:[#allocation11 + $0x18] sm:$0xff]
        %v2319 = vld [vmem:[#allocation11 + $0x20] sm:$0xff]
        %v2320 = vld [vmem:[#allocation11 + $0x28] sm:$0xff]
        %v2321 = vld [vmem:[#allocation11 + $0x30] sm:$0xff]
        %v2322 = vld [vmem:[#allocation11 + $0x38] sm:$0xff]
        %v2323 = vld [vmem:[#allocation11 + $0x40] sm:$0xff]
        %v2324 = vld [vmem:[#allocation11 + $0x48] sm:$0xff]
        %v2325 = vld [vmem:[#allocation11 + $0x50] sm:$0xff]
        %v2326 = vld [vmem:[#allocation11 + $0x58] sm:$0xff]
        %v2327 = vld [vmem:[#allocation11 + $0x60] sm:$0xff]
        %v2328 = vld [vmem:[#allocation11 + $0x68] sm:$0xff]
        %v2329 = vld [vmem:[#allocation11 + $0x70] sm:$0xff]
        %v2330 = vld [vmem:[#allocation11 + $0x78] sm:$0xff]
        %v2331 = vld [vmem:[#allocation13] sm:$0xff]
        %v2332 = vld [vmem:[#allocation13 + $0x8] sm:$0xff]
        %v2333 = vld [vmem:[#allocation13 + $0x10] sm:$0xff]
        %v2334 = vld [vmem:[#allocation13 + $0x18] sm:$0xff]
        %v2335 = vld [vmem:[#allocation13 + $0x20] sm:$0xff]
        %v2336 = vld [vmem:[#allocation13 + $0x28] sm:$0xff]
        %v2337 = vld [vmem:[#allocation13 + $0x30] sm:$0xff]
        %v2338 = vld [vmem:[#allocation13 + $0x38] sm:$0xff]
        %v2339 = vld [vmem:[#allocation13 + $0x40] sm:$0xff]
        %v2340 = vld [vmem:[#allocation13 + $0x48] sm:$0xff]
        %v2341 = vld [vmem:[#allocation13 + $0x50] sm:$0xff]
        %v2342 = vld [vmem:[#allocation13 + $0x58] sm:$0xff]
        %v2343 = vld [vmem:[#allocation13 + $0x60] sm:$0xff]
        %v2344 = vld [vmem:[#allocation13 + $0x68] sm:$0xff]
        %v2345 = vld [vmem:[#allocation13 + $0x70] sm:$0xff]
        %v2346 = vld [vmem:[#allocation13 + $0x78] sm:$0xff]
        %v2363 = vunpack.c.l.b16 %v2331
        %v2364 = vunpack.c.h.b16 %v2331
        %v2365 = vunpack.c.l.b16 %v2332
        %v2366 = vunpack.c.h.b16 %v2332
        %v2367 = vunpack.c.l.b16 %v2333
        %v2368 = vunpack.c.h.b16 %v2333
        %v2369 = vunpack.c.l.b16 %v2334
        %v2370 = vunpack.c.h.b16 %v2334
        %v2371 = vunpack.c.l.b16 %v2335
        %v2372 = vunpack.c.h.b16 %v2335
        %v2373 = vunpack.c.l.b16 %v2336
        %v2374 = vunpack.c.h.b16 %v2336
        %v2375 = vunpack.c.l.b16 %v2337
        %v2376 = vunpack.c.h.b16 %v2337
        %v2377 = vunpack.c.l.b16 %v2338
        %v2378 = vunpack.c.h.b16 %v2338
        %v2379 = vunpack.c.l.b16 %v2339
        %v2380 = vunpack.c.h.b16 %v2339
        %v2381 = vunpack.c.l.b16 %v2340
        %v2382 = vunpack.c.h.b16 %v2340
        %v2383 = vunpack.c.l.b16 %v2341
        %v2384 = vunpack.c.h.b16 %v2341
        %v2385 = vunpack.c.l.b16 %v2342
        %v2386 = vunpack.c.h.b16 %v2342
        %v2387 = vunpack.c.l.b16 %v2343
        %v2388 = vunpack.c.h.b16 %v2343
        %v2389 = vunpack.c.l.b16 %v2344
        %v2390 = vunpack.c.h.b16 %v2344
        %v2391 = vunpack.c.l.b16 %v2345
        %v2392 = vunpack.c.h.b16 %v2345
        %v2393 = vunpack.c.l.b16 %v2346
        %v2394 = vunpack.c.h.b16 %v2346
        %v2395 = vpack.c.b16 %v2367, %v2363
        %v2396 = vpack.c.b16 %v2368, %v2364
        %v2397 = vpack.c.b16 %v2369, %v2365
        %v2398 = vpack.c.b16 %v2370, %v2366
        %v2399 = vpack.c.b16 %v2375, %v2371
        %v2400 = vpack.c.b16 %v2376, %v2372
        %v2401 = vpack.c.b16 %v2377, %v2373
        %v2402 = vpack.c.b16 %v2378, %v2374
        %v2403 = vpack.c.b16 %v2383, %v2379
        %v2404 = vpack.c.b16 %v2384, %v2380
        %v2405 = vpack.c.b16 %v2385, %v2381
        %v2406 = vpack.c.b16 %v2386, %v2382
        %v2407 = vpack.c.b16 %v2391, %v2387
        %v2408 = vpack.c.b16 %v2392, %v2388
        %v2409 = vpack.c.b16 %v2393, %v2389
        %v2410 = vpack.c.b16 %v2394, %v2390
        %v2428 = vsel %vm690, %v2311, 0
        %v2431 = vsel %vm690, %v2312, 0
        %v2434 = vsel %vm690, %v2313, 0
        %v2437 = vsel %vm690, %v2314, 0
        %2439 = vmatpush.bf16.msra.mxu0 0
        %2440 = vmatpush.bf16.msra.mxu0 0
        %2441 = vmatpush.bf16.msra.mxu0 0
        %2442 = vmatpush.bf16.msra.mxu0 0
        %2443 = vmatpush.bf16.msra.mxu0 %v2407
        %2444 = vmatpush.bf16.msra.mxu0 %v2403
        %2445 = vmatpush.bf16.msra.mxu0 %v2399
        %2446 = vmatpush.bf16.msra.mxu0 %v2395
        %2447 = vmatmul.bf16.gmra.mxu0 %v2428
        %v2448 = vpop.f32.mrf.mxu0
        %v2449 = vadd.f32 0.0, %v2448
        %v2450 = vpop.f32.mrf.mxu0
        %v2451 = vadd.f32 0.0, %v2450
        %2452 = vmatmul.bf16.gmra.mxu0 %v2431
        %v2453 = vpop.f32.mrf.mxu0
        %v2454 = vadd.f32 0.0, %v2453
        %v2455 = vpop.f32.mrf.mxu0
        %v2456 = vadd.f32 0.0, %v2455
        %2457 = vmatmul.bf16.gmra.mxu0 %v2434
        %v2458 = vpop.f32.mrf.mxu0
        %v2459 = vadd.f32 0.0, %v2458
        %v2460 = vpop.f32.mrf.mxu0
        %v2461 = vadd.f32 0.0, %v2460
        %2462 = vmatmul.bf16.gmra.mxu0 %v2437
        %v2463 = vpop.f32.mrf.mxu0
        %v2464 = vadd.f32 0.0, %v2463
        %v2465 = vpop.f32.mrf.mxu0
        %2466 = vdwg.mxu0
        %2467 = vmatpush.bf16.msra.mxu0 0
        %2468 = vmatpush.bf16.msra.mxu0 0
        %2469 = vmatpush.bf16.msra.mxu0 0
        %2470 = vmatpush.bf16.msra.mxu0 0
        %2471 = vmatpush.bf16.msra.mxu0 %v2408
        %2472 = vmatpush.bf16.msra.mxu0 %v2404
        %2473 = vmatpush.bf16.msra.mxu0 %v2400
        %2474 = vmatpush.bf16.msra.mxu0 %v2396
        %2475 = vmatmul.bf16.gmra.mxu0 %v2428
        %v2476 = vpop.f32.mrf.mxu0
        %v2477 = vadd.f32 0.0, %v2476
        %v2478 = vpop.f32.mrf.mxu0
        %v2479 = vadd.f32 0.0, %v2478
        %2480 = vmatmul.bf16.gmra.mxu0 %v2431
        %v2481 = vpop.f32.mrf.mxu0
        %v2482 = vadd.f32 0.0, %v2481
        %v2483 = vpop.f32.mrf.mxu0
        %v2484 = vadd.f32 0.0, %v2483
        %2485 = vmatmul.bf16.gmra.mxu0 %v2434
        %v2486 = vpop.f32.mrf.mxu0
        %v2487 = vadd.f32 0.0, %v2486
        %v2488 = vpop.f32.mrf.mxu0
        %v2489 = vadd.f32 0.0, %v2488
        %2490 = vmatmul.bf16.gmra.mxu0 %v2437
        %v2491 = vpop.f32.mrf.mxu0
        %v2492 = vadd.f32 0.0, %v2491
        %v2493 = vpop.f32.mrf.mxu0
        %2494 = vdwg.mxu0
        %2495 = vmatpush.bf16.msra.mxu0 0
        %2496 = vmatpush.bf16.msra.mxu0 0
        %2497 = vmatpush.bf16.msra.mxu0 0
        %2498 = vmatpush.bf16.msra.mxu0 0
        %2499 = vmatpush.bf16.msra.mxu0 %v2409
        %2500 = vmatpush.bf16.msra.mxu0 %v2405
        %2501 = vmatpush.bf16.msra.mxu0 %v2401
        %2502 = vmatpush.bf16.msra.mxu0 %v2397
        %2503 = vmatmul.bf16.gmra.mxu0 %v2428
        %v2504 = vpop.f32.mrf.mxu0
        %v2505 = vadd.f32 0.0, %v2504
        %v2506 = vpop.f32.mrf.mxu0
        %v2507 = vadd.f32 0.0, %v2506
        %2508 = vmatmul.bf16.gmra.mxu0 %v2431
        %v2509 = vpop.f32.mrf.mxu0
        %v2510 = vadd.f32 0.0, %v2509
        %v2511 = vpop.f32.mrf.mxu0
        %v2512 = vadd.f32 0.0, %v2511
        %2513 = vmatmul.bf16.gmra.mxu0 %v2434
        %v2514 = vpop.f32.mrf.mxu0
        %v2515 = vadd.f32 0.0, %v2514
        %v2516 = vpop.f32.mrf.mxu0
        %v2517 = vadd.f32 0.0, %v2516
        %2518 = vmatmul.bf16.gmra.mxu0 %v2437
        %v2519 = vpop.f32.mrf.mxu0
        %v2520 = vadd.f32 0.0, %v2519
        %v2521 = vpop.f32.mrf.mxu0
        %2522 = vdwg.mxu0
        %2523 = vmatpush.bf16.msra.mxu0 0
        %2524 = vmatpush.bf16.msra.mxu0 0
        %2525 = vmatpush.bf16.msra.mxu0 0
        %2526 = vmatpush.bf16.msra.mxu0 0
        %2527 = vmatpush.bf16.msra.mxu0 %v2410
        %2528 = vmatpush.bf16.msra.mxu0 %v2406
        %2529 = vmatpush.bf16.msra.mxu0 %v2402
        %2530 = vmatpush.bf16.msra.mxu0 %v2398
        %2531 = vmatmul.bf16.gmra.mxu0 %v2428
        %v2532 = vpop.f32.mrf.mxu0
        %v2533 = vadd.f32 0.0, %v2532
        %v2534 = vpop.f32.mrf.mxu0
        %v2535 = vadd.f32 0.0, %v2534
        %2536 = vmatmul.bf16.gmra.mxu0 %v2431
        %v2537 = vpop.f32.mrf.mxu0
        %v2538 = vadd.f32 0.0, %v2537
        %v2539 = vpop.f32.mrf.mxu0
        %v2540 = vadd.f32 0.0, %v2539
        %2541 = vmatmul.bf16.gmra.mxu0 %v2434
        %v2542 = vpop.f32.mrf.mxu0
        %v2543 = vadd.f32 0.0, %v2542
        %v2544 = vpop.f32.mrf.mxu0
        %v2545 = vadd.f32 0.0, %v2544
        %2546 = vmatmul.bf16.gmra.mxu0 %v2437
        %v2547 = vpop.f32.mrf.mxu0
        %v2548 = vadd.f32 0.0, %v2547
        %v2549 = vpop.f32.mrf.mxu0
        %2550 = vdwg.mxu0
        %v2567 = vunpack.c.l.b16 %v2315
        %v2568 = vunpack.c.h.b16 %v2315
        %v2569 = vunpack.c.l.b16 %v2316
        %v2570 = vunpack.c.h.b16 %v2316
        %v2571 = vunpack.c.l.b16 %v2317
        %v2572 = vunpack.c.h.b16 %v2317
        %v2573 = vunpack.c.l.b16 %v2318
        %v2574 = vunpack.c.h.b16 %v2318
        %v2575 = vunpack.c.l.b16 %v2319
        %v2576 = vunpack.c.h.b16 %v2319
        %v2577 = vunpack.c.l.b16 %v2320
        %v2578 = vunpack.c.h.b16 %v2320
        %v2579 = vunpack.c.l.b16 %v2321
        %v2580 = vunpack.c.h.b16 %v2321
        %v2581 = vunpack.c.l.b16 %v2322
        %v2582 = vunpack.c.h.b16 %v2322
        %v2583 = vunpack.c.l.b16 %v2323
        %v2584 = vunpack.c.h.b16 %v2323
        %v2585 = vunpack.c.l.b16 %v2324
        %v2586 = vunpack.c.h.b16 %v2324
        %v2587 = vunpack.c.l.b16 %v2325
        %v2588 = vunpack.c.h.b16 %v2325
        %v2589 = vunpack.c.l.b16 %v2326
        %v2590 = vunpack.c.h.b16 %v2326
        %v2591 = vunpack.c.l.b16 %v2327
        %v2592 = vunpack.c.h.b16 %v2327
        %v2593 = vunpack.c.l.b16 %v2328
        %v2594 = vunpack.c.h.b16 %v2328
        %v2595 = vunpack.c.l.b16 %v2329
        %v2596 = vunpack.c.h.b16 %v2329
        %v2597 = vunpack.c.l.b16 %v2330
        %v2598 = vunpack.c.h.b16 %v2330
        %v2599 = vpack.c.b16 %v2571, %v2567
        %v2600 = vpack.c.b16 %v2572, %v2568
        %v2601 = vpack.c.b16 %v2573, %v2569
        %v2602 = vpack.c.b16 %v2574, %v2570
        %v2603 = vpack.c.b16 %v2579, %v2575
        %v2604 = vpack.c.b16 %v2580, %v2576
        %v2605 = vpack.c.b16 %v2581, %v2577
        %v2606 = vpack.c.b16 %v2582, %v2578
        %v2607 = vpack.c.b16 %v2587, %v2583
        %v2608 = vpack.c.b16 %v2588, %v2584
        %v2609 = vpack.c.b16 %v2589, %v2585
        %v2610 = vpack.c.b16 %v2590, %v2586
        %v2611 = vpack.c.b16 %v2595, %v2591
        %v2612 = vpack.c.b16 %v2596, %v2592
        %v2613 = vpack.c.b16 %v2597, %v2593
        %v2614 = vpack.c.b16 %v2598, %v2594
        %v2632 = vsel %vm690, %v2300, 0
        %v2635 = vsel %vm690, %v2301, 0
        %v2638 = vsel %vm690, %v2302, 0
        %v2641 = vsel %vm690, %v2303, 0
        %2643 = vmatpush.bf16.msra.mxu0 0
        %2644 = vmatpush.bf16.msra.mxu0 0
        %2645 = vmatpush.bf16.msra.mxu0 0
        %2646 = vmatpush.bf16.msra.mxu0 0
        %2647 = vmatpush.bf16.msra.mxu0 %v2611
        %2648 = vmatpush.bf16.msra.mxu0 %v2607
        %2649 = vmatpush.bf16.msra.mxu0 %v2603
        %2650 = vmatpush.bf16.msra.mxu0 %v2599
        %2651 = vmatmul.bf16.gmra.mxu0 %v2632
        %v2652 = vpop.f32.mrf.mxu0
        %v2653 = vadd.f32 %v2449, %v2652
        %v2654 = vpop.f32.mrf.mxu0
        %v2655 = vadd.f32 %v2451, %v2654
        %2656 = vmatmul.bf16.gmra.mxu0 %v2635
        %v2657 = vpop.f32.mrf.mxu0
        %v2658 = vadd.f32 %v2454, %v2657
        %v2659 = vpop.f32.mrf.mxu0
        %v2660 = vadd.f32 %v2456, %v2659
        %2661 = vmatmul.bf16.gmra.mxu0 %v2638
        %v2662 = vpop.f32.mrf.mxu0
        %v2663 = vadd.f32 %v2459, %v2662
        %v2664 = vpop.f32.mrf.mxu0
        %v2665 = vadd.f32 %v2461, %v2664
        %2666 = vmatmul.bf16.gmra.mxu0 %v2641
        %v2667 = vpop.f32.mrf.mxu0
        %v2668 = vadd.f32 %v2464, %v2667
        %v2669 = vpop.f32.mrf.mxu0
        %2670 = vdwg.mxu0
        %2671 = vmatpush.bf16.msra.mxu0 0
        %2672 = vmatpush.bf16.msra.mxu0 0
        %2673 = vmatpush.bf16.msra.mxu0 0
        %2674 = vmatpush.bf16.msra.mxu0 0
        %2675 = vmatpush.bf16.msra.mxu0 %v2612
        %2676 = vmatpush.bf16.msra.mxu0 %v2608
        %2677 = vmatpush.bf16.msra.mxu0 %v2604
        %2678 = vmatpush.bf16.msra.mxu0 %v2600
        %2679 = vmatmul.bf16.gmra.mxu0 %v2632
        %v2680 = vpop.f32.mrf.mxu0
        %v2681 = vadd.f32 %v2477, %v2680
        %v2682 = vpop.f32.mrf.mxu0
        %v2683 = vadd.f32 %v2479, %v2682
        %2684 = vmatmul.bf16.gmra.mxu0 %v2635
        %v2685 = vpop.f32.mrf.mxu0
        %v2686 = vadd.f32 %v2482, %v2685
        %v2687 = vpop.f32.mrf.mxu0
        %v2688 = vadd.f32 %v2484, %v2687
        %2689 = vmatmul.bf16.gmra.mxu0 %v2638
        %v2690 = vpop.f32.mrf.mxu0
        %v2691 = vadd.f32 %v2487, %v2690
        %v2692 = vpop.f32.mrf.mxu0
        %v2693 = vadd.f32 %v2489, %v2692
        %2694 = vmatmul.bf16.gmra.mxu0 %v2641
        %v2695 = vpop.f32.mrf.mxu0
        %v2696 = vadd.f32 %v2492, %v2695
        %v2697 = vpop.f32.mrf.mxu0
        %2698 = vdwg.mxu0
        %2699 = vmatpush.bf16.msra.mxu0 0
        %2700 = vmatpush.bf16.msra.mxu0 0
        %2701 = vmatpush.bf16.msra.mxu0 0
        %2702 = vmatpush.bf16.msra.mxu0 0
        %2703 = vmatpush.bf16.msra.mxu0 %v2613
        %2704 = vmatpush.bf16.msra.mxu0 %v2609
        %2705 = vmatpush.bf16.msra.mxu0 %v2605
        %2706 = vmatpush.bf16.msra.mxu0 %v2601
        %2707 = vmatmul.bf16.gmra.mxu0 %v2632
        %v2708 = vpop.f32.mrf.mxu0
        %v2709 = vadd.f32 %v2505, %v2708
        %v2710 = vpop.f32.mrf.mxu0
        %v2711 = vadd.f32 %v2507, %v2710
        %2712 = vmatmul.bf16.gmra.mxu0 %v2635
        %v2713 = vpop.f32.mrf.mxu0
        %v2714 = vadd.f32 %v2510, %v2713
        %v2715 = vpop.f32.mrf.mxu0
        %v2716 = vadd.f32 %v2512, %v2715
        %2717 = vmatmul.bf16.gmra.mxu0 %v2638
        %v2718 = vpop.f32.mrf.mxu0
        %v2719 = vadd.f32 %v2515, %v2718
        %v2720 = vpop.f32.mrf.mxu0
        %v2721 = vadd.f32 %v2517, %v2720
        %2722 = vmatmul.bf16.gmra.mxu0 %v2641
        %v2723 = vpop.f32.mrf.mxu0
        %v2724 = vadd.f32 %v2520, %v2723
        %v2725 = vpop.f32.mrf.mxu0
        %2726 = vdwg.mxu0
        %2727 = vmatpush.bf16.msra.mxu0 0
        %2728 = vmatpush.bf16.msra.mxu0 0
        %2729 = vmatpush.bf16.msra.mxu0 0
        %2730 = vmatpush.bf16.msra.mxu0 0
        %2731 = vmatpush.bf16.msra.mxu0 %v2614
        %2732 = vmatpush.bf16.msra.mxu0 %v2610
        %2733 = vmatpush.bf16.msra.mxu0 %v2606
        %2734 = vmatpush.bf16.msra.mxu0 %v2602
        %2735 = vmatmul.bf16.gmra.mxu0 %v2632
        %v2736 = vpop.f32.mrf.mxu0
        %v2737 = vadd.f32 %v2533, %v2736
        %v2738 = vpop.f32.mrf.mxu0
        %v2739 = vadd.f32 %v2535, %v2738
        %2740 = vmatmul.bf16.gmra.mxu0 %v2635
        %v2741 = vpop.f32.mrf.mxu0
        %v2742 = vadd.f32 %v2538, %v2741
        %v2743 = vpop.f32.mrf.mxu0
        %v2744 = vadd.f32 %v2540, %v2743
        %2745 = vmatmul.bf16.gmra.mxu0 %v2638
        %v2746 = vpop.f32.mrf.mxu0
        %v2747 = vadd.f32 %v2543, %v2746
        %v2748 = vpop.f32.mrf.mxu0
        %v2749 = vadd.f32 %v2545, %v2748
        %2750 = vmatmul.bf16.gmra.mxu0 %v2641
        %v2751 = vpop.f32.mrf.mxu0
        %v2752 = vadd.f32 %v2548, %v2751
        %v2753 = vpop.f32.mrf.mxu0
        %2754 = vdwg.mxu0
        %v2755 = vld [vmem:[%s7] sm:$0xf]
        %v2757 = vperm.slane %v2755, 0
        %v2758 = vperm.slane %v2755, 1
        %v2759 = vperm.slane %v2755, 2
        %v2760 = vperm.slane %v2755, 3
        %v2765 = vadd.f32 %v2653, %v2757
        %v2766 = vadd.f32 %v2681, %v2758
        %v2767 = vadd.f32 %v2709, %v2759
        %v2768 = vadd.f32 %v2737, %v2760
        %v2769 = vadd.f32 %v2655, %v2757
        %v2770 = vadd.f32 %v2683, %v2758
        %v2771 = vadd.f32 %v2711, %v2759
        %v2772 = vadd.f32 %v2739, %v2760
        %v2773 = vadd.f32 %v2658, %v2757
        %v2774 = vadd.f32 %v2686, %v2758
        %v2775 = vadd.f32 %v2714, %v2759
        %v2776 = vadd.f32 %v2742, %v2760
        %v2777 = vadd.f32 %v2660, %v2757
        %v2778 = vadd.f32 %v2688, %v2758
        %v2779 = vadd.f32 %v2716, %v2759
        %v2780 = vadd.f32 %v2744, %v2760
        %v2781 = vadd.f32 %v2663, %v2757
        %v2782 = vadd.f32 %v2691, %v2758
        %v2783 = vadd.f32 %v2719, %v2759
        %v2784 = vadd.f32 %v2747, %v2760
        %v2785 = vadd.f32 %v2665, %v2757
        %v2786 = vadd.f32 %v2693, %v2758
        %v2787 = vadd.f32 %v2721, %v2759
        %v2788 = vadd.f32 %v2749, %v2760
        %v2789 = vadd.f32 %v2668, %v2757
        %v2790 = vadd.f32 %v2696, %v2758
        %v2791 = vadd.f32 %v2724, %v2759
        %v2792 = vadd.f32 %v2752, %v2760
        %2793 = vst [vmem:[#allocation2] sm:$0xff] %v2765
        %2794 = vst [vmem:[#allocation2 + $0x8] sm:$0xff] %v2766
        %2795 = vst [vmem:[#allocation2 + $0x10] sm:$0xff] %v2767
        %2796 = vst [vmem:[#allocation2 + $0x18] sm:$0xff] %v2768
        %2797 = vst [vmem:[#allocation2 + $0x20] sm:$0xff] %v2769
        %2798 = vst [vmem:[#allocation2 + $0x28] sm:$0xff] %v2770
        %2799 = vst [vmem:[#allocation2 + $0x30] sm:$0xff] %v2771
        %2800 = vst [vmem:[#allocation2 + $0x38] sm:$0xff] %v2772
        %2801 = vst [vmem:[#allocation2 + $0x40] sm:$0xff] %v2773
        %2802 = vst [vmem:[#allocation2 + $0x48] sm:$0xff] %v2774
        %2803 = vst [vmem:[#allocation2 + $0x50] sm:$0xff] %v2775
        %2804 = vst [vmem:[#allocation2 + $0x58] sm:$0xff] %v2776
        %2805 = vst [vmem:[#allocation2 + $0x60] sm:$0xff] %v2777
        %2806 = vst [vmem:[#allocation2 + $0x68] sm:$0xff] %v2778
        %2807 = vst [vmem:[#allocation2 + $0x70] sm:$0xff] %v2779
        %2808 = vst [vmem:[#allocation2 + $0x78] sm:$0xff] %v2780
        %2809 = vst [vmem:[#allocation2 + $0x80] sm:$0xff] %v2781
        %2810 = vst [vmem:[#allocation2 + $0x88] sm:$0xff] %v2782
        %2811 = vst [vmem:[#allocation2 + $0x90] sm:$0xff] %v2783
        %2812 = vst [vmem:[#allocation2 + $0x98] sm:$0xff] %v2784
        %2813 = vst [vmem:[#allocation2 + $0xa0] sm:$0xff] %v2785
        %2814 = vst [vmem:[#allocation2 + $0xa8] sm:$0xff] %v2786
        %2815 = vst [vmem:[#allocation2 + $0xb0] sm:$0xff] %v2787
        %2816 = vst [vmem:[#allocation2 + $0xb8] sm:$0xff] %v2788
        %2817 = vst [vmem:[#allocation2 + $0xc0] sm:$0xff] %v2789
        %2818 = vst [vmem:[#allocation2 + $0xc8] sm:$0xff] %v2790
        %2819 = vst [vmem:[#allocation2 + $0xd0] sm:$0xff] %v2791
        %2820 = vst [vmem:[#allocation2 + $0xd8] sm:$0xff] %v2792
        %v2821 = vld [vmem:[#allocation14] sm:$0xff]
        %v2822 = vld [vmem:[#allocation14 + $0x8] sm:$0xff]
        %v2823 = vld [vmem:[#allocation14 + $0x10] sm:$0xff]
        %v2824 = vld [vmem:[#allocation14 + $0x18] sm:$0xff]
        %v2825 = vld [vmem:[#allocation14 + $0x20] sm:$0xff]
        %v2826 = vld [vmem:[#allocation14 + $0x28] sm:$0xff]
        %v2827 = vld [vmem:[#allocation14 + $0x30] sm:$0xff]
        %v2828 = vld [vmem:[#allocation14 + $0x38] sm:$0xff]
        %v2829 = vld [vmem:[#allocation14 + $0x40] sm:$0xff]
        %v2830 = vld [vmem:[#allocation14 + $0x48] sm:$0xff]
        %v2831 = vld [vmem:[#allocation14 + $0x50] sm:$0xff]
        %v2832 = vld [vmem:[#allocation14 + $0x58] sm:$0xff]
        %v2833 = vld [vmem:[#allocation14 + $0x60] sm:$0xff]
        %v2834 = vld [vmem:[#allocation14 + $0x68] sm:$0xff]
        %v2835 = vld [vmem:[#allocation14 + $0x70] sm:$0xff]
        %v2836 = vld [vmem:[#allocation14 + $0x78] sm:$0xff]
        %v2837 = vld [vmem:[#allocation16] sm:$0xff]
        %v2838 = vld [vmem:[#allocation16 + $0x8] sm:$0xff]
        %v2839 = vld [vmem:[#allocation16 + $0x10] sm:$0xff]
        %v2840 = vld [vmem:[#allocation16 + $0x18] sm:$0xff]
        %v2841 = vld [vmem:[#allocation16 + $0x20] sm:$0xff]
        %v2842 = vld [vmem:[#allocation16 + $0x28] sm:$0xff]
        %v2843 = vld [vmem:[#allocation16 + $0x30] sm:$0xff]
        %v2844 = vld [vmem:[#allocation16 + $0x38] sm:$0xff]
        %v2845 = vld [vmem:[#allocation16 + $0x40] sm:$0xff]
        %v2846 = vld [vmem:[#allocation16 + $0x48] sm:$0xff]
        %v2847 = vld [vmem:[#allocation16 + $0x50] sm:$0xff]
        %v2848 = vld [vmem:[#allocation16 + $0x58] sm:$0xff]
        %v2849 = vld [vmem:[#allocation16 + $0x60] sm:$0xff]
        %v2850 = vld [vmem:[#allocation16 + $0x68] sm:$0xff]
        %v2851 = vld [vmem:[#allocation16 + $0x70] sm:$0xff]
        %v2852 = vld [vmem:[#allocation16 + $0x78] sm:$0xff]
        %v2853 = vld [vmem:[%s877] sm:$0xff]
        %v2854 = vld [vmem:[%s877 + $0x8] sm:$0xff]
        %v2855 = vld [vmem:[%s882 + $0x10] sm:$0xff]
        %v2856 = vld [vmem:[%s882 + $0x18] sm:$0xff]
        %2857 = vmatpush.msra.mxu0 0.0
        %2858 = vmatpush.msra.mxu0 0.0
        %2859 = vmatpush.msra.mxu0 0.0
        %2860 = vmatpush.msra.mxu0 0.0
        %2861 = vmatpush.msra.mxu0 0.0
        %2862 = vmatpush.msra.mxu0 0.0
        %2863 = vmatpush.msra.mxu0 0.0
        %2864 = vmatpush.msra.mxu0 0.0
        %2865 = vmatpush.msra.mxu0 %v2835
        %2866 = vmatpush.msra.mxu0 %v2833
        %2867 = vmatpush.msra.mxu0 %v2831
        %2868 = vmatpush.msra.mxu0 %v2829
        %2869 = vmatpush.msra.mxu0 %v2827
        %2870 = vmatpush.msra.mxu0 %v2825
        %2871 = vmatpush.msra.mxu0 %v2823
        %2872 = vmatpush.msra.mxu0 %v2821
        %2873 = vmatmul.f32.gmra.mxu0 %v886
        %v2874 = vpop.f32.mrf.mxu0
        %v2875 = vadd.f32 0.0, %v2874
        %2876 = vdwg.mxu0
        %2877 = vmatpush.msra.mxu0 0.0
        %2878 = vmatpush.msra.mxu0 0.0
        %2879 = vmatpush.msra.mxu0 0.0
        %2880 = vmatpush.msra.mxu0 0.0
        %2881 = vmatpush.msra.mxu0 0.0
        %2882 = vmatpush.msra.mxu0 0.0
        %2883 = vmatpush.msra.mxu0 0.0
        %2884 = vmatpush.msra.mxu0 0.0
        %2885 = vmatpush.msra.mxu0 %v2836
        %2886 = vmatpush.msra.mxu0 %v2834
        %2887 = vmatpush.msra.mxu0 %v2832
        %2888 = vmatpush.msra.mxu0 %v2830
        %2889 = vmatpush.msra.mxu0 %v2828
        %2890 = vmatpush.msra.mxu0 %v2826
        %2891 = vmatpush.msra.mxu0 %v2824
        %2892 = vmatpush.msra.mxu0 %v2822
        %2893 = vmatmul.f32.gmra.mxu0 %v886
        %v2894 = vpop.f32.mrf.mxu0
        %v2895 = vadd.f32 0.0, %v2894
        %2896 = vdwg.mxu0
        %v2897 = vadd.f32 %v2853, %v2875
        %v2898 = vadd.f32 %v2854, %v2895
        %2899 = vmatpush.msra.mxu0 0.0
        %2900 = vmatpush.msra.mxu0 0.0
        %2901 = vmatpush.msra.mxu0 0.0
        %2902 = vmatpush.msra.mxu0 0.0
        %2903 = vmatpush.msra.mxu0 0.0
        %2904 = vmatpush.msra.mxu0 0.0
        %2905 = vmatpush.msra.mxu0 0.0
        %2906 = vmatpush.msra.mxu0 0.0
        %2907 = vmatpush.msra.mxu0 %v2851
        %2908 = vmatpush.msra.mxu0 %v2849
        %2909 = vmatpush.msra.mxu0 %v2847
        %2910 = vmatpush.msra.mxu0 %v2845
        %2911 = vmatpush.msra.mxu0 %v2843
        %2912 = vmatpush.msra.mxu0 %v2841
        %2913 = vmatpush.msra.mxu0 %v2839
        %2914 = vmatpush.msra.mxu0 %v2837
        %2915 = vmatmul.f32.gmra.mxu0 %v886
        %v2916 = vpop.f32.mrf.mxu0
        %v2917 = vadd.f32 0.0, %v2916
        %2918 = vdwg.mxu0
        %2919 = vmatpush.msra.mxu0 0.0
        %2920 = vmatpush.msra.mxu0 0.0
        %2921 = vmatpush.msra.mxu0 0.0
        %2922 = vmatpush.msra.mxu0 0.0
        %2923 = vmatpush.msra.mxu0 0.0
        %2924 = vmatpush.msra.mxu0 0.0
        %2925 = vmatpush.msra.mxu0 0.0
        %2926 = vmatpush.msra.mxu0 0.0
        %2927 = vmatpush.msra.mxu0 %v2852
        %2928 = vmatpush.msra.mxu0 %v2850
        %2929 = vmatpush.msra.mxu0 %v2848
        %2930 = vmatpush.msra.mxu0 %v2846
        %2931 = vmatpush.msra.mxu0 %v2844
        %2932 = vmatpush.msra.mxu0 %v2842
        %2933 = vmatpush.msra.mxu0 %v2840
        %2934 = vmatpush.msra.mxu0 %v2838
        %2935 = vmatmul.f32.gmra.mxu0 %v886
        %v2936 = vpop.f32.mrf.mxu0
        %v2937 = vadd.f32 0.0, %v2936
        %2938 = vdwg.mxu0
        %v2939 = vadd.f32 %v2855, %v2917
        %v2940 = vadd.f32 %v2856, %v2937
        %v2941 = vxor.u32 %v2897, 2147483648
        %v2942 = vmul.f32 %v2941, 1.442695
        %v2943 = vpow.pop %v2942
        %v2944 = vadd.f32 %v2943, 1.0
        %v2945 = vrcp.pop %v2944
        %v2946 = vmul.f32 %v2944, %v2945
        %v2947 = vsub.f32 1.0, %v2946
        %v2948 = vmul.f32 %v2945, %v2947
        %v2949 = vadd.f32 %v2945, %v2948
        %vm2950 = vweird.f32 %v2944
        %vm2951 = vweird.f32 %v2945
        %vm2952 = vmor %vm2950, %vm2951
        %v2953 = vsel %vm2952, %v2945, %v2949
        %v2954 = vand.u32 2147483647, %v2944
        %vm2955 = vcmp.eq.f32.partialorder %v2954, 8.507059e+37
        %v2956 = vand.u32 %v2944, 2147483648
        %v2957 = vor.u32 1.1754944e-38, %v2956
        %v2958 = vsel %vm2955, %v2957, %v2953
        %v2959 = vmul.f32 1.0, %v2958
        %v2960 = vtanh.pop %v2898
        %v2961 = vxor.u32 %v2898, 2147483648
        %v2962 = vmul.f32 %v2961, 1.442695
        %v2963 = vpow.pop %v2962
        %v2964 = vadd.f32 %v2963, 1.0
        %v2965 = vrcp.pop %v2964
        %v2966 = vmul.f32 %v2964, %v2965
        %v2967 = vsub.f32 1.0, %v2966
        %v2968 = vmul.f32 %v2965, %v2967
        %v2969 = vadd.f32 %v2965, %v2968
        %vm2970 = vweird.f32 %v2964
        %vm2971 = vweird.f32 %v2965
        %vm2972 = vmor %vm2970, %vm2971
        %v2973 = vsel %vm2972, %v2965, %v2969
        %v2974 = vand.u32 2147483647, %v2964
        %vm2975 = vcmp.eq.f32.partialorder %v2974, 8.507059e+37
        %v2976 = vand.u32 %v2964, 2147483648
        %v2977 = vor.u32 1.1754944e-38, %v2976
        %v2978 = vsel %vm2975, %v2977, %v2973
        %v2979 = vmul.f32 1.0, %v2978
        %v2980 = vmul.f32 %v2959, 0.0
        %v2981 = vmul.f32 %v2959, %v2960
        %2983 = vrot.lane.b32.xlu0 %v2981, 64
        %v2984 = vpop.permute.xlu0 %2983
        %v2986 = vadd.f32 %v2980, %v2984
        %v2987 = vtanh.pop %v2986
        %v2988 = vmul.f32 %v2979, %v2987
        %v2989 = vxor.u32 %v2939, 2147483648
        %v2990 = vmul.f32 %v2989, 1.442695
        %v2991 = vpow.pop %v2990
        %v2992 = vadd.f32 %v2991, 1.0
        %v2993 = vrcp.pop %v2992
        %v2994 = vmul.f32 %v2992, %v2993
        %v2995 = vsub.f32 1.0, %v2994
        %v2996 = vmul.f32 %v2993, %v2995
        %v2997 = vadd.f32 %v2993, %v2996
        %vm2998 = vweird.f32 %v2992
        %vm2999 = vweird.f32 %v2993
        %vm3000 = vmor %vm2998, %vm2999
        %v3001 = vsel %vm3000, %v2993, %v2997
        %v3002 = vand.u32 2147483647, %v2992
        %vm3003 = vcmp.eq.f32.partialorder %v3002, 8.507059e+37
        %v3004 = vand.u32 %v2992, 2147483648
        %v3005 = vor.u32 1.1754944e-38, %v3004
        %v3006 = vsel %vm3003, %v3005, %v3001
        %v3007 = vmul.f32 1.0, %v3006
        %v3008 = vtanh.pop %v2940
        %v3009 = vxor.u32 %v2940, 2147483648
        %v3010 = vmul.f32 %v3009, 1.442695
        %v3011 = vpow.pop %v3010
        %v3012 = vadd.f32 %v3011, 1.0
        %v3013 = vrcp.pop %v3012
        %v3014 = vmul.f32 %v3012, %v3013
        %v3015 = vsub.f32 1.0, %v3014
        %v3016 = vmul.f32 %v3013, %v3015
        %v3017 = vadd.f32 %v3013, %v3016
        %vm3018 = vweird.f32 %v3012
        %vm3019 = vweird.f32 %v3013
        %vm3020 = vmor %vm3018, %vm3019
        %v3021 = vsel %vm3020, %v3013, %v3017
        %v3022 = vand.u32 2147483647, %v3012
        %vm3023 = vcmp.eq.f32.partialorder %v3022, 8.507059e+37
        %v3024 = vand.u32 %v3012, 2147483648
        %v3025 = vor.u32 1.1754944e-38, %v3024
        %v3026 = vsel %vm3023, %v3025, %v3021
        %v3027 = vmul.f32 1.0, %v3026
        %v3028 = vmul.f32 %v3007, 0.0
        %v3029 = vmul.f32 %v3007, %v3008
        %3031 = vrot.lane.b32.xlu0 %v3029, 64
        %v3032 = vpop.permute.xlu0 %3031
        %v3034 = vadd.f32 %v3028, %v3032
        %v3035 = vtanh.pop %v3034
        %v3036 = vmul.f32 %v3027, %v3035
        %3038 = vrot.lane.b32.xlu0 %v2988, 64
        %v3039 = vpop.permute.xlu0 %3038
        %3041 = vst.msk [vmem:[#allocation3] sm:$0xff] %vm690, %v3039
        %3043 = vrot.lane.b32.xlu0 %v3036, 64
        %v3044 = vpop.permute.xlu0 %3043
        %3046 = vst.msk [vmem:[%s1077] sm:$0xff] %vm690, %v3044
        %v3047 = vld [vmem:[%s1081] sm:$0xff]
        %v3048 = vld [vmem:[%s1081 + $0x8] sm:$0xff]
        %v3049 = vld [vmem:[%s1086 + $0x10] sm:$0xff]
        %v3050 = vld [vmem:[%s1086 + $0x18] sm:$0xff]
        %v3051 = vsel %vm690, %v3039, 0
        %3053 = vmatpush.msra.mxu0 0.0
        %3054 = vmatpush.msra.mxu0 0.0
        %3055 = vmatpush.msra.mxu0 0.0
        %3056 = vmatpush.msra.mxu0 0.0
        %3057 = vmatpush.msra.mxu0 0.0
        %3058 = vmatpush.msra.mxu0 0.0
        %3059 = vmatpush.msra.mxu0 0.0
        %3060 = vmatpush.msra.mxu0 0.0
        %3061 = vmatpush.msra.mxu0 %v2835
        %3062 = vmatpush.msra.mxu0 %v2833
        %3063 = vmatpush.msra.mxu0 %v2831
        %3064 = vmatpush.msra.mxu0 %v2829
        %3065 = vmatpush.msra.mxu0 %v2827
        %3066 = vmatpush.msra.mxu0 %v2825
        %3067 = vmatpush.msra.mxu0 %v2823
        %3068 = vmatpush.msra.mxu0 %v2821
        %3069 = vmatmul.f32.gmra.mxu0 %v3051
        %v3070 = vpop.f32.mrf.mxu0
        %v3071 = vadd.f32 0.0, %v3070
        %3072 = vdwg.mxu0
        %3073 = vmatpush.msra.mxu0 0.0
        %3074 = vmatpush.msra.mxu0 0.0
        %3075 = vmatpush.msra.mxu0 0.0
        %3076 = vmatpush.msra.mxu0 0.0
        %3077 = vmatpush.msra.mxu0 0.0
        %3078 = vmatpush.msra.mxu0 0.0
        %3079 = vmatpush.msra.mxu0 0.0
        %3080 = vmatpush.msra.mxu0 0.0
        %3081 = vmatpush.msra.mxu0 %v2836
        %3082 = vmatpush.msra.mxu0 %v2834
        %3083 = vmatpush.msra.mxu0 %v2832
        %3084 = vmatpush.msra.mxu0 %v2830
        %3085 = vmatpush.msra.mxu0 %v2828
        %3086 = vmatpush.msra.mxu0 %v2826
        %3087 = vmatpush.msra.mxu0 %v2824
        %3088 = vmatpush.msra.mxu0 %v2822
        %3089 = vmatmul.f32.gmra.mxu0 %v3051
        %v3090 = vpop.f32.mrf.mxu0
        %v3091 = vadd.f32 0.0, %v3090
        %3092 = vdwg.mxu0
        %v3093 = vadd.f32 %v3047, %v3071
        %v3094 = vadd.f32 %v3048, %v3091
        %v3095 = vsel %vm690, %v3044, 0
        %3097 = vmatpush.msra.mxu0 0.0
        %3098 = vmatpush.msra.mxu0 0.0
        %3099 = vmatpush.msra.mxu0 0.0
        %3100 = vmatpush.msra.mxu0 0.0
        %3101 = vmatpush.msra.mxu0 0.0
        %3102 = vmatpush.msra.mxu0 0.0
        %3103 = vmatpush.msra.mxu0 0.0
        %3104 = vmatpush.msra.mxu0 0.0
        %3105 = vmatpush.msra.mxu0 %v2851
        %3106 = vmatpush.msra.mxu0 %v2849
        %3107 = vmatpush.msra.mxu0 %v2847
        %3108 = vmatpush.msra.mxu0 %v2845
        %3109 = vmatpush.msra.mxu0 %v2843
        %3110 = vmatpush.msra.mxu0 %v2841
        %3111 = vmatpush.msra.mxu0 %v2839
        %3112 = vmatpush.msra.mxu0 %v2837
        %3113 = vmatmul.f32.gmra.mxu0 %v3095
        %v3114 = vpop.f32.mrf.mxu0
        %v3115 = vadd.f32 0.0, %v3114
        %3116 = vdwg.mxu0
        %3117 = vmatpush.msra.mxu0 0.0
        %3118 = vmatpush.msra.mxu0 0.0
        %3119 = vmatpush.msra.mxu0 0.0
        %3120 = vmatpush.msra.mxu0 0.0
        %3121 = vmatpush.msra.mxu0 0.0
        %3122 = vmatpush.msra.mxu0 0.0
        %3123 = vmatpush.msra.mxu0 0.0
        %3124 = vmatpush.msra.mxu0 0.0
        %3125 = vmatpush.msra.mxu0 %v2852
        %3126 = vmatpush.msra.mxu0 %v2850
        %3127 = vmatpush.msra.mxu0 %v2848
        %3128 = vmatpush.msra.mxu0 %v2846
        %3129 = vmatpush.msra.mxu0 %v2844
        %3130 = vmatpush.msra.mxu0 %v2842
        %3131 = vmatpush.msra.mxu0 %v2840
        %3132 = vmatpush.msra.mxu0 %v2838
        %3133 = vmatmul.f32.gmra.mxu0 %v3095
        %v3134 = vpop.f32.mrf.mxu0
        %v3135 = vadd.f32 0.0, %v3134
        %3136 = vdwg.mxu0
        %v3137 = vadd.f32 %v3049, %v3115
        %v3138 = vadd.f32 %v3050, %v3135
        %v3139 = vxor.u32 %v3093, 2147483648
        %v3140 = vmul.f32 %v3139, 1.442695
        %v3141 = vpow.pop %v3140
        %v3142 = vadd.f32 %v3141, 1.0
        %v3143 = vrcp.pop %v3142
        %v3144 = vmul.f32 %v3142, %v3143
        %v3145 = vsub.f32 1.0, %v3144
        %v3146 = vmul.f32 %v3143, %v3145
        %v3147 = vadd.f32 %v3143, %v3146
        %vm3148 = vweird.f32 %v3142
        %vm3149 = vweird.f32 %v3143
        %vm3150 = vmor %vm3148, %vm3149
        %v3151 = vsel %vm3150, %v3143, %v3147
        %v3152 = vand.u32 2147483647, %v3142
        %vm3153 = vcmp.eq.f32.partialorder %v3152, 8.507059e+37
        %v3154 = vand.u32 %v3142, 2147483648
        %v3155 = vor.u32 1.1754944e-38, %v3154
        %v3156 = vsel %vm3153, %v3155, %v3151
        %v3157 = vmul.f32 1.0, %v3156
        %v3158 = vtanh.pop %v3094
        %v3159 = vxor.u32 %v3094, 2147483648
        %v3160 = vmul.f32 %v3159, 1.442695
        %v3161 = vpow.pop %v3160
        %v3162 = vadd.f32 %v3161, 1.0
        %v3163 = vrcp.pop %v3162
        %v3164 = vmul.f32 %v3162, %v3163
        %v3165 = vsub.f32 1.0, %v3164
        %v3166 = vmul.f32 %v3163, %v3165
        %v3167 = vadd.f32 %v3163, %v3166
        %vm3168 = vweird.f32 %v3162
        %vm3169 = vweird.f32 %v3163
        %vm3170 = vmor %vm3168, %vm3169
        %v3171 = vsel %vm3170, %v3163, %v3167
        %v3172 = vand.u32 2147483647, %v3162
        %vm3173 = vcmp.eq.f32.partialorder %v3172, 8.507059e+37
        %v3174 = vand.u32 %v3162, 2147483648
        %v3175 = vor.u32 1.1754944e-38, %v3174
        %v3176 = vsel %vm3173, %v3175, %v3171
        %v3177 = vmul.f32 1.0, %v3176
        %v3178 = vmul.f32 %v3157, %v2986
        %v3179 = vmul.f32 %v3157, %v3158
        %3181 = vrot.lane.b32.xlu0 %v3179, 64
        %v3182 = vpop.permute.xlu0 %3181
        %v3184 = vadd.f32 %v3178, %v3182
        %v3185 = vtanh.pop %v3184
        %v3186 = vmul.f32 %v3177, %v3185
        %v3187 = vxor.u32 %v3137, 2147483648
        %v3188 = vmul.f32 %v3187, 1.442695
        %v3189 = vpow.pop %v3188
        %v3190 = vadd.f32 %v3189, 1.0
        %v3191 = vrcp.pop %v3190
        %v3192 = vmul.f32 %v3190, %v3191
        %v3193 = vsub.f32 1.0, %v3192
        %v3194 = vmul.f32 %v3191, %v3193
        %v3195 = vadd.f32 %v3191, %v3194
        %vm3196 = vweird.f32 %v3190
        %vm3197 = vweird.f32 %v3191
        %vm3198 = vmor %vm3196, %vm3197
        %v3199 = vsel %vm3198, %v3191, %v3195
        %v3200 = vand.u32 2147483647, %v3190
        %vm3201 = vcmp.eq.f32.partialorder %v3200, 8.507059e+37
        %v3202 = vand.u32 %v3190, 2147483648
        %v3203 = vor.u32 1.1754944e-38, %v3202
        %v3204 = vsel %vm3201, %v3203, %v3199
        %v3205 = vmul.f32 1.0, %v3204
        %v3206 = vtanh.pop %v3138
        %v3207 = vxor.u32 %v3138, 2147483648
        %v3208 = vmul.f32 %v3207, 1.442695
        %v3209 = vpow.pop %v3208
        %v3210 = vadd.f32 %v3209, 1.0
        %v3211 = vrcp.pop %v3210
        %v3212 = vmul.f32 %v3210, %v3211
        %v3213 = vsub.f32 1.0, %v3212
        %v3214 = vmul.f32 %v3211, %v3213
        %v3215 = vadd.f32 %v3211, %v3214
        %vm3216 = vweird.f32 %v3210
        %vm3217 = vweird.f32 %v3211
        %vm3218 = vmor %vm3216, %vm3217
        %v3219 = vsel %vm3218, %v3211, %v3215
        %v3220 = vand.u32 2147483647, %v3210
        %vm3221 = vcmp.eq.f32.partialorder %v3220, 8.507059e+37
        %v3222 = vand.u32 %v3210, 2147483648
        %v3223 = vor.u32 1.1754944e-38, %v3222
        %v3224 = vsel %vm3221, %v3223, %v3219
        %v3225 = vmul.f32 1.0, %v3224
        %v3226 = vmul.f32 %v3205, %v3034
        %v3227 = vmul.f32 %v3205, %v3206
        %3229 = vrot.lane.b32.xlu0 %v3227, 64
        %v3230 = vpop.permute.xlu0 %3229
        %v3232 = vadd.f32 %v3226, %v3230
        %v3233 = vtanh.pop %v3232
        %v3234 = vmul.f32 %v3225, %v3233
        %3236 = vrot.lane.b32.xlu0 %v3186, 64
        %v3237 = vpop.permute.xlu0 %3236
        %3239 = vst.msk [vmem:[%s1277] sm:$0xff] %vm690, %v3237
        %3241 = vrot.lane.b32.xlu0 %v3234, 64
        %v3242 = vpop.permute.xlu0 %3241
        %3244 = vst.msk [vmem:[%s1283] sm:$0xff] %vm690, %v3242
        %v3245 = vld [vmem:[%s1287] sm:$0xff]
        %v3246 = vld [vmem:[%s1287 + $0x8] sm:$0xff]
        %v3247 = vld [vmem:[%s1292 + $0x10] sm:$0xff]
        %v3248 = vld [vmem:[%s1292 + $0x18] sm:$0xff]
        %v3249 = vsel %vm690, %v3237, 0
        %3251 = vmatpush.msra.mxu0 0.0
        %3252 = vmatpush.msra.mxu0 0.0
        %3253 = vmatpush.msra.mxu0 0.0
        %3254 = vmatpush.msra.mxu0 0.0
        %3255 = vmatpush.msra.mxu0 0.0
        %3256 = vmatpush.msra.mxu0 0.0
        %3257 = vmatpush.msra.mxu0 0.0
        %3258 = vmatpush.msra.mxu0 0.0
        %3259 = vmatpush.msra.mxu0 %v2835
        %3260 = vmatpush.msra.mxu0 %v2833
        %3261 = vmatpush.msra.mxu0 %v2831
        %3262 = vmatpush.msra.mxu0 %v2829
        %3263 = vmatpush.msra.mxu0 %v2827
        %3264 = vmatpush.msra.mxu0 %v2825
        %3265 = vmatpush.msra.mxu0 %v2823
        %3266 = vmatpush.msra.mxu0 %v2821
        %3267 = vmatmul.f32.gmra.mxu0 %v3249
        %v3268 = vpop.f32.mrf.mxu0
        %v3269 = vadd.f32 0.0, %v3268
        %3270 = vdwg.mxu0
        %3271 = vmatpush.msra.mxu0 0.0
        %3272 = vmatpush.msra.mxu0 0.0
        %3273 = vmatpush.msra.mxu0 0.0
        %3274 = vmatpush.msra.mxu0 0.0
        %3275 = vmatpush.msra.mxu0 0.0
        %3276 = vmatpush.msra.mxu0 0.0
        %3277 = vmatpush.msra.mxu0 0.0
        %3278 = vmatpush.msra.mxu0 0.0
        %3279 = vmatpush.msra.mxu0 %v2836
        %3280 = vmatpush.msra.mxu0 %v2834
        %3281 = vmatpush.msra.mxu0 %v2832
        %3282 = vmatpush.msra.mxu0 %v2830
        %3283 = vmatpush.msra.mxu0 %v2828
        %3284 = vmatpush.msra.mxu0 %v2826
        %3285 = vmatpush.msra.mxu0 %v2824
        %3286 = vmatpush.msra.mxu0 %v2822
        %3287 = vmatmul.f32.gmra.mxu0 %v3249
        %v3288 = vpop.f32.mrf.mxu0
        %v3289 = vadd.f32 0.0, %v3288
        %3290 = vdwg.mxu0
        %v3291 = vadd.f32 %v3245, %v3269
        %v3292 = vadd.f32 %v3246, %v3289
        %v3293 = vsel %vm690, %v3242, 0
        %3295 = vmatpush.msra.mxu0 0.0
        %3296 = vmatpush.msra.mxu0 0.0
        %3297 = vmatpush.msra.mxu0 0.0
        %3298 = vmatpush.msra.mxu0 0.0
        %3299 = vmatpush.msra.mxu0 0.0
        %3300 = vmatpush.msra.mxu0 0.0
        %3301 = vmatpush.msra.mxu0 0.0
        %3302 = vmatpush.msra.mxu0 0.0
        %3303 = vmatpush.msra.mxu0 %v2851
        %3304 = vmatpush.msra.mxu0 %v2849
        %3305 = vmatpush.msra.mxu0 %v2847
        %3306 = vmatpush.msra.mxu0 %v2845
        %3307 = vmatpush.msra.mxu0 %v2843
        %3308 = vmatpush.msra.mxu0 %v2841
        %3309 = vmatpush.msra.mxu0 %v2839
        %3310 = vmatpush.msra.mxu0 %v2837
        %3311 = vmatmul.f32.gmra.mxu0 %v3293
        %v3312 = vpop.f32.mrf.mxu0
        %v3313 = vadd.f32 0.0, %v3312
        %3314 = vdwg.mxu0
        %3315 = vmatpush.msra.mxu0 0.0
        %3316 = vmatpush.msra.mxu0 0.0
        %3317 = vmatpush.msra.mxu0 0.0
        %3318 = vmatpush.msra.mxu0 0.0
        %3319 = vmatpush.msra.mxu0 0.0
        %3320 = vmatpush.msra.mxu0 0.0
        %3321 = vmatpush.msra.mxu0 0.0
        %3322 = vmatpush.msra.mxu0 0.0
        %3323 = vmatpush.msra.mxu0 %v2852
        %3324 = vmatpush.msra.mxu0 %v2850
        %3325 = vmatpush.msra.mxu0 %v2848
        %3326 = vmatpush.msra.mxu0 %v2846
        %3327 = vmatpush.msra.mxu0 %v2844
        %3328 = vmatpush.msra.mxu0 %v2842
        %3329 = vmatpush.msra.mxu0 %v2840
        %3330 = vmatpush.msra.mxu0 %v2838
        %3331 = vmatmul.f32.gmra.mxu0 %v3293
        %v3332 = vpop.f32.mrf.mxu0
        %v3333 = vadd.f32 0.0, %v3332
        %3334 = vdwg.mxu0
        %v3335 = vadd.f32 %v3247, %v3313
        %v3336 = vadd.f32 %v3248, %v3333
        %v3337 = vxor.u32 %v3291, 2147483648
        %v3338 = vmul.f32 %v3337, 1.442695
        %v3339 = vpow.pop %v3338
        %v3340 = vadd.f32 %v3339, 1.0
        %v3341 = vrcp.pop %v3340
        %v3342 = vmul.f32 %v3340, %v3341
        %v3343 = vsub.f32 1.0, %v3342
        %v3344 = vmul.f32 %v3341, %v3343
        %v3345 = vadd.f32 %v3341, %v3344
        %vm3346 = vweird.f32 %v3340
        %vm3347 = vweird.f32 %v3341
        %vm3348 = vmor %vm3346, %vm3347
        %v3349 = vsel %vm3348, %v3341, %v3345
        %v3350 = vand.u32 2147483647, %v3340
        %vm3351 = vcmp.eq.f32.partialorder %v3350, 8.507059e+37
        %v3352 = vand.u32 %v3340, 2147483648
        %v3353 = vor.u32 1.1754944e-38, %v3352
        %v3354 = vsel %vm3351, %v3353, %v3349
        %v3355 = vmul.f32 1.0, %v3354
        %v3356 = vtanh.pop %v3292
        %v3357 = vxor.u32 %v3292, 2147483648
        %v3358 = vmul.f32 %v3357, 1.442695
        %v3359 = vpow.pop %v3358
        %v3360 = vadd.f32 %v3359, 1.0
        %v3361 = vrcp.pop %v3360
        %v3362 = vmul.f32 %v3360, %v3361
        %v3363 = vsub.f32 1.0, %v3362
        %v3364 = vmul.f32 %v3361, %v3363
        %v3365 = vadd.f32 %v3361, %v3364
        %vm3366 = vweird.f32 %v3360
        %vm3367 = vweird.f32 %v3361
        %vm3368 = vmor %vm3366, %vm3367
        %v3369 = vsel %vm3368, %v3361, %v3365
        %v3370 = vand.u32 2147483647, %v3360
        %vm3371 = vcmp.eq.f32.partialorder %v3370, 8.507059e+37
        %v3372 = vand.u32 %v3360, 2147483648
        %v3373 = vor.u32 1.1754944e-38, %v3372
        %v3374 = vsel %vm3371, %v3373, %v3369
        %v3375 = vmul.f32 1.0, %v3374
        %v3376 = vmul.f32 %v3355, %v3184
        %v3377 = vmul.f32 %v3355, %v3356
        %3379 = vrot.lane.b32.xlu0 %v3377, 64
        %v3380 = vpop.permute.xlu0 %3379
        %v3382 = vadd.f32 %v3376, %v3380
        %v3383 = vtanh.pop %v3382
        %v3384 = vmul.f32 %v3375, %v3383
        %v3385 = vxor.u32 %v3335, 2147483648
        %v3386 = vmul.f32 %v3385, 1.442695
        %v3387 = vpow.pop %v3386
        %v3388 = vadd.f32 %v3387, 1.0
        %v3389 = vrcp.pop %v3388
        %v3390 = vmul.f32 %v3388, %v3389
        %v3391 = vsub.f32 1.0, %v3390
        %v3392 = vmul.f32 %v3389, %v3391
        %v3393 = vadd.f32 %v3389, %v3392
        %vm3394 = vweird.f32 %v3388
        %vm3395 = vweird.f32 %v3389
        %vm3396 = vmor %vm3394, %vm3395
        %v3397 = vsel %vm3396, %v3389, %v3393
        %v3398 = vand.u32 2147483647, %v3388
        %vm3399 = vcmp.eq.f32.partialorder %v3398, 8.507059e+37
        %v3400 = vand.u32 %v3388, 2147483648
        %v3401 = vor.u32 1.1754944e-38, %v3400
        %v3402 = vsel %vm3399, %v3401, %v3397
        %v3403 = vmul.f32 1.0, %v3402
        %v3404 = vtanh.pop %v3336
        %v3405 = vxor.u32 %v3336, 2147483648
        %v3406 = vmul.f32 %v3405, 1.442695
        %v3407 = vpow.pop %v3406
        %v3408 = vadd.f32 %v3407, 1.0
        %v3409 = vrcp.pop %v3408
        %v3410 = vmul.f32 %v3408, %v3409
        %v3411 = vsub.f32 1.0, %v3410
        %v3412 = vmul.f32 %v3409, %v3411
        %v3413 = vadd.f32 %v3409, %v3412
        %vm3414 = vweird.f32 %v3408
        %vm3415 = vweird.f32 %v3409
        %vm3416 = vmor %vm3414, %vm3415
        %v3417 = vsel %vm3416, %v3409, %v3413
        %v3418 = vand.u32 2147483647, %v3408
        %vm3419 = vcmp.eq.f32.partialorder %v3418, 8.507059e+37
        %v3420 = vand.u32 %v3408, 2147483648
        %v3421 = vor.u32 1.1754944e-38, %v3420
        %v3422 = vsel %vm3419, %v3421, %v3417
        %v3423 = vmul.f32 1.0, %v3422
        %v3424 = vmul.f32 %v3403, %v3232
        %v3425 = vmul.f32 %v3403, %v3404
        %3427 = vrot.lane.b32.xlu0 %v3425, 64
        %v3428 = vpop.permute.xlu0 %3427
        %v3430 = vadd.f32 %v3424, %v3428
        %v3431 = vtanh.pop %v3430
        %v3432 = vmul.f32 %v3423, %v3431
        %3434 = vrot.lane.b32.xlu0 %v3384, 64
        %v3435 = vpop.permute.xlu0 %3434
        %3437 = vst.msk [vmem:[%s1483] sm:$0xff] %vm690, %v3435
        %3439 = vrot.lane.b32.xlu0 %v3432, 64
        %v3440 = vpop.permute.xlu0 %3439
        %3442 = vst.msk [vmem:[%s1489] sm:$0xff] %vm690, %v3440
        %v3443 = vld [vmem:[%s1493] sm:$0xff]
        %v3444 = vld [vmem:[%s1493 + $0x8] sm:$0xff]
        %v3445 = vld [vmem:[%s1493 + $0x10] sm:$0xff]
        %v3446 = vld [vmem:[%s1493 + $0x18] sm:$0xff]
        %v3447 = vsel %vm690, %v3435, 0
        %3449 = vmatpush.msra.mxu0 0.0
        %3450 = vmatpush.msra.mxu0 0.0
        %3451 = vmatpush.msra.mxu0 0.0
        %3452 = vmatpush.msra.mxu0 0.0
        %3453 = vmatpush.msra.mxu0 0.0
        %3454 = vmatpush.msra.mxu0 0.0
        %3455 = vmatpush.msra.mxu0 0.0
        %3456 = vmatpush.msra.mxu0 0.0
        %3457 = vmatpush.msra.mxu0 %v2835
        %3458 = vmatpush.msra.mxu0 %v2833
        %3459 = vmatpush.msra.mxu0 %v2831
        %3460 = vmatpush.msra.mxu0 %v2829
        %3461 = vmatpush.msra.mxu0 %v2827
        %3462 = vmatpush.msra.mxu0 %v2825
        %3463 = vmatpush.msra.mxu0 %v2823
        %3464 = vmatpush.msra.mxu0 %v2821
        %3465 = vmatmul.f32.gmra.mxu0 %v3447
        %v3466 = vpop.f32.mrf.mxu0
        %v3467 = vadd.f32 0.0, %v3466
        %3468 = vdwg.mxu0
        %3469 = vmatpush.msra.mxu0 0.0
        %3470 = vmatpush.msra.mxu0 0.0
        %3471 = vmatpush.msra.mxu0 0.0
        %3472 = vmatpush.msra.mxu0 0.0
        %3473 = vmatpush.msra.mxu0 0.0
        %3474 = vmatpush.msra.mxu0 0.0
        %3475 = vmatpush.msra.mxu0 0.0
        %3476 = vmatpush.msra.mxu0 0.0
        %3477 = vmatpush.msra.mxu0 %v2836
        %3478 = vmatpush.msra.mxu0 %v2834
        %3479 = vmatpush.msra.mxu0 %v2832
        %3480 = vmatpush.msra.mxu0 %v2830
        %3481 = vmatpush.msra.mxu0 %v2828
        %3482 = vmatpush.msra.mxu0 %v2826
        %3483 = vmatpush.msra.mxu0 %v2824
        %3484 = vmatpush.msra.mxu0 %v2822
        %3485 = vmatmul.f32.gmra.mxu0 %v3447
        %v3486 = vpop.f32.mrf.mxu0
        %v3487 = vadd.f32 0.0, %v3486
        %3488 = vdwg.mxu0
        %v3489 = vadd.f32 %v3443, %v3467
        %v3490 = vadd.f32 %v3444, %v3487
        %v3491 = vsel %vm690, %v3440, 0
        %3493 = vmatpush.msra.mxu0 0.0
        %3494 = vmatpush.msra.mxu0 0.0
        %3495 = vmatpush.msra.mxu0 0.0
        %3496 = vmatpush.msra.mxu0 0.0
        %3497 = vmatpush.msra.mxu0 0.0
        %3498 = vmatpush.msra.mxu0 0.0
        %3499 = vmatpush.msra.mxu0 0.0
        %3500 = vmatpush.msra.mxu0 0.0
        %3501 = vmatpush.msra.mxu0 %v2851
        %3502 = vmatpush.msra.mxu0 %v2849
        %3503 = vmatpush.msra.mxu0 %v2847
        %3504 = vmatpush.msra.mxu0 %v2845
        %3505 = vmatpush.msra.mxu0 %v2843
        %3506 = vmatpush.msra.mxu0 %v2841
        %3507 = vmatpush.msra.mxu0 %v2839
        %3508 = vmatpush.msra.mxu0 %v2837
        %3509 = vmatmul.f32.gmra.mxu0 %v3491
        %v3510 = vpop.f32.mrf.mxu0
        %v3511 = vadd.f32 0.0, %v3510
        %3512 = vdwg.mxu0
        %3513 = vmatpush.msra.mxu0 0.0
        %3514 = vmatpush.msra.mxu0 0.0
        %3515 = vmatpush.msra.mxu0 0.0
        %3516 = vmatpush.msra.mxu0 0.0
        %3517 = vmatpush.msra.mxu0 0.0
        %3518 = vmatpush.msra.mxu0 0.0
        %3519 = vmatpush.msra.mxu0 0.0
        %3520 = vmatpush.msra.mxu0 0.0
        %3521 = vmatpush.msra.mxu0 %v2852
        %3522 = vmatpush.msra.mxu0 %v2850
        %3523 = vmatpush.msra.mxu0 %v2848
        %3524 = vmatpush.msra.mxu0 %v2846
        %3525 = vmatpush.msra.mxu0 %v2844
        %3526 = vmatpush.msra.mxu0 %v2842
        %3527 = vmatpush.msra.mxu0 %v2840
        %3528 = vmatpush.msra.mxu0 %v2838
        %3529 = vmatmul.f32.gmra.mxu0 %v3491
        %v3530 = vpop.f32.mrf.mxu0
        %v3531 = vadd.f32 0.0, %v3530
        %3532 = vdwg.mxu0
        %v3533 = vadd.f32 %v3445, %v3511
        %v3534 = vadd.f32 %v3446, %v3531
        %v3535 = vxor.u32 %v3489, 2147483648
        %v3536 = vmul.f32 %v3535, 1.442695
        %v3537 = vpow.pop %v3536
        %v3538 = vadd.f32 %v3537, 1.0
        %v3539 = vrcp.pop %v3538
        %v3540 = vmul.f32 %v3538, %v3539
        %v3541 = vsub.f32 1.0, %v3540
        %v3542 = vmul.f32 %v3539, %v3541
        %v3543 = vadd.f32 %v3539, %v3542
        %vm3544 = vweird.f32 %v3538
        %vm3545 = vweird.f32 %v3539
        %vm3546 = vmor %vm3544, %vm3545
        %v3547 = vsel %vm3546, %v3539, %v3543
        %v3548 = vand.u32 2147483647, %v3538
        %vm3549 = vcmp.eq.f32.partialorder %v3548, 8.507059e+37
        %v3550 = vand.u32 %v3538, 2147483648
        %v3551 = vor.u32 1.1754944e-38, %v3550
        %v3552 = vsel %vm3549, %v3551, %v3547
        %v3553 = vmul.f32 1.0, %v3552
        %v3554 = vtanh.pop %v3490
        %v3555 = vxor.u32 %v3490, 2147483648
        %v3556 = vmul.f32 %v3555, 1.442695
        %v3557 = vpow.pop %v3556
        %v3558 = vadd.f32 %v3557, 1.0
        %v3559 = vrcp.pop %v3558
        %v3560 = vmul.f32 %v3558, %v3559
        %v3561 = vsub.f32 1.0, %v3560
        %v3562 = vmul.f32 %v3559, %v3561
        %v3563 = vadd.f32 %v3559, %v3562
        %vm3564 = vweird.f32 %v3558
        %vm3565 = vweird.f32 %v3559
        %vm3566 = vmor %vm3564, %vm3565
        %v3567 = vsel %vm3566, %v3559, %v3563
        %v3568 = vand.u32 2147483647, %v3558
        %vm3569 = vcmp.eq.f32.partialorder %v3568, 8.507059e+37
        %v3570 = vand.u32 %v3558, 2147483648
        %v3571 = vor.u32 1.1754944e-38, %v3570
        %v3572 = vsel %vm3569, %v3571, %v3567
        %v3573 = vmul.f32 1.0, %v3572
        %v3574 = vmul.f32 %v3553, %v3382
        %v3575 = vmul.f32 %v3553, %v3554
        %3577 = vrot.lane.b32.xlu0 %v3575, 64
        %v3578 = vpop.permute.xlu0 %3577
        %v3580 = vadd.f32 %v3574, %v3578
        %v3581 = vtanh.pop %v3580
        %v3582 = vmul.f32 %v3573, %v3581
        %v3583 = vxor.u32 %v3533, 2147483648
        %v3584 = vmul.f32 %v3583, 1.442695
        %v3585 = vpow.pop %v3584
        %v3586 = vadd.f32 %v3585, 1.0
        %v3587 = vrcp.pop %v3586
        %v3588 = vmul.f32 %v3586, %v3587
        %v3589 = vsub.f32 1.0, %v3588
        %v3590 = vmul.f32 %v3587, %v3589
        %v3591 = vadd.f32 %v3587, %v3590
        %vm3592 = vweird.f32 %v3586
        %vm3593 = vweird.f32 %v3587
        %vm3594 = vmor %vm3592, %vm3593
        %v3595 = vsel %vm3594, %v3587, %v3591
        %v3596 = vand.u32 2147483647, %v3586
        %vm3597 = vcmp.eq.f32.partialorder %v3596, 8.507059e+37
        %v3598 = vand.u32 %v3586, 2147483648
        %v3599 = vor.u32 1.1754944e-38, %v3598
        %v3600 = vsel %vm3597, %v3599, %v3595
        %v3601 = vmul.f32 1.0, %v3600
        %v3602 = vtanh.pop %v3534
        %v3603 = vxor.u32 %v3534, 2147483648
        %v3604 = vmul.f32 %v3603, 1.442695
        %v3605 = vpow.pop %v3604
        %v3606 = vadd.f32 %v3605, 1.0
        %v3607 = vrcp.pop %v3606
        %v3608 = vmul.f32 %v3606, %v3607
        %v3609 = vsub.f32 1.0, %v3608
        %v3610 = vmul.f32 %v3607, %v3609
        %v3611 = vadd.f32 %v3607, %v3610
        %vm3612 = vweird.f32 %v3606
        %vm3613 = vweird.f32 %v3607
        %vm3614 = vmor %vm3612, %vm3613
        %v3615 = vsel %vm3614, %v3607, %v3611
        %v3616 = vand.u32 2147483647, %v3606
        %vm3617 = vcmp.eq.f32.partialorder %v3616, 8.507059e+37
        %v3618 = vand.u32 %v3606, 2147483648
        %v3619 = vor.u32 1.1754944e-38, %v3618
        %v3620 = vsel %vm3617, %v3619, %v3615
        %v3621 = vmul.f32 1.0, %v3620
        %v3622 = vmul.f32 %v3601, %v3430
        %v3623 = vmul.f32 %v3601, %v3602
        %3625 = vrot.lane.b32.xlu0 %v3623, 64
        %v3626 = vpop.permute.xlu0 %3625
        %v3628 = vadd.f32 %v3622, %v3626
        %v3629 = vtanh.pop %v3628
        %v3630 = vmul.f32 %v3621, %v3629
        %3632 = vrot.lane.b32.xlu0 %v3582, 64
        %v3633 = vpop.permute.xlu0 %3632
        %3635 = vst.msk [vmem:[%s1686] sm:$0xff] %vm690, %v3633
        %3637 = vrot.lane.b32.xlu0 %v3630, 64
        %v3638 = vpop.permute.xlu0 %3637
        %3640 = vst.msk [vmem:[%s1692] sm:$0xff] %vm690, %v3638
        %v3641 = vld [vmem:[%s1292] sm:$0xff]
        %v3642 = vld [vmem:[%s1292 + $0x8] sm:$0xff]
        %v3643 = vld [vmem:[%s1287 + $0x10] sm:$0xff]
        %v3644 = vld [vmem:[%s1287 + $0x18] sm:$0xff]
        %v3645 = vsel %vm690, %v3633, 0
        %3647 = vmatpush.msra.mxu0 0.0
        %3648 = vmatpush.msra.mxu0 0.0
        %3649 = vmatpush.msra.mxu0 0.0
        %3650 = vmatpush.msra.mxu0 0.0
        %3651 = vmatpush.msra.mxu0 0.0
        %3652 = vmatpush.msra.mxu0 0.0
        %3653 = vmatpush.msra.mxu0 0.0
        %3654 = vmatpush.msra.mxu0 0.0
        %3655 = vmatpush.msra.mxu0 %v2835
        %3656 = vmatpush.msra.mxu0 %v2833
        %3657 = vmatpush.msra.mxu0 %v2831
        %3658 = vmatpush.msra.mxu0 %v2829
        %3659 = vmatpush.msra.mxu0 %v2827
        %3660 = vmatpush.msra.mxu0 %v2825
        %3661 = vmatpush.msra.mxu0 %v2823
        %3662 = vmatpush.msra.mxu0 %v2821
        %3663 = vmatmul.f32.gmra.mxu0 %v3645
        %v3664 = vpop.f32.mrf.mxu0
        %v3665 = vadd.f32 0.0, %v3664
        %3666 = vdwg.mxu0
        %3667 = vmatpush.msra.mxu0 0.0
        %3668 = vmatpush.msra.mxu0 0.0
        %3669 = vmatpush.msra.mxu0 0.0
        %3670 = vmatpush.msra.mxu0 0.0
        %3671 = vmatpush.msra.mxu0 0.0
        %3672 = vmatpush.msra.mxu0 0.0
        %3673 = vmatpush.msra.mxu0 0.0
        %3674 = vmatpush.msra.mxu0 0.0
        %3675 = vmatpush.msra.mxu0 %v2836
        %3676 = vmatpush.msra.mxu0 %v2834
        %3677 = vmatpush.msra.mxu0 %v2832
        %3678 = vmatpush.msra.mxu0 %v2830
        %3679 = vmatpush.msra.mxu0 %v2828
        %3680 = vmatpush.msra.mxu0 %v2826
        %3681 = vmatpush.msra.mxu0 %v2824
        %3682 = vmatpush.msra.mxu0 %v2822
        %3683 = vmatmul.f32.gmra.mxu0 %v3645
        %v3684 = vpop.f32.mrf.mxu0
        %v3685 = vadd.f32 0.0, %v3684
        %3686 = vdwg.mxu0
        %v3687 = vadd.f32 %v3641, %v3665
        %v3688 = vadd.f32 %v3642, %v3685
        %v3689 = vsel %vm690, %v3638, 0
        %3691 = vmatpush.msra.mxu0 0.0
        %3692 = vmatpush.msra.mxu0 0.0
        %3693 = vmatpush.msra.mxu0 0.0
        %3694 = vmatpush.msra.mxu0 0.0
        %3695 = vmatpush.msra.mxu0 0.0
        %3696 = vmatpush.msra.mxu0 0.0
        %3697 = vmatpush.msra.mxu0 0.0
        %3698 = vmatpush.msra.mxu0 0.0
        %3699 = vmatpush.msra.mxu0 %v2851
        %3700 = vmatpush.msra.mxu0 %v2849
        %3701 = vmatpush.msra.mxu0 %v2847
        %3702 = vmatpush.msra.mxu0 %v2845
        %3703 = vmatpush.msra.mxu0 %v2843
        %3704 = vmatpush.msra.mxu0 %v2841
        %3705 = vmatpush.msra.mxu0 %v2839
        %3706 = vmatpush.msra.mxu0 %v2837
        %3707 = vmatmul.f32.gmra.mxu0 %v3689
        %v3708 = vpop.f32.mrf.mxu0
        %v3709 = vadd.f32 0.0, %v3708
        %3710 = vdwg.mxu0
        %3711 = vmatpush.msra.mxu0 0.0
        %3712 = vmatpush.msra.mxu0 0.0
        %3713 = vmatpush.msra.mxu0 0.0
        %3714 = vmatpush.msra.mxu0 0.0
        %3715 = vmatpush.msra.mxu0 0.0
        %3716 = vmatpush.msra.mxu0 0.0
        %3717 = vmatpush.msra.mxu0 0.0
        %3718 = vmatpush.msra.mxu0 0.0
        %3719 = vmatpush.msra.mxu0 %v2852
        %3720 = vmatpush.msra.mxu0 %v2850
        %3721 = vmatpush.msra.mxu0 %v2848
        %3722 = vmatpush.msra.mxu0 %v2846
        %3723 = vmatpush.msra.mxu0 %v2844
        %3724 = vmatpush.msra.mxu0 %v2842
        %3725 = vmatpush.msra.mxu0 %v2840
        %3726 = vmatpush.msra.mxu0 %v2838
        %3727 = vmatmul.f32.gmra.mxu0 %v3689
        %v3728 = vpop.f32.mrf.mxu0
        %v3729 = vadd.f32 0.0, %v3728
        %3730 = vdwg.mxu0
        %v3731 = vadd.f32 %v3643, %v3709
        %v3732 = vadd.f32 %v3644, %v3729
        %v3733 = vxor.u32 %v3687, 2147483648
        %v3734 = vmul.f32 %v3733, 1.442695
        %v3735 = vpow.pop %v3734
        %v3736 = vadd.f32 %v3735, 1.0
        %v3737 = vrcp.pop %v3736
        %v3738 = vmul.f32 %v3736, %v3737
        %v3739 = vsub.f32 1.0, %v3738
        %v3740 = vmul.f32 %v3737, %v3739
        %v3741 = vadd.f32 %v3737, %v3740
        %vm3742 = vweird.f32 %v3736
        %vm3743 = vweird.f32 %v3737
        %vm3744 = vmor %vm3742, %vm3743
        %v3745 = vsel %vm3744, %v3737, %v3741
        %v3746 = vand.u32 2147483647, %v3736
        %vm3747 = vcmp.eq.f32.partialorder %v3746, 8.507059e+37
        %v3748 = vand.u32 %v3736, 2147483648
        %v3749 = vor.u32 1.1754944e-38, %v3748
        %v3750 = vsel %vm3747, %v3749, %v3745
        %v3751 = vmul.f32 1.0, %v3750
        %v3752 = vtanh.pop %v3688
        %v3753 = vxor.u32 %v3688, 2147483648
        %v3754 = vmul.f32 %v3753, 1.442695
        %v3755 = vpow.pop %v3754
        %v3756 = vadd.f32 %v3755, 1.0
        %v3757 = vrcp.pop %v3756
        %v3758 = vmul.f32 %v3756, %v3757
        %v3759 = vsub.f32 1.0, %v3758
        %v3760 = vmul.f32 %v3757, %v3759
        %v3761 = vadd.f32 %v3757, %v3760
        %vm3762 = vweird.f32 %v3756
        %vm3763 = vweird.f32 %v3757
        %vm3764 = vmor %vm3762, %vm3763
        %v3765 = vsel %vm3764, %v3757, %v3761
        %v3766 = vand.u32 2147483647, %v3756
        %vm3767 = vcmp.eq.f32.partialorder %v3766, 8.507059e+37
        %v3768 = vand.u32 %v3756, 2147483648
        %v3769 = vor.u32 1.1754944e-38, %v3768
        %v3770 = vsel %vm3767, %v3769, %v3765
        %v3771 = vmul.f32 1.0, %v3770
        %v3772 = vmul.f32 %v3751, %v3580
        %v3773 = vmul.f32 %v3751, %v3752
        %3775 = vrot.lane.b32.xlu0 %v3773, 64
        %v3776 = vpop.permute.xlu0 %3775
        %v3778 = vadd.f32 %v3772, %v3776
        %v3779 = vtanh.pop %v3778
        %v3780 = vmul.f32 %v3771, %v3779
        %v3781 = vxor.u32 %v3731, 2147483648
        %v3782 = vmul.f32 %v3781, 1.442695
        %v3783 = vpow.pop %v3782
        %v3784 = vadd.f32 %v3783, 1.0
        %v3785 = vrcp.pop %v3784
        %v3786 = vmul.f32 %v3784, %v3785
        %v3787 = vsub.f32 1.0, %v3786
        %v3788 = vmul.f32 %v3785, %v3787
        %v3789 = vadd.f32 %v3785, %v3788
        %vm3790 = vweird.f32 %v3784
        %vm3791 = vweird.f32 %v3785
        %vm3792 = vmor %vm3790, %vm3791
        %v3793 = vsel %vm3792, %v3785, %v3789
        %v3794 = vand.u32 2147483647, %v3784
        %vm3795 = vcmp.eq.f32.partialorder %v3794, 8.507059e+37
        %v3796 = vand.u32 %v3784, 2147483648
        %v3797 = vor.u32 1.1754944e-38, %v3796
        %v3798 = vsel %vm3795, %v3797, %v3793
        %v3799 = vmul.f32 1.0, %v3798
        %v3800 = vtanh.pop %v3732
        %v3801 = vxor.u32 %v3732, 2147483648
        %v3802 = vmul.f32 %v3801, 1.442695
        %v3803 = vpow.pop %v3802
        %v3804 = vadd.f32 %v3803, 1.0
        %v3805 = vrcp.pop %v3804
        %v3806 = vmul.f32 %v3804, %v3805
        %v3807 = vsub.f32 1.0, %v3806
        %v3808 = vmul.f32 %v3805, %v3807
        %v3809 = vadd.f32 %v3805, %v3808
        %vm3810 = vweird.f32 %v3804
        %vm3811 = vweird.f32 %v3805
        %vm3812 = vmor %vm3810, %vm3811
        %v3813 = vsel %vm3812, %v3805, %v3809
        %v3814 = vand.u32 2147483647, %v3804
        %vm3815 = vcmp.eq.f32.partialorder %v3814, 8.507059e+37
        %v3816 = vand.u32 %v3804, 2147483648
        %v3817 = vor.u32 1.1754944e-38, %v3816
        %v3818 = vsel %vm3815, %v3817, %v3813
        %v3819 = vmul.f32 1.0, %v3818
        %v3820 = vmul.f32 %v3799, %v3628
        %v3821 = vmul.f32 %v3799, %v3800
        %3823 = vrot.lane.b32.xlu0 %v3821, 64
        %v3824 = vpop.permute.xlu0 %3823
        %v3826 = vadd.f32 %v3820, %v3824
        %v3827 = vtanh.pop %v3826
        %v3828 = vmul.f32 %v3819, %v3827
        %3830 = vrot.lane.b32.xlu0 %v3780, 64
        %v3831 = vpop.permute.xlu0 %3830
        %3833 = vst.msk [vmem:[%s1886] sm:$0xff] %vm690, %v3831
        %3835 = vrot.lane.b32.xlu0 %v3828, 64
        %v3836 = vpop.permute.xlu0 %3835
        %3838 = vst.msk [vmem:[%s1892] sm:$0xff] %vm690, %v3836
        %v3839 = vld [vmem:[%s1086] sm:$0xff]
        %v3840 = vld [vmem:[%s1086 + $0x8] sm:$0xff]
        %v3841 = vld [vmem:[%s1081 + $0x10] sm:$0xff]
        %v3842 = vld [vmem:[%s1081 + $0x18] sm:$0xff]
        %v3843 = vsel %vm690, %v3831, 0
        %3845 = vmatpush.msra.mxu0 0.0
        %3846 = vmatpush.msra.mxu0 0.0
        %3847 = vmatpush.msra.mxu0 0.0
        %3848 = vmatpush.msra.mxu0 0.0
        %3849 = vmatpush.msra.mxu0 0.0
        %3850 = vmatpush.msra.mxu0 0.0
        %3851 = vmatpush.msra.mxu0 0.0
        %3852 = vmatpush.msra.mxu0 0.0
        %3853 = vmatpush.msra.mxu0 %v2835
        %3854 = vmatpush.msra.mxu0 %v2833
        %3855 = vmatpush.msra.mxu0 %v2831
        %3856 = vmatpush.msra.mxu0 %v2829
        %3857 = vmatpush.msra.mxu0 %v2827
        %3858 = vmatpush.msra.mxu0 %v2825
        %3859 = vmatpush.msra.mxu0 %v2823
        %3860 = vmatpush.msra.mxu0 %v2821
        %3861 = vmatmul.f32.gmra.mxu0 %v3843
        %v3862 = vpop.f32.mrf.mxu0
        %v3863 = vadd.f32 0.0, %v3862
        %3864 = vdwg.mxu0
        %3865 = vmatpush.msra.mxu0 0.0
        %3866 = vmatpush.msra.mxu0 0.0
        %3867 = vmatpush.msra.mxu0 0.0
        %3868 = vmatpush.msra.mxu0 0.0
        %3869 = vmatpush.msra.mxu0 0.0
        %3870 = vmatpush.msra.mxu0 0.0
        %3871 = vmatpush.msra.mxu0 0.0
        %3872 = vmatpush.msra.mxu0 0.0
        %3873 = vmatpush.msra.mxu0 %v2836
        %3874 = vmatpush.msra.mxu0 %v2834
        %3875 = vmatpush.msra.mxu0 %v2832
        %3876 = vmatpush.msra.mxu0 %v2830
        %3877 = vmatpush.msra.mxu0 %v2828
        %3878 = vmatpush.msra.mxu0 %v2826
        %3879 = vmatpush.msra.mxu0 %v2824
        %3880 = vmatpush.msra.mxu0 %v2822
        %3881 = vmatmul.f32.gmra.mxu0 %v3843
        %v3882 = vpop.f32.mrf.mxu0
        %v3883 = vadd.f32 0.0, %v3882
        %3884 = vdwg.mxu0
        %v3885 = vadd.f32 %v3839, %v3863
        %v3886 = vadd.f32 %v3840, %v3883
        %v3887 = vsel %vm690, %v3836, 0
        %3889 = vmatpush.msra.mxu0 0.0
        %3890 = vmatpush.msra.mxu0 0.0
        %3891 = vmatpush.msra.mxu0 0.0
        %3892 = vmatpush.msra.mxu0 0.0
        %3893 = vmatpush.msra.mxu0 0.0
        %3894 = vmatpush.msra.mxu0 0.0
        %3895 = vmatpush.msra.mxu0 0.0
        %3896 = vmatpush.msra.mxu0 0.0
        %3897 = vmatpush.msra.mxu0 %v2851
        %3898 = vmatpush.msra.mxu0 %v2849
        %3899 = vmatpush.msra.mxu0 %v2847
        %3900 = vmatpush.msra.mxu0 %v2845
        %3901 = vmatpush.msra.mxu0 %v2843
        %3902 = vmatpush.msra.mxu0 %v2841
        %3903 = vmatpush.msra.mxu0 %v2839
        %3904 = vmatpush.msra.mxu0 %v2837
        %3905 = vmatmul.f32.gmra.mxu0 %v3887
        %v3906 = vpop.f32.mrf.mxu0
        %v3907 = vadd.f32 0.0, %v3906
        %3908 = vdwg.mxu0
        %3909 = vmatpush.msra.mxu0 0.0
        %3910 = vmatpush.msra.mxu0 0.0
        %3911 = vmatpush.msra.mxu0 0.0
        %3912 = vmatpush.msra.mxu0 0.0
        %3913 = vmatpush.msra.mxu0 0.0
        %3914 = vmatpush.msra.mxu0 0.0
        %3915 = vmatpush.msra.mxu0 0.0
        %3916 = vmatpush.msra.mxu0 0.0
        %3917 = vmatpush.msra.mxu0 %v2852
        %3918 = vmatpush.msra.mxu0 %v2850
        %3919 = vmatpush.msra.mxu0 %v2848
        %3920 = vmatpush.msra.mxu0 %v2846
        %3921 = vmatpush.msra.mxu0 %v2844
        %3922 = vmatpush.msra.mxu0 %v2842
        %3923 = vmatpush.msra.mxu0 %v2840
        %3924 = vmatpush.msra.mxu0 %v2838
        %3925 = vmatmul.f32.gmra.mxu0 %v3887
        %v3926 = vpop.f32.mrf.mxu0
        %v3927 = vadd.f32 0.0, %v3926
        %3928 = vdwg.mxu0
        %v3929 = vadd.f32 %v3841, %v3907
        %v3930 = vadd.f32 %v3842, %v3927
        %v3931 = vxor.u32 %v3885, 2147483648
        %v3932 = vmul.f32 %v3931, 1.442695
        %v3933 = vpow.pop %v3932
        %v3934 = vadd.f32 %v3933, 1.0
        %v3935 = vrcp.pop %v3934
        %v3936 = vmul.f32 %v3934, %v3935
        %v3937 = vsub.f32 1.0, %v3936
        %v3938 = vmul.f32 %v3935, %v3937
        %v3939 = vadd.f32 %v3935, %v3938
        %vm3940 = vweird.f32 %v3934
        %vm3941 = vweird.f32 %v3935
        %vm3942 = vmor %vm3940, %vm3941
        %v3943 = vsel %vm3942, %v3935, %v3939
        %v3944 = vand.u32 2147483647, %v3934
        %vm3945 = vcmp.eq.f32.partialorder %v3944, 8.507059e+37
        %v3946 = vand.u32 %v3934, 2147483648
        %v3947 = vor.u32 1.1754944e-38, %v3946
        %v3948 = vsel %vm3945, %v3947, %v3943
        %v3949 = vmul.f32 1.0, %v3948
        %v3950 = vtanh.pop %v3886
        %v3951 = vxor.u32 %v3886, 2147483648
        %v3952 = vmul.f32 %v3951, 1.442695
        %v3953 = vpow.pop %v3952
        %v3954 = vadd.f32 %v3953, 1.0
        %v3955 = vrcp.pop %v3954
        %v3956 = vmul.f32 %v3954, %v3955
        %v3957 = vsub.f32 1.0, %v3956
        %v3958 = vmul.f32 %v3955, %v3957
        %v3959 = vadd.f32 %v3955, %v3958
        %vm3960 = vweird.f32 %v3954
        %vm3961 = vweird.f32 %v3955
        %vm3962 = vmor %vm3960, %vm3961
        %v3963 = vsel %vm3962, %v3955, %v3959
        %v3964 = vand.u32 2147483647, %v3954
        %vm3965 = vcmp.eq.f32.partialorder %v3964, 8.507059e+37
        %v3966 = vand.u32 %v3954, 2147483648
        %v3967 = vor.u32 1.1754944e-38, %v3966
        %v3968 = vsel %vm3965, %v3967, %v3963
        %v3969 = vmul.f32 1.0, %v3968
        %v3970 = vmul.f32 %v3949, %v3778
        %v3971 = vmul.f32 %v3949, %v3950
        %3973 = vrot.lane.b32.xlu0 %v3971, 64
        %v3974 = vpop.permute.xlu0 %3973
        %v3976 = vadd.f32 %v3970, %v3974
        %v3977 = vtanh.pop %v3976
        %v3978 = vmul.f32 %v3969, %v3977
        %v3979 = vxor.u32 %v3929, 2147483648
        %v3980 = vmul.f32 %v3979, 1.442695
        %v3981 = vpow.pop %v3980
        %v3982 = vadd.f32 %v3981, 1.0
        %v3983 = vrcp.pop %v3982
        %v3984 = vmul.f32 %v3982, %v3983
        %v3985 = vsub.f32 1.0, %v3984
        %v3986 = vmul.f32 %v3983, %v3985
        %v3987 = vadd.f32 %v3983, %v3986
        %vm3988 = vweird.f32 %v3982
        %vm3989 = vweird.f32 %v3983
        %vm3990 = vmor %vm3988, %vm3989
        %v3991 = vsel %vm3990, %v3983, %v3987
        %v3992 = vand.u32 2147483647, %v3982
        %vm3993 = vcmp.eq.f32.partialorder %v3992, 8.507059e+37
        %v3994 = vand.u32 %v3982, 2147483648
        %v3995 = vor.u32 1.1754944e-38, %v3994
        %v3996 = vsel %vm3993, %v3995, %v3991
        %v3997 = vmul.f32 1.0, %v3996
        %v3998 = vtanh.pop %v3930
        %v3999 = vxor.u32 %v3930, 2147483648
        %v4000 = vmul.f32 %v3999, 1.442695
        %v4001 = vpow.pop %v4000
        %v4002 = vadd.f32 %v4001, 1.0
        %v4003 = vrcp.pop %v4002
        %v4004 = vmul.f32 %v4002, %v4003
        %v4005 = vsub.f32 1.0, %v4004
        %v4006 = vmul.f32 %v4003, %v4005
        %v4007 = vadd.f32 %v4003, %v4006
        %vm4008 = vweird.f32 %v4002
        %vm4009 = vweird.f32 %v4003
        %vm4010 = vmor %vm4008, %vm4009
        %v4011 = vsel %vm4010, %v4003, %v4007
        %v4012 = vand.u32 2147483647, %v4002
        %vm4013 = vcmp.eq.f32.partialorder %v4012, 8.507059e+37
        %v4014 = vand.u32 %v4002, 2147483648
        %v4015 = vor.u32 1.1754944e-38, %v4014
        %v4016 = vsel %vm4013, %v4015, %v4011
        %v4017 = vmul.f32 1.0, %v4016
        %v4018 = vmul.f32 %v3997, %v3826
        %v4019 = vmul.f32 %v3997, %v3998
        %4021 = vrot.lane.b32.xlu0 %v4019, 64
        %v4022 = vpop.permute.xlu0 %4021
        %v4024 = vadd.f32 %v4018, %v4022
        %v4025 = vtanh.pop %v4024
        %v4026 = vmul.f32 %v4017, %v4025
        %4028 = vrot.lane.b32.xlu0 %v3978, 64
        %v4029 = vpop.permute.xlu0 %4028
        %4031 = vst.msk [vmem:[%s2086] sm:$0xff] %vm690, %v4029
        %4033 = vrot.lane.b32.xlu0 %v4026, 64
        %v4034 = vpop.permute.xlu0 %4033
        %4036 = vst.msk [vmem:[%s2092] sm:$0xff] %vm690, %v4034
        %v4037 = vld [vmem:[%s882] sm:$0xff]
        %v4038 = vld [vmem:[%s882 + $0x8] sm:$0xff]
        %v4039 = vld [vmem:[%s877 + $0x10] sm:$0xff]
        %v4040 = vld [vmem:[%s877 + $0x18] sm:$0xff]
        %v4041 = vsel %vm690, %v4029, 0
        %4043 = vmatpush.msra.mxu0 0.0
        %4044 = vmatpush.msra.mxu0 0.0
        %4045 = vmatpush.msra.mxu0 0.0
        %4046 = vmatpush.msra.mxu0 0.0
        %4047 = vmatpush.msra.mxu0 0.0
        %4048 = vmatpush.msra.mxu0 0.0
        %4049 = vmatpush.msra.mxu0 0.0
        %4050 = vmatpush.msra.mxu0 0.0
        %4051 = vmatpush.msra.mxu0 %v2835
        %4052 = vmatpush.msra.mxu0 %v2833
        %4053 = vmatpush.msra.mxu0 %v2831
        %4054 = vmatpush.msra.mxu0 %v2829
        %4055 = vmatpush.msra.mxu0 %v2827
        %4056 = vmatpush.msra.mxu0 %v2825
        %4057 = vmatpush.msra.mxu0 %v2823
        %4058 = vmatpush.msra.mxu0 %v2821
        %4059 = vmatmul.f32.gmra.mxu0 %v4041
        %v4060 = vpop.f32.mrf.mxu0
        %v4061 = vadd.f32 0.0, %v4060
        %4062 = vdwg.mxu0
        %4063 = vmatpush.msra.mxu0 0.0
        %4064 = vmatpush.msra.mxu0 0.0
        %4065 = vmatpush.msra.mxu0 0.0
        %4066 = vmatpush.msra.mxu0 0.0
        %4067 = vmatpush.msra.mxu0 0.0
        %4068 = vmatpush.msra.mxu0 0.0
        %4069 = vmatpush.msra.mxu0 0.0
        %4070 = vmatpush.msra.mxu0 0.0
        %4071 = vmatpush.msra.mxu0 %v2836
        %4072 = vmatpush.msra.mxu0 %v2834
        %4073 = vmatpush.msra.mxu0 %v2832
        %4074 = vmatpush.msra.mxu0 %v2830
        %4075 = vmatpush.msra.mxu0 %v2828
        %4076 = vmatpush.msra.mxu0 %v2826
        %4077 = vmatpush.msra.mxu0 %v2824
        %4078 = vmatpush.msra.mxu0 %v2822
        %4079 = vmatmul.f32.gmra.mxu0 %v4041
        %v4080 = vpop.f32.mrf.mxu0
        %v4081 = vadd.f32 0.0, %v4080
        %4082 = vdwg.mxu0
        %v4083 = vadd.f32 %v4037, %v4061
        %v4084 = vadd.f32 %v4038, %v4081
        %v4085 = vsel %vm690, %v4034, 0
        %4087 = vmatpush.msra.mxu0 0.0
        %4088 = vmatpush.msra.mxu0 0.0
        %4089 = vmatpush.msra.mxu0 0.0
        %4090 = vmatpush.msra.mxu0 0.0
        %4091 = vmatpush.msra.mxu0 0.0
        %4092 = vmatpush.msra.mxu0 0.0
        %4093 = vmatpush.msra.mxu0 0.0
        %4094 = vmatpush.msra.mxu0 0.0
        %4095 = vmatpush.msra.mxu0 %v2851
        %4096 = vmatpush.msra.mxu0 %v2849
        %4097 = vmatpush.msra.mxu0 %v2847
        %4098 = vmatpush.msra.mxu0 %v2845
        %4099 = vmatpush.msra.mxu0 %v2843
        %4100 = vmatpush.msra.mxu0 %v2841
        %4101 = vmatpush.msra.mxu0 %v2839
        %4102 = vmatpush.msra.mxu0 %v2837
        %4103 = vmatmul.f32.gmra.mxu0 %v4085
        %v4104 = vpop.f32.mrf.mxu0
        %v4105 = vadd.f32 0.0, %v4104
        %4106 = vdwg.mxu0
        %4107 = vmatpush.msra.mxu0 0.0
        %4108 = vmatpush.msra.mxu0 0.0
        %4109 = vmatpush.msra.mxu0 0.0
        %4110 = vmatpush.msra.mxu0 0.0
        %4111 = vmatpush.msra.mxu0 0.0
        %4112 = vmatpush.msra.mxu0 0.0
        %4113 = vmatpush.msra.mxu0 0.0
        %4114 = vmatpush.msra.mxu0 0.0
        %4115 = vmatpush.msra.mxu0 %v2852
        %4116 = vmatpush.msra.mxu0 %v2850
        %4117 = vmatpush.msra.mxu0 %v2848
        %4118 = vmatpush.msra.mxu0 %v2846
        %4119 = vmatpush.msra.mxu0 %v2844
        %4120 = vmatpush.msra.mxu0 %v2842
        %4121 = vmatpush.msra.mxu0 %v2840
        %4122 = vmatpush.msra.mxu0 %v2838
        %4123 = vmatmul.f32.gmra.mxu0 %v4085
        %v4124 = vpop.f32.mrf.mxu0
        %v4125 = vadd.f32 0.0, %v4124
        %4126 = vdwg.mxu0
        %v4127 = vadd.f32 %v4039, %v4105
        %v4128 = vadd.f32 %v4040, %v4125
        %v4129 = vxor.u32 %v4083, 2147483648
        %v4130 = vmul.f32 %v4129, 1.442695
        %v4131 = vpow.pop %v4130
        %v4132 = vadd.f32 %v4131, 1.0
        %v4133 = vrcp.pop %v4132
        %v4134 = vmul.f32 %v4132, %v4133
        %v4135 = vsub.f32 1.0, %v4134
        %v4136 = vmul.f32 %v4133, %v4135
        %v4137 = vadd.f32 %v4133, %v4136
        %vm4138 = vweird.f32 %v4132
        %vm4139 = vweird.f32 %v4133
        %vm4140 = vmor %vm4138, %vm4139
        %v4141 = vsel %vm4140, %v4133, %v4137
        %v4142 = vand.u32 2147483647, %v4132
        %vm4143 = vcmp.eq.f32.partialorder %v4142, 8.507059e+37
        %v4144 = vand.u32 %v4132, 2147483648
        %v4145 = vor.u32 1.1754944e-38, %v4144
        %v4146 = vsel %vm4143, %v4145, %v4141
        %v4147 = vmul.f32 1.0, %v4146
        %v4148 = vtanh.pop %v4084
        %v4149 = vxor.u32 %v4084, 2147483648
        %v4150 = vmul.f32 %v4149, 1.442695
        %v4151 = vpow.pop %v4150
        %v4152 = vadd.f32 %v4151, 1.0
        %v4153 = vrcp.pop %v4152
        %v4154 = vmul.f32 %v4152, %v4153
        %v4155 = vsub.f32 1.0, %v4154
        %v4156 = vmul.f32 %v4153, %v4155
        %v4157 = vadd.f32 %v4153, %v4156
        %vm4158 = vweird.f32 %v4152
        %vm4159 = vweird.f32 %v4153
        %vm4160 = vmor %vm4158, %vm4159
        %v4161 = vsel %vm4160, %v4153, %v4157
        %v4162 = vand.u32 2147483647, %v4152
        %vm4163 = vcmp.eq.f32.partialorder %v4162, 8.507059e+37
        %v4164 = vand.u32 %v4152, 2147483648
        %v4165 = vor.u32 1.1754944e-38, %v4164
        %v4166 = vsel %vm4163, %v4165, %v4161
        %v4167 = vmul.f32 1.0, %v4166
        %v4168 = vmul.f32 %v4147, %v3976
        %v4169 = vmul.f32 %v4147, %v4148
        %4171 = vrot.lane.b32.xlu0 %v4169, 64
        %v4172 = vpop.permute.xlu0 %4171
        %v4174 = vadd.f32 %v4168, %v4172
        %v4175 = vtanh.pop %v4174
        %v4176 = vmul.f32 %v4167, %v4175
        %v4177 = vxor.u32 %v4127, 2147483648
        %v4178 = vmul.f32 %v4177, 1.442695
        %v4179 = vpow.pop %v4178
        %v4180 = vadd.f32 %v4179, 1.0
        %v4181 = vrcp.pop %v4180
        %v4182 = vmul.f32 %v4180, %v4181
        %v4183 = vsub.f32 1.0, %v4182
        %v4184 = vmul.f32 %v4181, %v4183
        %v4185 = vadd.f32 %v4181, %v4184
        %vm4186 = vweird.f32 %v4180
        %vm4187 = vweird.f32 %v4181
        %vm4188 = vmor %vm4186, %vm4187
        %v4189 = vsel %vm4188, %v4181, %v4185
        %v4190 = vand.u32 2147483647, %v4180
        %vm4191 = vcmp.eq.f32.partialorder %v4190, 8.507059e+37
        %v4192 = vand.u32 %v4180, 2147483648
        %v4193 = vor.u32 1.1754944e-38, %v4192
        %v4194 = vsel %vm4191, %v4193, %v4189
        %v4195 = vmul.f32 1.0, %v4194
        %v4196 = vtanh.pop %v4128
        %v4197 = vxor.u32 %v4128, 2147483648
        %v4198 = vmul.f32 %v4197, 1.442695
        %v4199 = vpow.pop %v4198
        %v4200 = vadd.f32 %v4199, 1.0
        %v4201 = vrcp.pop %v4200
        %v4202 = vmul.f32 %v4200, %v4201
        %v4203 = vsub.f32 1.0, %v4202
        %v4204 = vmul.f32 %v4201, %v4203
        %v4205 = vadd.f32 %v4201, %v4204
        %vm4206 = vweird.f32 %v4200
        %vm4207 = vweird.f32 %v4201
        %vm4208 = vmor %vm4206, %vm4207
        %v4209 = vsel %vm4208, %v4201, %v4205
        %v4210 = vand.u32 2147483647, %v4200
        %vm4211 = vcmp.eq.f32.partialorder %v4210, 8.507059e+37
        %v4212 = vand.u32 %v4200, 2147483648
        %v4213 = vor.u32 1.1754944e-38, %v4212
        %v4214 = vsel %vm4211, %v4213, %v4209
        %v4215 = vmul.f32 1.0, %v4214
        %v4216 = vmul.f32 %v4195, %v4024
        %v4217 = vmul.f32 %v4195, %v4196
        %4219 = vrot.lane.b32.xlu0 %v4217, 64
        %v4220 = vpop.permute.xlu0 %4219
        %v4222 = vadd.f32 %v4216, %v4220
        %v4223 = vtanh.pop %v4222
        %v4224 = vmul.f32 %v4215, %v4223
        %4226 = vrot.lane.b32.xlu0 %v4176, 64
        %v4227 = vpop.permute.xlu0 %4226
        %4229 = vst.msk [vmem:[%s2286] sm:$0xff] %vm690, %v4227
        %4231 = vrot.lane.b32.xlu0 %v4224, 64
        %v4232 = vpop.permute.xlu0 %4231
        %4234 = vst.msk [vmem:[#allocation4] sm:$0xff] %vm690, %v4232
        %v4235 = vld [vmem:[#allocation3] sm:$0xff]
        %v4236 = vld [vmem:[#allocation3 + $0x8] sm:$0xff]
        %v4237 = vld [vmem:[#allocation3 + $0x10] sm:$0xff]
        %v4238 = vld [vmem:[#allocation3 + $0x18] sm:$0xff]
        %v4239 = vld [vmem:[#allocation3 + $0x20] sm:$0xff]
        %v4240 = vld [vmem:[#allocation3 + $0x28] sm:$0xff]
        %v4241 = vld [vmem:[#allocation3 + $0x30] sm:$0xff]
        %v4242 = vpack.c.bf16 %v4236, %v4235
        %v4243 = vpack.c.bf16 %v4238, %v4237
        %v4244 = vpack.c.bf16 %v4240, %v4239
        %v4245 = vpack.c.bf16 %v4241, %v4241
        %v4246 = vld [vmem:[#allocation4] sm:$0xff]
        %v4247 = vld [vmem:[#allocation4 + $0x8] sm:$0xff]
        %v4248 = vld [vmem:[#allocation4 + $0x10] sm:$0xff]
        %v4249 = vld [vmem:[#allocation4 + $0x18] sm:$0xff]
        %v4250 = vld [vmem:[#allocation4 + $0x20] sm:$0xff]
        %v4251 = vld [vmem:[#allocation4 + $0x28] sm:$0xff]
        %v4252 = vld [vmem:[#allocation4 + $0x30] sm:$0xff]
        %v4253 = vpack.c.bf16 %v4247, %v4246
        %v4254 = vpack.c.bf16 %v4249, %v4248
        %v4255 = vpack.c.bf16 %v4251, %v4250
        %v4256 = vpack.c.bf16 %v4252, %v4252
        %v4257 = vld [vmem:[%s10] sm:$0xf]
        %v4258 = vld [vmem:[%s10 + $0x4] sm:$0xf]
        %v4259 = vld [vmem:[%s10 + $0x8] sm:$0xf]
        %v4260 = vld [vmem:[%s10 + $0xc] sm:$0xf]
        %v4261 = vld [vmem:[%s10 + $0x10] sm:$0xf]
        %v4262 = vld [vmem:[%s10 + $0x14] sm:$0xf]
        %v4263 = vld [vmem:[%s10 + $0x18] sm:$0xf]
        %v4264 = vld [vmem:[%s10 + $0x1c] sm:$0xf]
        %v4265 = vld [vmem:[%s11] sm:$0xf]
        %v4266 = vld [vmem:[%s11 + $0x4] sm:$0xf]
        %v4267 = vld [vmem:[%s11 + $0x8] sm:$0xf]
        %v4268 = vld [vmem:[%s11 + $0xc] sm:$0xf]
        %v4269 = vld [vmem:[%s11 + $0x10] sm:$0xf]
        %v4270 = vld [vmem:[%s11 + $0x14] sm:$0xf]
        %v4271 = vld [vmem:[%s11 + $0x18] sm:$0xf]
        %v4272 = vld [vmem:[%s11 + $0x1c] sm:$0xf]
        %v4281 = vunpack.c.l.b16 %v4265
        %v4282 = vunpack.c.l.b16 %v4266
        %v4283 = vunpack.c.l.b16 %v4267
        %v4284 = vunpack.c.l.b16 %v4268
        %v4285 = vunpack.c.l.b16 %v4269
        %v4286 = vunpack.c.l.b16 %v4270
        %v4287 = vunpack.c.l.b16 %v4271
        %v4288 = vunpack.c.l.b16 %v4272
        %v4289 = vpack.c.b16 %v4282, %v4281
        %v4290 = vpack.c.b16 %v4284, %v4283
        %v4291 = vpack.c.b16 %v4286, %v4285
        %v4292 = vpack.c.b16 %v4288, %v4287
        %v4298 = vsel %vm690, %v4253, 0
        %v4301 = vsel %vm690, %v4254, 0
        %v4304 = vsel %vm690, %v4255, 0
        %v4307 = vsel %vm690, %v4256, 0
        %4309 = vmatpush.bf16.msra.mxu0 0
        %4310 = vmatpush.bf16.msra.mxu0 0
        %4311 = vmatpush.bf16.msra.mxu0 0
        %4312 = vmatpush.bf16.msra.mxu0 0
        %4313 = vmatpush.bf16.msra.mxu0 %v4292
        %4314 = vmatpush.bf16.msra.mxu0 %v4291
        %4315 = vmatpush.bf16.msra.mxu0 %v4290
        %4316 = vmatpush.bf16.msra.mxu0 %v4289
        %4317 = vmatmul.bf16.gmra.mxu0 %v4298
        %v4318 = vpop.f32.mrf.mxu0
        %v4319 = vadd.f32 0.0, %v4318
        %v4320 = vpop.f32.mrf.mxu0
        %v4321 = vadd.f32 0.0, %v4320
        %4322 = vmatmul.bf16.gmra.mxu0 %v4301
        %v4323 = vpop.f32.mrf.mxu0
        %v4324 = vadd.f32 0.0, %v4323
        %v4325 = vpop.f32.mrf.mxu0
        %v4326 = vadd.f32 0.0, %v4325
        %4327 = vmatmul.bf16.gmra.mxu0 %v4304
        %v4328 = vpop.f32.mrf.mxu0
        %v4329 = vadd.f32 0.0, %v4328
        %v4330 = vpop.f32.mrf.mxu0
        %v4331 = vadd.f32 0.0, %v4330
        %4332 = vmatmul.bf16.gmra.mxu0 %v4307
        %v4333 = vpop.f32.mrf.mxu0
        %v4334 = vadd.f32 0.0, %v4333
        %v4335 = vpop.f32.mrf.mxu0
        %4336 = vdwg.mxu0
        %v4345 = vunpack.c.l.b16 %v4257
        %v4346 = vunpack.c.l.b16 %v4258
        %v4347 = vunpack.c.l.b16 %v4259
        %v4348 = vunpack.c.l.b16 %v4260
        %v4349 = vunpack.c.l.b16 %v4261
        %v4350 = vunpack.c.l.b16 %v4262
        %v4351 = vunpack.c.l.b16 %v4263
        %v4352 = vunpack.c.l.b16 %v4264
        %v4353 = vpack.c.b16 %v4346, %v4345
        %v4354 = vpack.c.b16 %v4348, %v4347
        %v4355 = vpack.c.b16 %v4350, %v4349
        %v4356 = vpack.c.b16 %v4352, %v4351
        %v4362 = vsel %vm690, %v4242, 0
        %v4365 = vsel %vm690, %v4243, 0
        %v4368 = vsel %vm690, %v4244, 0
        %v4371 = vsel %vm690, %v4245, 0
        %4373 = vmatpush.bf16.msra.mxu0 0
        %4374 = vmatpush.bf16.msra.mxu0 0
        %4375 = vmatpush.bf16.msra.mxu0 0
        %4376 = vmatpush.bf16.msra.mxu0 0
        %4377 = vmatpush.bf16.msra.mxu0 %v4356
        %4378 = vmatpush.bf16.msra.mxu0 %v4355
        %4379 = vmatpush.bf16.msra.mxu0 %v4354
        %4380 = vmatpush.bf16.msra.mxu0 %v4353
        %4381 = vmatmul.bf16.gmra.mxu0 %v4362
        %v4382 = vpop.f32.mrf.mxu0
        %v4383 = vadd.f32 %v4319, %v4382
        %v4384 = vpop.f32.mrf.mxu0
        %v4385 = vadd.f32 %v4321, %v4384
        %4386 = vmatmul.bf16.gmra.mxu0 %v4365
        %v4387 = vpop.f32.mrf.mxu0
        %v4388 = vadd.f32 %v4324, %v4387
        %v4389 = vpop.f32.mrf.mxu0
        %v4390 = vadd.f32 %v4326, %v4389
        %4391 = vmatmul.bf16.gmra.mxu0 %v4368
        %v4392 = vpop.f32.mrf.mxu0
        %v4393 = vadd.f32 %v4329, %v4392
        %v4394 = vpop.f32.mrf.mxu0
        %v4395 = vadd.f32 %v4331, %v4394
        %4396 = vmatmul.bf16.gmra.mxu0 %v4371
        %v4397 = vpop.f32.mrf.mxu0
        %v4398 = vadd.f32 %v4334, %v4397
        %v4399 = vpop.f32.mrf.mxu0
        %4400 = vdwg.mxu0
        %v4401 = vld [vmem:[%s12] sm:$0x1]
        %v4403 = vperm.slane %v4401, 0
        %v4405 = vadd.f32 %v4383, %v4403
        %v4406 = vadd.f32 %v4385, %v4403
        %v4407 = vadd.f32 %v4388, %v4403
        %v4408 = vadd.f32 %v4390, %v4403
        %v4409 = vadd.f32 %v4393, %v4403
        %v4410 = vadd.f32 %v4395, %v4403
        %v4411 = vadd.f32 %v4398, %v4403
        %4412 = vst [vmem:[%s550] sm:$0xff] %v4405
        %4413 = vst [vmem:[%s550 + $0x8] sm:$0xff] %v4406
        %4414 = vst [vmem:[%s550 + $0x10] sm:$0xff] %v4407
        %4415 = vst [vmem:[%s550 + $0x18] sm:$0xff] %v4408
        %4416 = vst [vmem:[%s550 + $0x20] sm:$0xff] %v4409
        %4417 = vst [vmem:[%s550 + $0x28] sm:$0xff] %v4410
        %4418 = vst [vmem:[%s550 + $0x30] sm:$0xff] %v4411
        %s4419 = sand.u32 %s317, 1
        %s4420 = scalar_lea.sflag [#allocation7], %s4419
        %s4421 = sand.u32 %s317, 1
        %s4422 = smul.addr %s4421, 56
        %s4423 = scalar_lea.vmem [#allocation17], %s4422
        // Predicated region
        $region101: #{tpu_custom_call.1} parent=71 // pred_check
          %p4424 = pneg %p327
        $region102: #{tpu_custom_call.1} parent=71 // pred_check_branch
          %4426 = sbr.rel (%p4424) target = $region104
        $region103: #{tpu_custom_call.1} parent=71 // pred_region
          %s4427 = smul.u32 7, %s31
          %4429 = vsyncadd %s4420, 0
          %s4430 = smul.addr %s4427, 8
          %s4431 = scalar_lea.hbm %s13, %s4430
          %s4432 = sshll.u32 %s4423, 4
          %s4433 = int_to_ptr.vmem [resolvable:$true] %s4432
          %s4434 = sshll.u32 %s4431, 4
          %s4435 = int_to_ptr.hbm [resolvable:$true] %s4434
          %4440 = dma.vmem_to_hbm [thread:$0]  %s4433, 896, %s4435, %s4420, 128, 128, 8
        $region104: #{tpu_custom_call.1} parent=71 // pred_fallthru
          _
      $region72: #{tpu_custom_call.1} parent=5 // pred_fallthru
        _
      %p4441 = scmp.le.s32.totalorder 2, %s26
      // Predicated region
      $region105: #{tpu_custom_call.1} parent=5 // pred_check
        %p4442 = pneg %p4441
      $region106: #{tpu_custom_call.1} parent=5 // pred_check_branch
        %4444 = sbr.rel (%p4442) target = $region108
      $region107: #{tpu_custom_call.1} parent=5 // pred_region
        %s4445 = ssub.s32 %s26, 2
        // Predicated region
        $region109: #{tpu_custom_call.1} parent=107 // pred_check
          %p4446 = pneg %p333
        $region110: #{tpu_custom_call.1} parent=107 // pred_check_branch
          %4448 = sbr.rel (%p4446) target = $region112
        $region111: #{tpu_custom_call.1} parent=107 // pred_region
          %s4449 = sand.u32 %s318, 1
          %s4450 = scalar_lea.sflag [#allocation7], %s4449
          %s4451 = sand.u32 %s318, 1
          %s4452 = smul.addr %s4451, 56
          %s4453 = scalar_lea.vmem [#allocation17], %s4452
          %4455 = dma.done %s4450, 896
        $region112: #{tpu_custom_call.1} parent=107 // pred_fallthru
          _
      $region108: #{tpu_custom_call.1} parent=5 // pred_fallthru
        _
    $region6: #{tpu_custom_call.1} parent=1 // loop_footer
      %s30 = sadd.s32 1, %s26
    $region7: #{tpu_custom_call.1} parent=1 // loop_footer_branch
      %25 = sbr.rel target = $region3
    $region8: #{tpu_custom_call.1} parent=1 // loop_exit
      _
    %4456 = vsyncpa [#allocation6], 1
    %s4457 = scalar_lea.sflag [#allocation6], 1
    %4458 = vsyncpa %s4457, 1
    %4459 = vsyncpa [#allocation9], 1
    %4460 = vsyncpa [#allocation12], 1
    %4461 = vsyncpa [#allocation15], 1
    %4462 = vsyncpa [#allocation7], 1
    %s4463 = scalar_lea.sflag [#allocation7], 1
    %4464 = vsyncpa %s4463, 1

</llo_original>
